<compile_context>
chip_gen: v6e
topology: v6e:2x2x1
jax: 0.10.0
libtpu: 0.0.40
codegen_flags: <defaults>
</compile_context>

<pallas_src>
import functools

import jax
import jax.numpy as jnp
from jax.experimental import pallas as pl
from jax.experimental.pallas import tpu as pltpu

# ----------------------------- static config (dim=64, 'small') -----------------------------
DIM = 64
NUM_HEADS = 8
N_WIN = 7
QK_DIM = DIM
TOPK = 4
N_GROUPS = 1
STRIDE_DEF = 8
KK = 9
EXPAND = 3
SIDE_DWCONV = 3
Q_H = Q_W = 56
SCALE = QK_DIM ** -0.5
HEAD_DIM = DIM // NUM_HEADS
N_GROUP_CHANNELS = DIM // N_GROUPS
N_GROUP_HEADS = NUM_HEADS // N_GROUPS

_VMEM_LIMIT = 32 * 1024 * 1024  # conservative scoped-VMEM budget (safe on v5e/v6e/v7x)
_NEG_BIG = -1.0e9               # masks padded key columns (exp -> 0 after max-subtraction)


# ----------------------------------- Pallas kernels ----------------------------------------
def _matmul_bias_kernel(x_ref, w_ref, b_ref, o_ref):
    # bf16 operands -> MXU, fp32 accumulation, fp32 bias/output.
    o_ref[...] = (jnp.dot(x_ref[...], w_ref[...], preferred_element_type=jnp.float32)
                  + b_ref[...])


def pallas_matmul_bias(x, w, b=None):
    """1x1 conv / linear hot path.  x:(M,K), w:(K,N), b:(N,) -> (M,N) float32."""
    M, K = x.shape
    N = w.shape[1]
    if b is None:
        b = jnp.zeros((N,), jnp.float32)
    xb = x.astype(jnp.bfloat16)
    wb = w.astype(jnp.bfloat16)
    b2 = b.reshape(1, N).astype(jnp.float32)
    # Perf item #5: whole-M tile (grid of 1) — working set is a few MB, trivially in VMEM.
    cands = [d for d in range(16, min(M, 4096) + 1, 16) if M % d == 0]
    tm = max(cands) if cands else M
    return pl.pallas_call(
        _matmul_bias_kernel,
        out_shape=jax.ShapeDtypeStruct((M, N), jnp.float32),
        grid=(M // tm,),
        in_specs=[pl.BlockSpec((tm, K), lambda i: (i, 0)),
                  pl.BlockSpec((K, N), lambda i: (0, 0)),
                  pl.BlockSpec((1, N), lambda i: (0, 0))],
        out_specs=pl.BlockSpec((tm, N), lambda i: (i, 0)),
        compiler_params=pltpu.CompilerParams(
            dimension_semantics=("parallel",),
            vmem_limit_bytes=_VMEM_LIMIT),
    )(xb, wb, b2)


def linear(x, w, b=None):
    """Dispatch: large row-counts -> Pallas MXU matmul; tiny (<=49-row) projections -> XLA dot
    (micro projections are launch-overhead dominated)."""
    if x.shape[0] >= 256:
        return pallas_matmul_bias(x, w, b)
    y = jnp.dot(x.astype(jnp.float32), w.astype(jnp.float32))
    return y if b is None else y + b.astype(jnp.float32)


def _window_attn_kernel(q_ref, kT_ref, vT_ref, o_ref, *, scale, heads, hd):
    # Single grid step over all routed windows (perf item #7): one DMA of the gathered K/V
    # (~3.2 MB bf16), one short compute body.  Heads are a static unroll so the largest live
    # f32 temporary is (Nw, hd, L) ~0.4 MB; the output is written once as a packed (Nw, C)
    # lane-dense slab (no per-head masked stores).
    hq = q_ref.shape[1]
    for t in range(hq):                                       # hq == 1 for the 56x56 config
        q = q_ref[:, t, :].astype(jnp.float32)                # (Nw, heads*hd)
        outs = []
        for h in range(heads):
            sl = slice(h * hd, (h + 1) * hd)
            kTh = kT_ref[:, sl, :].astype(jnp.float32)        # (Nw, hd, L)
            vTh = vT_ref[:, sl, :].astype(jnp.float32)        # (Nw, hd, L)
            s = jnp.sum(q[:, sl][:, :, None] * kTh, axis=1) * scale   # (Nw, L)
            s = s - jnp.max(s, axis=-1, keepdims=True)
            p = jnp.exp(s)
            p = p * pl.reciprocal(jnp.sum(p, axis=-1, keepdims=True), approx=True)
            outs.append(jnp.sum(p[:, None, :] * vTh, axis=-1))        # (Nw, hd)
        o_ref[:, t, :] = jnp.concatenate(outs, axis=-1)       # one (Nw, heads*hd) store


def pallas_window_attention(q, kT, vT, scale):
    """q:(Nw,hq,C), kT/vT:(Nw,C,L) with C = heads*head_dim -> (Nw,hq,C) float32."""
    Nw, hq, C = q.shape
    L = kT.shape[-1]
    wb = Nw                                                   # single grid step (perf item #7)
    kern = functools.partial(_window_attn_kernel, scale=scale, heads=NUM_HEADS, hd=HEAD_DIM)
    return pl.pallas_call(
        kern,
        out_shape=jax.ShapeDtypeStruct((Nw, hq, C), jnp.float32),
        grid=(Nw // wb,),
        in_specs=[pl.BlockSpec((wb, hq, C), lambda b: (b, 0, 0)),
                  pl.BlockSpec((wb, C, L), lambda b: (b, 0, 0)),
                  pl.BlockSpec((wb, C, L), lambda b: (b, 0, 0))],
        out_specs=pl.BlockSpec((wb, hq, C), lambda b: (b, 0, 0)),
        compiler_params=pltpu.CompilerParams(
            dimension_semantics=("parallel",),
            vmem_limit_bytes=_VMEM_LIMIT),
    )(q.astype(jnp.bfloat16), kT.astype(jnp.bfloat16), vT.astype(jnp.bfloat16))


def _attn_bias_kernel(q_ref, kbd_ref, vbd_ref, seg_ref, b_ref, wo_ref, bo_ref, o_ref, *, scale):
    # Block-diagonal packed-head attention (perf items #1/#2/#6):
    #   s   = q(tm,64) @ K_bd(64, H*L2p)          — one MXU matmul for all heads
    #   p   = exp(s*scale + bias - rowmax)         — padded key lanes carry -1e9 bias -> p = 0
    #   out = p @ V_bd(H*L2p, 64)                  — unnormalized, lane-dense (tm,64)
    #   den = p @ seg(H*L2p, 64)                   — per-head softmax sums broadcast to hd lanes
    #   o   = (out * 1/den) @ W_out + b_out        — proj_out fused into the epilogue
    q = q_ref[0]                                                        # (tm, C) bf16
    s = jnp.dot(q, kbd_ref[0], preferred_element_type=jnp.float32) * scale
    s = s + b_ref[0].astype(jnp.float32)                                # (tm, H*L2p)
    s = s - jnp.max(s, axis=-1, keepdims=True)
    p = jnp.exp(s).astype(jnp.bfloat16)
    attn = jnp.dot(p, vbd_ref[0], preferred_element_type=jnp.float32)   # (tm, C)
    denom = jnp.dot(p, seg_ref[...], preferred_element_type=jnp.float32)
    attn = attn * pl.reciprocal(denom, approx=True)
    o_ref[0] = (jnp.dot(attn.astype(jnp.bfloat16), wo_ref[...],
                        preferred_element_type=jnp.float32) + bo_ref[...])


def pallas_attention_bias(q, k_bd, v_bd, seg, bias, wo, bo, scale):
    """q:(N,M,C), k_bd:(N,C,H*L2p), v_bd:(N,H*L2p,C), seg:(H*L2p,C),
    bias:(N,M,H*L2p), wo:(C,C), bo:(C,) -> (N,M,C) f32 (already proj_out-projected)."""
    N, M, C = q.shape
    Lp = k_bd.shape[-1]
    # Perf item #4: prefer a tile count that splits evenly across 2 TensorCores on v7x.
    cands = [d for d in range(16, min(M, 784) + 1, 16) if M % d == 0]
    even = [d for d in cands if (M // d) % 2 == 0]
    tm = max(even) if even else (max(cands) if cands else M)
    kern = functools.partial(_attn_bias_kernel, scale=scale)
    return pl.pallas_call(
        kern,
        out_shape=jax.ShapeDtypeStruct((N, M, C), jnp.float32),
        grid=(N, M // tm),
        in_specs=[pl.BlockSpec((1, tm, C), lambda n, i: (n, i, 0)),
                  pl.BlockSpec((1, C, Lp), lambda n, i: (n, 0, 0)),
                  pl.BlockSpec((1, Lp, C), lambda n, i: (n, 0, 0)),
                  pl.BlockSpec((Lp, C), lambda n, i: (0, 0)),
                  pl.BlockSpec((1, tm, Lp), lambda n, i: (n, i, 0)),
                  pl.BlockSpec((C, C), lambda n, i: (0, 0)),
                  pl.BlockSpec((1, C), lambda n, i: (0, 0))],
        out_specs=pl.BlockSpec((1, tm, C), lambda n, i: (n, i, 0)),
        compiler_params=pltpu.CompilerParams(
            dimension_semantics=("parallel", "parallel"),
            vmem_limit_bytes=_VMEM_LIMIT),
    )(q.astype(jnp.bfloat16), k_bd.astype(jnp.bfloat16), v_bd.astype(jnp.bfloat16),
      seg.astype(jnp.bfloat16), bias.astype(jnp.bfloat16),
      wo.astype(jnp.bfloat16), bo.reshape(1, C).astype(jnp.float32))


# ------------------------------------- JAX glue ---------------------------------------------
# TODO(synk): depthwise convs, bilinear grid_sample gathers and top-k routing are irregular /
# tiny ops kept in plain JAX instead of Pallas.
def depthwise_conv(x, w, stride, pad, bias):
    """x:(B,C,H,W), w:(C,1,kh,kw) groups=C (matches nn.Conv2d(..., groups=C))."""
    out = jax.lax.conv_general_dilated(
        x, w, window_strides=(stride, stride),
        padding=((pad, pad), (pad, pad)),
        dimension_numbers=('NCHW', 'OIHW', 'NCHW'),
        feature_group_count=x.shape[1])
    if bias is not None:
        out = out + bias[None, :, None, None]
    return out


def layer_norm(x, w, b, eps):
    mu = jnp.mean(x, axis=-1, keepdims=True)
    var = jnp.mean((x - mu) ** 2, axis=-1, keepdims=True)
    return (x - mu) / jnp.sqrt(var + eps) * w + b


def grid_sample_bilinear(img, grid):
    """F.grid_sample(..., mode='bilinear', padding_mode='zeros', align_corners=True).
    img:(B,C,H,W), grid:(B,...,2) with grid[...,0]=x, grid[...,1]=y in [-1,1]."""
    B, C, H, W = img.shape
    gx, gy = grid[..., 0], grid[..., 1]
    ix = (gx + 1.0) * 0.5 * (W - 1)
    iy = (gy + 1.0) * 0.5 * (H - 1)
    ix0, iy0 = jnp.floor(ix), jnp.floor(iy)
    ix1, iy1 = ix0 + 1.0, iy0 + 1.0
    wx1, wy1 = ix - ix0, iy - iy0
    wx0, wy0 = 1.0 - wx1, 1.0 - wy1
    img_flat = img.reshape(B, C, H * W)

    def corner(iy_, ix_, wgt):
        valid = ((ix_ >= 0) & (ix_ <= W - 1) & (iy_ >= 0) & (iy_ <= H - 1)).astype(img.dtype)
        ixc = jnp.clip(ix_, 0, W - 1).astype(jnp.int32)
        iyc = jnp.clip(iy_, 0, H - 1).astype(jnp.int32)
        idx = (iyc * W + ixc).reshape(B, 1, -1)
        idx = jnp.broadcast_to(idx, (B, C, idx.shape[-1]))
        vals = jnp.take_along_axis(img_flat, idx, axis=2).reshape(B, C, *ix_.shape[1:])
        return vals * (wgt * valid)[:, None]

    return (corner(iy0, ix0, wy0 * wx0) + corner(iy0, ix1, wy0 * wx1)
            + corner(iy1, ix0, wy1 * wx0) + corner(iy1, ix1, wy1 * wx1))


# ------------------------------------ forward pass ------------------------------------------
def qkv_conv(x_nhwc, w, b):
    """QKVConv.forward: 1x1 conv (Pallas bf16 MXU matmul) then split into q / kv."""
    N, H, W, C = x_nhwc.shape
    qkv = linear(x_nhwc.reshape(N * H * W, C), w, b).reshape(N, H, W, 2 * QK_DIM + DIM)
    return qkv[..., :QK_DIM], qkv[..., QK_DIM:]


def debiformer_attention_forward(p, x):
    N, H, W, C = x.shape
    assert H % N_WIN == 0 and W % N_WIN == 0
    nw = N_WIN
    hw_win, ww_win = H // nw, W // nw
    Ckv = QK_DIM + DIM
    p2 = nw * nw

    # ---- QKVConv (the spec module) ----
    q_nhwc, kv_nhwc = qkv_conv(x, p['qkv_w'], p['qkv_b'])

    # window partition: 'n c (j h) (i w) -> n (j i) h w c'
    kv_win = (kv_nhwc.reshape(N, nw, hw_win, nw, ww_win, Ckv)
              .transpose(0, 1, 3, 2, 4, 5).reshape(N, p2, hw_win, ww_win, Ckv))
    kv_pix = kv_win.reshape(N, p2, hw_win * ww_win, Ckv)   # kv_down = identity

    # ---- lepe1: strided depthwise conv on the V channels ----
    v_full = kv_nhwc[..., QK_DIM:].transpose(0, 3, 1, 2)                  # (N, dim, H, W)
    lepe1 = depthwise_conv(v_full, p['lepe1_w'], STRIDE_DEF, SIDE_DWCONV // 2, p['lepe1_b'])

    # ---- conv_offset_q: strided dw-conv -> LayerNormProxy -> GELU -> 1x1 conv ----
    q_nchw = q_nhwc.transpose(0, 3, 1, 2)
    q_off = q_nchw.reshape(N * N_GROUPS, N_GROUP_CHANNELS, H, W)
    t = depthwise_conv(q_off, p['offq_dw_w'], STRIDE_DEF, KK // 2, None)
    Hk, Wk = t.shape[2], t.shape[3]
    t = layer_norm(t.transpose(0, 2, 3, 1), p['offq_ln_w'], p['offq_ln_b'], 1e-5)
    t = jax.nn.gelu(t, approximate=False)
    offset_q = linear(t.reshape(-1, N_GROUP_CHANNELS), p['offq_pw_w'], None)  # tiny -> XLA dot
    offset_q = offset_q.reshape(N * N_GROUPS, Hk, Wk, 1)                  # 'b p h w -> b h w p'

    # ---- reference points + deformed positions ----
    ref_y = ((jnp.arange(Hk, dtype=jnp.float32) + 0.5) / Hk) * 2.0 - 1.0
    ref_x = ((jnp.arange(Wk, dtype=jnp.float32) + 0.5) / Wk) * 2.0 - 1.0
    ref = jnp.stack(jnp.meshgrid(ref_y, ref_x, indexing='ij'), axis=-1)   # (Hk,Wk,2) (y,x)
    reference = jnp.broadcast_to(ref[None], (N * N_GROUPS, Hk, Wk, 2))
    pos_k = jnp.clip(offset_q + reference, -1.0, 1.0)                     # offset_range_factor < 0

    x_res = x.transpose(0, 3, 1, 2)                                       # (N, C, H, W)
    x_sampled_q = grid_sample_bilinear(
        x_res.reshape(N * N_GROUPS, N_GROUP_CHANNELS, H, W), pos_k[..., ::-1])
    q_sampled = x_sampled_q.reshape(N, C, Hk, Wk)

    Hg, Wg = Hk, Wk
    hg, wg = Hg // nw, Wg // nw
    hq = hg * wg

    # ---- proj_q + window partition of the deformed queries ----
    qd = linear(q_sampled.transpose(0, 2, 3, 1).reshape(-1, C),
                p['proj_q_w'], p['proj_q_b']).reshape(N, Hg, Wg, C)
    queries_def = (qd.reshape(N, nw, hg, nw, wg, C)
                   .transpose(0, 1, 3, 2, 4, 5).reshape(N, p2, hg, wg, C))

    # ---- TopkRouting (window-level) — tiny p2 x p2 logits: plain einsum ----
    q_win = queries_def.mean(axis=(2, 3))                                 # (N,p2,qk)
    k_win = kv_win[..., :QK_DIM].mean(axis=(2, 3))                        # (N,p2,qk)
    attn_logit = jnp.einsum('npc,nqc->npq', q_win * SCALE, k_win)         # (N,p2,p2)
    _, r_idx = jax.lax.top_k(attn_logit, TOPK)      # softmax routing weights unused ('none')

    # ---- KVGather (mul_weight='none') ----
    kv_sel = jax.vmap(lambda kv_n, idx_n: kv_n[idx_n])(kv_pix, r_idx)     # (N,p2,topk,w2,Ckv)
    w2 = hw_win * ww_win
    L = TOPK * w2
    Nw = N * p2
    # pack gathered K/V channel-major: (Nw, heads*hd, L) so L sits in the lane axis
    kT = kv_sel[..., :QK_DIM].reshape(Nw, L, C).transpose(0, 2, 1)
    vT = kv_sel[..., QK_DIM:].reshape(Nw, L, C).transpose(0, 2, 1)
    q1 = queries_def.reshape(Nw, hq, C)

    out1 = pallas_window_attention(q1, kT, vT, SCALE)                     # (Nw, hq, C)
    out_def = (out1.reshape(N, nw, nw, hg, wg, C)
               .transpose(0, 5, 1, 3, 2, 4).reshape(N, C, Hg, Wg))
    out_def = out_def + lepe1

    uh = linear(out_def.transpose(0, 2, 3, 1).reshape(-1, C),
                p['uni_w'], p['uni_b']).reshape(N, Hg, Wg, C).transpose(0, 3, 1, 2)
    out_def = q_sampled + uh

    # ---- MLP (pre-norm2) residual branch ----
    y = layer_norm(out_def.transpose(0, 2, 3, 1), p['norm2_w'], p['norm2_b'], 1e-6)
    z = linear(y.reshape(-1, C), p['mlp_w1'], p['mlp_b1']).reshape(N, Hg, Wg, C * EXPAND)
    z = z.transpose(0, 3, 1, 2)
    z = z + depthwise_conv(z, p['mlp_dwc_w'], 1, 1, p['mlp_dwc_b'])
    z = jax.nn.gelu(z, approximate=False)
    z = linear(z.transpose(0, 2, 3, 1).reshape(-1, C * EXPAND),
               p['mlp_w2'], p['mlp_b2']).reshape(N, Hg, Wg, C).transpose(0, 3, 1, 2)
    out_def = out_def + z
    out_def = layer_norm(out_def.transpose(0, 2, 3, 1), p['norm_w'], p['norm_b'], 1e-6)  # NHWC

    # ---- second (deformable) attention over all pixels ----
    odf = out_def.reshape(-1, C)
    # fused K/V projection -> one (C, 2C) matmul
    w_kv = jnp.concatenate([p['proj_k_w'], p['proj_v_w']], axis=1)
    b_kv = jnp.concatenate([p['proj_k_b'], p['proj_v_b']], axis=0)
    kv2 = linear(odf, w_kv, b_kv)                                         # (N*Hg*Wg, 2C)
    L2 = Hg * Wg
    L2P = 64                                                              # per-head padded key len
    k2 = kv2[:, :C].reshape(N, L2, NUM_HEADS, HEAD_DIM)
    v2 = kv2[:, C:].reshape(N, L2, NUM_HEADS, HEAD_DIM)
    q_all = q_nhwc.reshape(N, H * W, C)                                   # channel = head*hd + d

    # Block-diagonal head packing (perf item #1): zero K padding, zero V padding, -1e9 bias
    # on padded columns (zero-padded K alone would corrupt the softmax).
    eye_h = jnp.eye(NUM_HEADS, dtype=jnp.float32)
    k_h = jnp.pad(k2.transpose(0, 2, 3, 1), ((0, 0), (0, 0), (0, 0), (0, L2P - L2)))
    k_bd = (k_h[:, :, :, None, :] * eye_h[None, :, None, :, None]
            ).reshape(N, C, NUM_HEADS * L2P)                              # (N, C, H*L2P)
    v_h = jnp.pad(v2.transpose(0, 2, 1, 3), ((0, 0), (0, 0), (0, L2P - L2), (0, 0)))
    v_bd = (v_h[:, :, :, None, :] * eye_h[None, :, None, :, None]
            ).reshape(N, NUM_HEADS * L2P, C)                              # (N, H*L2P, C)
    seg = jnp.kron(eye_h, jnp.ones((L2P, HEAD_DIM), jnp.float32))         # (H*L2P, C)

    # relative position bias via bilinear sampling of rpe_table
    rpe = jnp.broadcast_to(p['rpe'][None], (N,) + p['rpe'].shape)
    rpe = rpe.reshape(N * N_GROUPS, N_GROUP_HEADS, p['rpe'].shape[1], p['rpe'].shape[2])
    gy = (jnp.arange(H, dtype=jnp.float32) / (H - 1.0)) * 2.0 - 1.0
    gx = (jnp.arange(W, dtype=jnp.float32) / (W - 1.0)) * 2.0 - 1.0
    q_grid = jnp.stack(jnp.meshgrid(gy, gx, indexing='ij'), axis=-1)
    q_grid = jnp.broadcast_to(q_grid[None], (N * N_GROUPS, H, W, 2)).reshape(N * N_GROUPS, H * W, 2)
    displacement = (q_grid[:, :, None, :]
                    - pos_k.reshape(N * N_GROUPS, L2, 2)[:, None, :, :]) * 0.5
    attn_bias = grid_sample_bilinear(rpe, displacement[..., ::-1])        # (Ng, gheads, HW, L2)
    attn_bias = attn_bias.reshape(N, NUM_HEADS, H * W, L2)
    # Perf item #3: repack to (N, HW, heads*L2P) so each query's bias is one contiguous row.
    bias_pk = jnp.pad(attn_bias.transpose(0, 2, 1, 3),
                      ((0, 0), (0, 0), (0, 0), (0, L2P - L2)), constant_values=_NEG_BIG)
    bias_pk = bias_pk.reshape(N, H * W, NUM_HEADS * L2P)

    # attention + fused proj_out epilogue (perf item #6)
    out2 = pallas_attention_bias(q_all, k_bd, v_bd, seg, bias_pk,
                                 p['proj_out_w'], p['proj_out_b'], SCALE)  # (N, HW, C)
    return out2.reshape(N, H, W, C)


# ------------------------------- deterministic parameter init -------------------------------
def init_params(key):
    keys = iter(jax.random.split(key, 40))

    def nrm(shape, std=0.02):
        return std * jax.random.normal(next(keys), shape, dtype=jnp.float32)

    return {
        'qkv_w': nrm((DIM, 2 * QK_DIM + DIM)), 'qkv_b': nrm((2 * QK_DIM + DIM,), 0.01),
        'lepe1_w': nrm((DIM, 1, SIDE_DWCONV, SIDE_DWCONV)), 'lepe1_b': nrm((DIM,), 0.01),
        'offq_dw_w': nrm((N_GROUP_CHANNELS, 1, KK, KK)),
        'offq_ln_w': jnp.ones((N_GROUP_CHANNELS,), jnp.float32),
        'offq_ln_b': jnp.zeros((N_GROUP_CHANNELS,), jnp.float32),
        'offq_pw_w': nrm((N_GROUP_CHANNELS, 1)),
        'rpe': nrm((NUM_HEADS, 2 * Q_H - 1, 2 * Q_W - 1), 0.01),
        'proj_q_w': nrm((DIM, DIM)), 'proj_q_b': nrm((DIM,), 0.01),
        'uni_w': nrm((DIM, DIM)), 'uni_b': nrm((DIM,), 0.01),
        'norm2_w': jnp.ones((DIM,), jnp.float32), 'norm2_b': jnp.zeros((DIM,), jnp.float32),
        'mlp_w1': nrm((DIM, DIM * EXPAND)), 'mlp_b1': nrm((DIM * EXPAND,), 0.01),
        'mlp_dwc_w': nrm((DIM * EXPAND, 1, 3, 3)), 'mlp_dwc_b': nrm((DIM * EXPAND,), 0.01),
        'mlp_w2': nrm((DIM * EXPAND, DIM)), 'mlp_b2': nrm((DIM,), 0.01),
        'norm_w': jnp.ones((DIM,), jnp.float32), 'norm_b': jnp.zeros((DIM,), jnp.float32),
        'proj_k_w': nrm((DIM, DIM)), 'proj_k_b': nrm((DIM,), 0.01),
        'proj_v_w': nrm((DIM, DIM)), 'proj_v_b': nrm((DIM,), 0.01),
        'proj_out_w': nrm((DIM, DIM)), 'proj_out_b': nrm((DIM,), 0.01),
    }


if __name__ == "__main__":
    key = jax.random.PRNGKey(0)
    kp, kx = jax.random.split(key)
    params = init_params(kp)
    x = jax.random.normal(kx, (1, Q_H, Q_W, DIM), dtype=jnp.float32)   # NHWC input

    # sanity: the spec module (QKVConv) output shapes
    q_chk, kv_chk = jax.jit(qkv_conv)(x, params['qkv_w'], params['qkv_b'])
    q_chk = jax.block_until_ready(q_chk)
    assert q_chk.shape == (1, Q_H, Q_W, QK_DIM) and kv_chk.shape == (1, Q_H, Q_W, QK_DIM + DIM)

    fwd = jax.jit(debiformer_attention_forward)
    out = fwd(params, x)
    out = jax.block_until_ready(out)

    assert out.shape == (1, Q_H, Q_W, DIM), out.shape
    assert bool(jnp.all(jnp.isfinite(out)))
    print("KERNEL_OK")
</pallas_src>

<mosaic_0001>
module attributes {stable_mosaic.version = 11 : i64} {
  func.func @_matmul_bias_kernel(%arg0: i32, %arg1: memref<3136x64xbf16, #tpu.memory_space<vmem>>, %arg2: memref<64x192xbf16, #tpu.memory_space<vmem>>, %arg3: memref<1x192xf32, #tpu.memory_space<vmem>>, %arg4: memref<3136x192xf32, #tpu.memory_space<vmem>>) attributes {dimension_semantics = [#tpu.dimension_semantics<parallel>], iteration_bounds = array<i64: 1>, scalar_prefetch = 0 : i64, scratch_operands = 0 : i64, tpu.core_type = #tpu.core_type<tc>, window_params = [{transform_indices = @transform_0, window_bounds = array<i64: 3136, 64>}, {pipeline_mode = #tpu.pipeline_mode<synchronous>, transform_indices = @transform_1, window_bounds = array<i64: 64, 192>}, {pipeline_mode = #tpu.pipeline_mode<synchronous>, transform_indices = @transform_2, window_bounds = array<i64: 1, 192>}, {transform_indices = @transform_3, window_bounds = array<i64: 3136, 192>}]} {
    %c0 = arith.constant 0 : index
    %c0_0 = arith.constant 0 : index
    %0 = vector.load %arg1[%c0, %c0_0] : memref<3136x64xbf16, #tpu.memory_space<vmem>>, vector<3136x64xbf16>
    %c0_1 = arith.constant 0 : index
    %c0_2 = arith.constant 0 : index
    %1 = vector.load %arg2[%c0_1, %c0_2] : memref<64x192xbf16, #tpu.memory_space<vmem>>, vector<64x192xbf16>
    %cst = arith.constant dense<0.000000e+00> : vector<3136x192xf32>
    %2 = tpu.matmul %0, %1, %cst {dimension_numbers = #tpu.dot_dimension_numbers<[1], [0], [0], [1], [0, 0, 1, 1], [], []>} : vector<3136x64xbf16>, vector<64x192xbf16>, vector<3136x192xf32> -> vector<3136x192xf32>
    %c0_3 = arith.constant 0 : index
    %c0_4 = arith.constant 0 : index
    %3 = vector.load %arg3[%c0_3, %c0_4] : memref<1x192xf32, #tpu.memory_space<vmem>>, vector<1x192xf32>
    %4 = vector.broadcast %3 : vector<1x192xf32> to vector<3136x192xf32>
    %5 = arith.addf %2, %4 : vector<3136x192xf32>
    %c0_5 = arith.constant 0 : index
    %c0_6 = arith.constant 0 : index
    %6 = vector.load %arg4[%c0_5, %c0_6] : memref<3136x192xf32, #tpu.memory_space<vmem>>, vector<3136x192xf32>
    tpu.vector_store %arg4[%c0_5, %c0_6], %5 {strides = array<i32>} : memref<3136x192xf32, #tpu.memory_space<vmem>>, vector<3136x192xf32>,
    return
  }
  func.func @transform_0(%arg0: i32) -> (i32, i32) {
    %c0_i32 = arith.constant 0 : i32
    %c0_i32_0 = arith.constant 0 : i32
    return %arg0, %c0_i32 : i32, i32
  }
  func.func @transform_1(%arg0: i32) -> (i32, i32) {
    %c0_i32 = arith.constant 0 : i32
    %c0_i32_0 = arith.constant 0 : i32
    %c0_i32_1 = arith.constant 0 : i32
    return %c0_i32, %c0_i32_0 : i32, i32
  }
  func.func @transform_2(%arg0: i32) -> (i32, i32) {
    %c0_i32 = arith.constant 0 : i32
    %c0_i32_0 = arith.constant 0 : i32
    %c0_i32_1 = arith.constant 0 : i32
    return %c0_i32, %c0_i32_0 : i32, i32
  }
  func.func @transform_3(%arg0: i32) -> (i32, i32) {
    %c0_i32 = arith.constant 0 : i32
    %c0_i32_0 = arith.constant 0 : i32
    return %arg0, %c0_i32 : i32, i32
  }
}

</mosaic_0001>

<llo_original>
// kernel: qkv_conv.1
$region0: #{qkv_conv.1}
  #allocation0 [shape = 'u32[]', space=smem, size = 0x4, offset = 0x4, fixed_abs, tag = 'smem constant byte address 0x4 - core index']
  #allocation1 [shape = 'u32[144,128]{1,0:T(1,128)}', space=vmem, size = 0x12000, scoped, tag = 'internal scratch']
  %s0 = inlined_call_operand.vmem [shape: bf16[3136,64], index: 0, kind: input, shape index: {}]
  %s1 = inlined_call_operand.vmem [shape: bf16[64,192], index: 1, kind: input, shape index: {}]
  %s2 = inlined_call_operand.vmem [shape: f32[1,192], index: 2, kind: input, shape index: {}]
  %s3 = inlined_call_operand.vmem [shape: f32[3136,192], index: 3, kind: output, shape index: {}]
  %s4 = sld [smem:[#allocation0]]
  $region22: #{qkv_conv.1} parent=0
    _
  %s6 = ssub.s32 1, %s4
  %s7 = scalar_select 0, %s6, %s4
  // Predicated region
  $region2: #{qkv_conv.1} parent=0 // pred_check
    _
  $region3: #{qkv_conv.1} parent=0 // pred_check_branch
    %9 = sbr.rel (0) target = $region5
  $region4: #{qkv_conv.1} parent=0 // pred_region
    _
  $region5: #{qkv_conv.1} parent=0 // pred_fallthru
    _
  // Predicated region
  $region6: #{qkv_conv.1} parent=0 // pred_check
    _
  $region7: #{qkv_conv.1} parent=0 // pred_check_branch
    %11 = sbr.rel (0) target = $region9
  $region8: #{qkv_conv.1} parent=0 // pred_region
    _
  $region9: #{qkv_conv.1} parent=0 // pred_fallthru
    _
  // Predicated region
  $region10: #{qkv_conv.1} parent=0 // pred_check
    _
  $region11: #{qkv_conv.1} parent=0 // pred_check_branch
    %13 = sbr.rel (0) target = $region13
  $region12: #{qkv_conv.1} parent=0 // pred_region
    _
  $region13: #{qkv_conv.1} parent=0 // pred_fallthru
    _
  %v15 = vld [vmem:[%s0] sm:$0xf]
  %v16 = vld [vmem:[%s0 + $0x4] sm:$0xf]
  %v17 = vld [vmem:[%s0 + $0x8] sm:$0xf]
  %v18 = vld [vmem:[%s0 + $0xc] sm:$0xf]
  %v19 = vld [vmem:[%s0 + $0x10] sm:$0xf]
  %v20 = vld [vmem:[%s0 + $0x14] sm:$0xf]
  %v21 = vld [vmem:[%s0 + $0x18] sm:$0xf]
  %v22 = vld [vmem:[%s0 + $0x1c] sm:$0xf]
  %v23 = vld [vmem:[%s0 + $0x20] sm:$0xf]
  %v24 = vld [vmem:[%s0 + $0x24] sm:$0xf]
  %v25 = vld [vmem:[%s0 + $0x28] sm:$0xf]
  %v26 = vld [vmem:[%s0 + $0x2c] sm:$0xf]
  %v27 = vld [vmem:[%s0 + $0x30] sm:$0xf]
  %v28 = vld [vmem:[%s0 + $0x34] sm:$0xf]
  %v29 = vld [vmem:[%s0 + $0x38] sm:$0xf]
  %v30 = vld [vmem:[%s0 + $0x3c] sm:$0xf]
  %v31 = vld [vmem:[%s0 + $0x40] sm:$0xf]
  %v32 = vld [vmem:[%s0 + $0x44] sm:$0xf]
  %v33 = vld [vmem:[%s0 + $0x48] sm:$0xf]
  %v34 = vld [vmem:[%s0 + $0x4c] sm:$0xf]
  %v35 = vld [vmem:[%s0 + $0x50] sm:$0xf]
  %v36 = vld [vmem:[%s0 + $0x54] sm:$0xf]
  %v37 = vld [vmem:[%s0 + $0x58] sm:$0xf]
  %v38 = vld [vmem:[%s0 + $0x5c] sm:$0xf]
  %v39 = vld [vmem:[%s0 + $0x60] sm:$0xf]
  %v40 = vld [vmem:[%s0 + $0x64] sm:$0xf]
  %v41 = vld [vmem:[%s0 + $0x68] sm:$0xf]
  %v42 = vld [vmem:[%s0 + $0x6c] sm:$0xf]
  %v43 = vld [vmem:[%s0 + $0x70] sm:$0xf]
  %v44 = vld [vmem:[%s0 + $0x74] sm:$0xf]
  %v45 = vld [vmem:[%s0 + $0x78] sm:$0xf]
  %v46 = vld [vmem:[%s0 + $0x7c] sm:$0xf]
  %v47 = vld [vmem:[%s0 + $0x80] sm:$0xf]
  %v48 = vld [vmem:[%s0 + $0x84] sm:$0xf]
  %v49 = vld [vmem:[%s0 + $0x88] sm:$0xf]
  %v50 = vld [vmem:[%s0 + $0x8c] sm:$0xf]
  %v51 = vld [vmem:[%s0 + $0x90] sm:$0xf]
  %v52 = vld [vmem:[%s0 + $0x94] sm:$0xf]
  %v53 = vld [vmem:[%s0 + $0x98] sm:$0xf]
  %v54 = vld [vmem:[%s0 + $0x9c] sm:$0xf]
  %v55 = vld [vmem:[%s0 + $0xa0] sm:$0xf]
  %v56 = vld [vmem:[%s0 + $0xa4] sm:$0xf]
  %v57 = vld [vmem:[%s0 + $0xa8] sm:$0xf]
  %v58 = vld [vmem:[%s0 + $0xac] sm:$0xf]
  %v59 = vld [vmem:[%s0 + $0xb0] sm:$0xf]
  %v60 = vld [vmem:[%s0 + $0xb4] sm:$0xf]
  %v61 = vld [vmem:[%s0 + $0xb8] sm:$0xf]
  %v62 = vld [vmem:[%s0 + $0xbc] sm:$0xf]
  %v63 = vld [vmem:[%s0 + $0xc0] sm:$0xf]
  %v64 = vld [vmem:[%s0 + $0xc4] sm:$0xf]
  %v65 = vld [vmem:[%s0 + $0xc8] sm:$0xf]
  %v66 = vld [vmem:[%s0 + $0xcc] sm:$0xf]
  %v67 = vld [vmem:[%s0 + $0xd0] sm:$0xf]
  %v68 = vld [vmem:[%s0 + $0xd4] sm:$0xf]
  %v69 = vld [vmem:[%s0 + $0xd8] sm:$0xf]
  %v70 = vld [vmem:[%s0 + $0xdc] sm:$0xf]
  %v71 = vld [vmem:[%s0 + $0xe0] sm:$0xf]
  %v72 = vld [vmem:[%s0 + $0xe4] sm:$0xf]
  %v73 = vld [vmem:[%s0 + $0xe8] sm:$0xf]
  %v74 = vld [vmem:[%s0 + $0xec] sm:$0xf]
  %v75 = vld [vmem:[%s0 + $0xf0] sm:$0xf]
  %v76 = vld [vmem:[%s0 + $0xf4] sm:$0xf]
  %v77 = vld [vmem:[%s0 + $0xf8] sm:$0xf]
  %v78 = vld [vmem:[%s0 + $0xfc] sm:$0xf]
  %v79 = vld [vmem:[%s0 + $0x100] sm:$0xf]
  %v80 = vld [vmem:[%s0 + $0x104] sm:$0xf]
  %v81 = vld [vmem:[%s0 + $0x108] sm:$0xf]
  %v82 = vld [vmem:[%s0 + $0x10c] sm:$0xf]
  %v83 = vld [vmem:[%s0 + $0x110] sm:$0xf]
  %v84 = vld [vmem:[%s0 + $0x114] sm:$0xf]
  %v85 = vld [vmem:[%s0 + $0x118] sm:$0xf]
  %v86 = vld [vmem:[%s0 + $0x11c] sm:$0xf]
  %v87 = vld [vmem:[%s0 + $0x120] sm:$0xf]
  %v88 = vld [vmem:[%s0 + $0x124] sm:$0xf]
  %v89 = vld [vmem:[%s0 + $0x128] sm:$0xf]
  %v90 = vld [vmem:[%s0 + $0x12c] sm:$0xf]
  %v91 = vld [vmem:[%s0 + $0x130] sm:$0xf]
  %v92 = vld [vmem:[%s0 + $0x134] sm:$0xf]
  %v93 = vld [vmem:[%s0 + $0x138] sm:$0xf]
  %v94 = vld [vmem:[%s0 + $0x13c] sm:$0xf]
  %v95 = vld [vmem:[%s0 + $0x140] sm:$0xf]
  %v96 = vld [vmem:[%s0 + $0x144] sm:$0xf]
  %v97 = vld [vmem:[%s0 + $0x148] sm:$0xf]
  %v98 = vld [vmem:[%s0 + $0x14c] sm:$0xf]
  %v99 = vld [vmem:[%s0 + $0x150] sm:$0xf]
  %v100 = vld [vmem:[%s0 + $0x154] sm:$0xf]
  %v101 = vld [vmem:[%s0 + $0x158] sm:$0xf]
  %v102 = vld [vmem:[%s0 + $0x15c] sm:$0xf]
  %v103 = vld [vmem:[%s0 + $0x160] sm:$0xf]
  %v104 = vld [vmem:[%s0 + $0x164] sm:$0xf]
  %v105 = vld [vmem:[%s0 + $0x168] sm:$0xf]
  %v106 = vld [vmem:[%s0 + $0x16c] sm:$0xf]
  %v107 = vld [vmem:[%s0 + $0x170] sm:$0xf]
  %v108 = vld [vmem:[%s0 + $0x174] sm:$0xf]
  %v109 = vld [vmem:[%s0 + $0x178] sm:$0xf]
  %v110 = vld [vmem:[%s0 + $0x17c] sm:$0xf]
  %v111 = vld [vmem:[%s0 + $0x180] sm:$0xf]
  %v112 = vld [vmem:[%s0 + $0x184] sm:$0xf]
  %v113 = vld [vmem:[%s0 + $0x188] sm:$0xf]
  %v114 = vld [vmem:[%s0 + $0x18c] sm:$0xf]
  %v115 = vld [vmem:[%s0 + $0x190] sm:$0xf]
  %v116 = vld [vmem:[%s0 + $0x194] sm:$0xf]
  %v117 = vld [vmem:[%s0 + $0x198] sm:$0xf]
  %v118 = vld [vmem:[%s0 + $0x19c] sm:$0xf]
  %v119 = vld [vmem:[%s0 + $0x1a0] sm:$0xf]
  %v120 = vld [vmem:[%s0 + $0x1a4] sm:$0xf]
  %v121 = vld [vmem:[%s0 + $0x1a8] sm:$0xf]
  %v122 = vld [vmem:[%s0 + $0x1ac] sm:$0xf]
  %v123 = vld [vmem:[%s0 + $0x1b0] sm:$0xf]
  %v124 = vld [vmem:[%s0 + $0x1b4] sm:$0xf]
  %v125 = vld [vmem:[%s0 + $0x1b8] sm:$0xf]
  %v126 = vld [vmem:[%s0 + $0x1bc] sm:$0xf]
  %v127 = vld [vmem:[%s0 + $0x1c0] sm:$0xf]
  %v128 = vld [vmem:[%s0 + $0x1c4] sm:$0xf]
  %v129 = vld [vmem:[%s0 + $0x1c8] sm:$0xf]
  %v130 = vld [vmem:[%s0 + $0x1cc] sm:$0xf]
  %v131 = vld [vmem:[%s0 + $0x1d0] sm:$0xf]
  %v132 = vld [vmem:[%s0 + $0x1d4] sm:$0xf]
  %v133 = vld [vmem:[%s0 + $0x1d8] sm:$0xf]
  %v134 = vld [vmem:[%s0 + $0x1dc] sm:$0xf]
  %v135 = vld [vmem:[%s0 + $0x1e0] sm:$0xf]
  %v136 = vld [vmem:[%s0 + $0x1e4] sm:$0xf]
  %v137 = vld [vmem:[%s0 + $0x1e8] sm:$0xf]
  %v138 = vld [vmem:[%s0 + $0x1ec] sm:$0xf]
  %v139 = vld [vmem:[%s0 + $0x1f0] sm:$0xf]
  %v140 = vld [vmem:[%s0 + $0x1f4] sm:$0xf]
  %v141 = vld [vmem:[%s0 + $0x1f8] sm:$0xf]
  %v142 = vld [vmem:[%s0 + $0x1fc] sm:$0xf]
  %v143 = vld [vmem:[%s0 + $0x200] sm:$0xf]
  %v144 = vld [vmem:[%s0 + $0x204] sm:$0xf]
  %v145 = vld [vmem:[%s0 + $0x208] sm:$0xf]
  %v146 = vld [vmem:[%s0 + $0x20c] sm:$0xf]
  %v147 = vld [vmem:[%s0 + $0x210] sm:$0xf]
  %v148 = vld [vmem:[%s0 + $0x214] sm:$0xf]
  %v149 = vld [vmem:[%s0 + $0x218] sm:$0xf]
  %v150 = vld [vmem:[%s0 + $0x21c] sm:$0xf]
  %v151 = vld [vmem:[%s0 + $0x220] sm:$0xf]
  %v152 = vld [vmem:[%s0 + $0x224] sm:$0xf]
  %v153 = vld [vmem:[%s0 + $0x228] sm:$0xf]
  %v154 = vld [vmem:[%s0 + $0x22c] sm:$0xf]
  %v155 = vld [vmem:[%s0 + $0x230] sm:$0xf]
  %v156 = vld [vmem:[%s0 + $0x234] sm:$0xf]
  %v157 = vld [vmem:[%s0 + $0x238] sm:$0xf]
  %v158 = vld [vmem:[%s0 + $0x23c] sm:$0xf]
  %v159 = vld [vmem:[%s0 + $0x240] sm:$0xf]
  %v160 = vld [vmem:[%s0 + $0x244] sm:$0xf]
  %v161 = vld [vmem:[%s0 + $0x248] sm:$0xf]
  %v162 = vld [vmem:[%s0 + $0x24c] sm:$0xf]
  %v163 = vld [vmem:[%s0 + $0x250] sm:$0xf]
  %v164 = vld [vmem:[%s0 + $0x254] sm:$0xf]
  %v165 = vld [vmem:[%s0 + $0x258] sm:$0xf]
  %v166 = vld [vmem:[%s0 + $0x25c] sm:$0xf]
  %v167 = vld [vmem:[%s0 + $0x260] sm:$0xf]
  %v168 = vld [vmem:[%s0 + $0x264] sm:$0xf]
  %v169 = vld [vmem:[%s0 + $0x268] sm:$0xf]
  %v170 = vld [vmem:[%s0 + $0x26c] sm:$0xf]
  %v171 = vld [vmem:[%s0 + $0x270] sm:$0xf]
  %v172 = vld [vmem:[%s0 + $0x274] sm:$0xf]
  %v173 = vld [vmem:[%s0 + $0x278] sm:$0xf]
  %v174 = vld [vmem:[%s0 + $0x27c] sm:$0xf]
  %v175 = vld [vmem:[%s0 + $0x280] sm:$0xf]
  %v176 = vld [vmem:[%s0 + $0x284] sm:$0xf]
  %v177 = vld [vmem:[%s0 + $0x288] sm:$0xf]
  %v178 = vld [vmem:[%s0 + $0x28c] sm:$0xf]
  %v179 = vld [vmem:[%s0 + $0x290] sm:$0xf]
  %v180 = vld [vmem:[%s0 + $0x294] sm:$0xf]
  %v181 = vld [vmem:[%s0 + $0x298] sm:$0xf]
  %v182 = vld [vmem:[%s0 + $0x29c] sm:$0xf]
  %v183 = vld [vmem:[%s0 + $0x2a0] sm:$0xf]
  %v184 = vld [vmem:[%s0 + $0x2a4] sm:$0xf]
  %v185 = vld [vmem:[%s0 + $0x2a8] sm:$0xf]
  %v186 = vld [vmem:[%s0 + $0x2ac] sm:$0xf]
  %v187 = vld [vmem:[%s0 + $0x2b0] sm:$0xf]
  %v188 = vld [vmem:[%s0 + $0x2b4] sm:$0xf]
  %v189 = vld [vmem:[%s0 + $0x2b8] sm:$0xf]
  %v190 = vld [vmem:[%s0 + $0x2bc] sm:$0xf]
  %v191 = vld [vmem:[%s0 + $0x2c0] sm:$0xf]
  %v192 = vld [vmem:[%s0 + $0x2c4] sm:$0xf]
  %v193 = vld [vmem:[%s0 + $0x2c8] sm:$0xf]
  %v194 = vld [vmem:[%s0 + $0x2cc] sm:$0xf]
  %v195 = vld [vmem:[%s0 + $0x2d0] sm:$0xf]
  %v196 = vld [vmem:[%s0 + $0x2d4] sm:$0xf]
  %v197 = vld [vmem:[%s0 + $0x2d8] sm:$0xf]
  %v198 = vld [vmem:[%s0 + $0x2dc] sm:$0xf]
  %v199 = vld [vmem:[%s0 + $0x2e0] sm:$0xf]
  %v200 = vld [vmem:[%s0 + $0x2e4] sm:$0xf]
  %v201 = vld [vmem:[%s0 + $0x2e8] sm:$0xf]
  %v202 = vld [vmem:[%s0 + $0x2ec] sm:$0xf]
  %v203 = vld [vmem:[%s0 + $0x2f0] sm:$0xf]
  %v204 = vld [vmem:[%s0 + $0x2f4] sm:$0xf]
  %v205 = vld [vmem:[%s0 + $0x2f8] sm:$0xf]
  %v206 = vld [vmem:[%s0 + $0x2fc] sm:$0xf]
  %v207 = vld [vmem:[%s0 + $0x300] sm:$0xf]
  %v208 = vld [vmem:[%s0 + $0x304] sm:$0xf]
  %v209 = vld [vmem:[%s0 + $0x308] sm:$0xf]
  %v210 = vld [vmem:[%s0 + $0x30c] sm:$0xf]
  %v211 = vld [vmem:[%s0 + $0x310] sm:$0xf]
  %v212 = vld [vmem:[%s0 + $0x314] sm:$0xf]
  %v213 = vld [vmem:[%s0 + $0x318] sm:$0xf]
  %v214 = vld [vmem:[%s0 + $0x31c] sm:$0xf]
  %v215 = vld [vmem:[%s0 + $0x320] sm:$0xf]
  %v216 = vld [vmem:[%s0 + $0x324] sm:$0xf]
  %v217 = vld [vmem:[%s0 + $0x328] sm:$0xf]
  %v218 = vld [vmem:[%s0 + $0x32c] sm:$0xf]
  %v219 = vld [vmem:[%s0 + $0x330] sm:$0xf]
  %v220 = vld [vmem:[%s0 + $0x334] sm:$0xf]
  %v221 = vld [vmem:[%s0 + $0x338] sm:$0xf]
  %v222 = vld [vmem:[%s0 + $0x33c] sm:$0xf]
  %v223 = vld [vmem:[%s0 + $0x340] sm:$0xf]
  %v224 = vld [vmem:[%s0 + $0x344] sm:$0xf]
  %v225 = vld [vmem:[%s0 + $0x348] sm:$0xf]
  %v226 = vld [vmem:[%s0 + $0x34c] sm:$0xf]
  %v227 = vld [vmem:[%s0 + $0x350] sm:$0xf]
  %v228 = vld [vmem:[%s0 + $0x354] sm:$0xf]
  %v229 = vld [vmem:[%s0 + $0x358] sm:$0xf]
  %v230 = vld [vmem:[%s0 + $0x35c] sm:$0xf]
  %v231 = vld [vmem:[%s0 + $0x360] sm:$0xf]
  %v232 = vld [vmem:[%s0 + $0x364] sm:$0xf]
  %v233 = vld [vmem:[%s0 + $0x368] sm:$0xf]
  %v234 = vld [vmem:[%s0 + $0x36c] sm:$0xf]
  %v235 = vld [vmem:[%s0 + $0x370] sm:$0xf]
  %v236 = vld [vmem:[%s0 + $0x374] sm:$0xf]
  %v237 = vld [vmem:[%s0 + $0x378] sm:$0xf]
  %v238 = vld [vmem:[%s0 + $0x37c] sm:$0xf]
  %v239 = vld [vmem:[%s0 + $0x380] sm:$0xf]
  %v240 = vld [vmem:[%s0 + $0x384] sm:$0xf]
  %v241 = vld [vmem:[%s0 + $0x388] sm:$0xf]
  %v242 = vld [vmem:[%s0 + $0x38c] sm:$0xf]
  %v243 = vld [vmem:[%s0 + $0x390] sm:$0xf]
  %v244 = vld [vmem:[%s0 + $0x394] sm:$0xf]
  %v245 = vld [vmem:[%s0 + $0x398] sm:$0xf]
  %v246 = vld [vmem:[%s0 + $0x39c] sm:$0xf]
  %v247 = vld [vmem:[%s0 + $0x3a0] sm:$0xf]
  %v248 = vld [vmem:[%s0 + $0x3a4] sm:$0xf]
  %v249 = vld [vmem:[%s0 + $0x3a8] sm:$0xf]
  %v250 = vld [vmem:[%s0 + $0x3ac] sm:$0xf]
  %v251 = vld [vmem:[%s0 + $0x3b0] sm:$0xf]
  %v252 = vld [vmem:[%s0 + $0x3b4] sm:$0xf]
  %v253 = vld [vmem:[%s0 + $0x3b8] sm:$0xf]
  %v254 = vld [vmem:[%s0 + $0x3bc] sm:$0xf]
  %v255 = vld [vmem:[%s0 + $0x3c0] sm:$0xf]
  %v256 = vld [vmem:[%s0 + $0x3c4] sm:$0xf]
  %v257 = vld [vmem:[%s0 + $0x3c8] sm:$0xf]
  %v258 = vld [vmem:[%s0 + $0x3cc] sm:$0xf]
  %v259 = vld [vmem:[%s0 + $0x3d0] sm:$0xf]
  %v260 = vld [vmem:[%s0 + $0x3d4] sm:$0xf]
  %v261 = vld [vmem:[%s0 + $0x3d8] sm:$0xf]
  %v262 = vld [vmem:[%s0 + $0x3dc] sm:$0xf]
  %v263 = vld [vmem:[%s0 + $0x3e0] sm:$0xf]
  %v264 = vld [vmem:[%s0 + $0x3e4] sm:$0xf]
  %v265 = vld [vmem:[%s0 + $0x3e8] sm:$0xf]
  %v266 = vld [vmem:[%s0 + $0x3ec] sm:$0xf]
  %v267 = vld [vmem:[%s0 + $0x3f0] sm:$0xf]
  %v268 = vld [vmem:[%s0 + $0x3f4] sm:$0xf]
  %v269 = vld [vmem:[%s0 + $0x3f8] sm:$0xf]
  %v270 = vld [vmem:[%s0 + $0x3fc] sm:$0xf]
  %v271 = vld [vmem:[%s0 + $0x400] sm:$0xf]
  %v272 = vld [vmem:[%s0 + $0x404] sm:$0xf]
  %v273 = vld [vmem:[%s0 + $0x408] sm:$0xf]
  %v274 = vld [vmem:[%s0 + $0x40c] sm:$0xf]
  %v275 = vld [vmem:[%s0 + $0x410] sm:$0xf]
  %v276 = vld [vmem:[%s0 + $0x414] sm:$0xf]
  %v277 = vld [vmem:[%s0 + $0x418] sm:$0xf]
  %v278 = vld [vmem:[%s0 + $0x41c] sm:$0xf]
  %v279 = vld [vmem:[%s0 + $0x420] sm:$0xf]
  %v280 = vld [vmem:[%s0 + $0x424] sm:$0xf]
  %v281 = vld [vmem:[%s0 + $0x428] sm:$0xf]
  %v282 = vld [vmem:[%s0 + $0x42c] sm:$0xf]
  %v283 = vld [vmem:[%s0 + $0x430] sm:$0xf]
  %v284 = vld [vmem:[%s0 + $0x434] sm:$0xf]
  %v285 = vld [vmem:[%s0 + $0x438] sm:$0xf]
  %v286 = vld [vmem:[%s0 + $0x43c] sm:$0xf]
  %v287 = vld [vmem:[%s0 + $0x440] sm:$0xf]
  %v288 = vld [vmem:[%s0 + $0x444] sm:$0xf]
  %v289 = vld [vmem:[%s0 + $0x448] sm:$0xf]
  %v290 = vld [vmem:[%s0 + $0x44c] sm:$0xf]
  %v291 = vld [vmem:[%s0 + $0x450] sm:$0xf]
  %v292 = vld [vmem:[%s0 + $0x454] sm:$0xf]
  %v293 = vld [vmem:[%s0 + $0x458] sm:$0xf]
  %v294 = vld [vmem:[%s0 + $0x45c] sm:$0xf]
  %v295 = vld [vmem:[%s0 + $0x460] sm:$0xf]
  %v296 = vld [vmem:[%s0 + $0x464] sm:$0xf]
  %v297 = vld [vmem:[%s0 + $0x468] sm:$0xf]
  %v298 = vld [vmem:[%s0 + $0x46c] sm:$0xf]
  %v299 = vld [vmem:[%s0 + $0x470] sm:$0xf]
  %v300 = vld [vmem:[%s0 + $0x474] sm:$0xf]
  %v301 = vld [vmem:[%s0 + $0x478] sm:$0xf]
  %v302 = vld [vmem:[%s0 + $0x47c] sm:$0xf]
  %v303 = vld [vmem:[%s0 + $0x480] sm:$0xf]
  %v304 = vld [vmem:[%s0 + $0x484] sm:$0xf]
  %v305 = vld [vmem:[%s0 + $0x488] sm:$0xf]
  %v306 = vld [vmem:[%s0 + $0x48c] sm:$0xf]
  %v307 = vld [vmem:[%s0 + $0x490] sm:$0xf]
  %v308 = vld [vmem:[%s0 + $0x494] sm:$0xf]
  %v309 = vld [vmem:[%s0 + $0x498] sm:$0xf]
  %v310 = vld [vmem:[%s0 + $0x49c] sm:$0xf]
  %v311 = vld [vmem:[%s0 + $0x4a0] sm:$0xf]
  %v312 = vld [vmem:[%s0 + $0x4a4] sm:$0xf]
  %v313 = vld [vmem:[%s0 + $0x4a8] sm:$0xf]
  %v314 = vld [vmem:[%s0 + $0x4ac] sm:$0xf]
  %v315 = vld [vmem:[%s0 + $0x4b0] sm:$0xf]
  %v316 = vld [vmem:[%s0 + $0x4b4] sm:$0xf]
  %v317 = vld [vmem:[%s0 + $0x4b8] sm:$0xf]
  %v318 = vld [vmem:[%s0 + $0x4bc] sm:$0xf]
  %v319 = vld [vmem:[%s0 + $0x4c0] sm:$0xf]
  %v320 = vld [vmem:[%s0 + $0x4c4] sm:$0xf]
  %v321 = vld [vmem:[%s0 + $0x4c8] sm:$0xf]
  %v322 = vld [vmem:[%s0 + $0x4cc] sm:$0xf]
  %v323 = vld [vmem:[%s0 + $0x4d0] sm:$0xf]
  %v324 = vld [vmem:[%s0 + $0x4d4] sm:$0xf]
  %v325 = vld [vmem:[%s0 + $0x4d8] sm:$0xf]
  %v326 = vld [vmem:[%s0 + $0x4dc] sm:$0xf]
  %v327 = vld [vmem:[%s0 + $0x4e0] sm:$0xf]
  %v328 = vld [vmem:[%s0 + $0x4e4] sm:$0xf]
  %v329 = vld [vmem:[%s0 + $0x4e8] sm:$0xf]
  %v330 = vld [vmem:[%s0 + $0x4ec] sm:$0xf]
  %v331 = vld [vmem:[%s0 + $0x4f0] sm:$0xf]
  %v332 = vld [vmem:[%s0 + $0x4f4] sm:$0xf]
  %v333 = vld [vmem:[%s0 + $0x4f8] sm:$0xf]
  %v334 = vld [vmem:[%s0 + $0x4fc] sm:$0xf]
  %v335 = vld [vmem:[%s0 + $0x500] sm:$0xf]
  %v336 = vld [vmem:[%s0 + $0x504] sm:$0xf]
  %v337 = vld [vmem:[%s0 + $0x508] sm:$0xf]
  %v338 = vld [vmem:[%s0 + $0x50c] sm:$0xf]
  %v339 = vld [vmem:[%s0 + $0x510] sm:$0xf]
  %v340 = vld [vmem:[%s0 + $0x514] sm:$0xf]
  %v341 = vld [vmem:[%s0 + $0x518] sm:$0xf]
  %v342 = vld [vmem:[%s0 + $0x51c] sm:$0xf]
  %v343 = vld [vmem:[%s0 + $0x520] sm:$0xf]
  %v344 = vld [vmem:[%s0 + $0x524] sm:$0xf]
  %v345 = vld [vmem:[%s0 + $0x528] sm:$0xf]
  %v346 = vld [vmem:[%s0 + $0x52c] sm:$0xf]
  %v347 = vld [vmem:[%s0 + $0x530] sm:$0xf]
  %v348 = vld [vmem:[%s0 + $0x534] sm:$0xf]
  %v349 = vld [vmem:[%s0 + $0x538] sm:$0xf]
  %v350 = vld [vmem:[%s0 + $0x53c] sm:$0xf]
  %v351 = vld [vmem:[%s0 + $0x540] sm:$0xf]
  %v352 = vld [vmem:[%s0 + $0x544] sm:$0xf]
  %v353 = vld [vmem:[%s0 + $0x548] sm:$0xf]
  %v354 = vld [vmem:[%s0 + $0x54c] sm:$0xf]
  %v355 = vld [vmem:[%s0 + $0x550] sm:$0xf]
  %v356 = vld [vmem:[%s0 + $0x554] sm:$0xf]
  %v357 = vld [vmem:[%s0 + $0x558] sm:$0xf]
  %v358 = vld [vmem:[%s0 + $0x55c] sm:$0xf]
  %v359 = vld [vmem:[%s0 + $0x560] sm:$0xf]
  %v360 = vld [vmem:[%s0 + $0x564] sm:$0xf]
  %v361 = vld [vmem:[%s0 + $0x568] sm:$0xf]
  %v362 = vld [vmem:[%s0 + $0x56c] sm:$0xf]
  %v363 = vld [vmem:[%s0 + $0x570] sm:$0xf]
  %v364 = vld [vmem:[%s0 + $0x574] sm:$0xf]
  %v365 = vld [vmem:[%s0 + $0x578] sm:$0xf]
  %v366 = vld [vmem:[%s0 + $0x57c] sm:$0xf]
  %v367 = vld [vmem:[%s0 + $0x580] sm:$0xf]
  %v368 = vld [vmem:[%s0 + $0x584] sm:$0xf]
  %v369 = vld [vmem:[%s0 + $0x588] sm:$0xf]
  %v370 = vld [vmem:[%s0 + $0x58c] sm:$0xf]
  %v371 = vld [vmem:[%s0 + $0x590] sm:$0xf]
  %v372 = vld [vmem:[%s0 + $0x594] sm:$0xf]
  %v373 = vld [vmem:[%s0 + $0x598] sm:$0xf]
  %v374 = vld [vmem:[%s0 + $0x59c] sm:$0xf]
  %v375 = vld [vmem:[%s0 + $0x5a0] sm:$0xf]
  %v376 = vld [vmem:[%s0 + $0x5a4] sm:$0xf]
  %v377 = vld [vmem:[%s0 + $0x5a8] sm:$0xf]
  %v378 = vld [vmem:[%s0 + $0x5ac] sm:$0xf]
  %v379 = vld [vmem:[%s0 + $0x5b0] sm:$0xf]
  %v380 = vld [vmem:[%s0 + $0x5b4] sm:$0xf]
  %v381 = vld [vmem:[%s0 + $0x5b8] sm:$0xf]
  %v382 = vld [vmem:[%s0 + $0x5bc] sm:$0xf]
  %v383 = vld [vmem:[%s0 + $0x5c0] sm:$0xf]
  %v384 = vld [vmem:[%s0 + $0x5c4] sm:$0xf]
  %v385 = vld [vmem:[%s0 + $0x5c8] sm:$0xf]
  %v386 = vld [vmem:[%s0 + $0x5cc] sm:$0xf]
  %v387 = vld [vmem:[%s0 + $0x5d0] sm:$0xf]
  %v388 = vld [vmem:[%s0 + $0x5d4] sm:$0xf]
  %v389 = vld [vmem:[%s0 + $0x5d8] sm:$0xf]
  %v390 = vld [vmem:[%s0 + $0x5dc] sm:$0xf]
  %v391 = vld [vmem:[%s0 + $0x5e0] sm:$0xf]
  %v392 = vld [vmem:[%s0 + $0x5e4] sm:$0xf]
  %v393 = vld [vmem:[%s0 + $0x5e8] sm:$0xf]
  %v394 = vld [vmem:[%s0 + $0x5ec] sm:$0xf]
  %v395 = vld [vmem:[%s0 + $0x5f0] sm:$0xf]
  %v396 = vld [vmem:[%s0 + $0x5f4] sm:$0xf]
  %v397 = vld [vmem:[%s0 + $0x5f8] sm:$0xf]
  %v398 = vld [vmem:[%s0 + $0x5fc] sm:$0xf]
  %v399 = vld [vmem:[%s0 + $0x600] sm:$0xf]
  %v400 = vld [vmem:[%s0 + $0x604] sm:$0xf]
  %v401 = vld [vmem:[%s0 + $0x608] sm:$0xf]
  %v402 = vld [vmem:[%s0 + $0x60c] sm:$0xf]
  %v403 = vld [vmem:[%s0 + $0x610] sm:$0xf]
  %v404 = vld [vmem:[%s0 + $0x614] sm:$0xf]
  %v405 = vld [vmem:[%s0 + $0x618] sm:$0xf]
  %v406 = vld [vmem:[%s0 + $0x61c] sm:$0xf]
  %v407 = vld [vmem:[%s1] sm:$0xff]
  %v408 = vld [vmem:[%s1 + $0x8] sm:$0xff]
  %v409 = vld [vmem:[%s1 + $0x10] sm:$0xff]
  %v410 = vld [vmem:[%s1 + $0x18] sm:$0xff]
  %v411 = vld [vmem:[%s1 + $0x20] sm:$0xff]
  %v412 = vld [vmem:[%s1 + $0x28] sm:$0xff]
  %v413 = vld [vmem:[%s1 + $0x30] sm:$0xff]
  %v414 = vld [vmem:[%s1 + $0x38] sm:$0xff]
  %v415 = vld [vmem:[%s2] sm:$0x3]
  %v417 = vlaneseq
  %v418 = vshrl.u32 %v417, 7
  %v419 = vsub.s32 0, %v418
  %v420 = vrot.slane %v415, %v419
  %v421 = vlaneseq
  %v422 = vshrl.u32 %v421, 7
  %v423 = vsub.s32 1, %v422
  %v424 = vrot.slane %v415, %v423
  %v819 = vunpack.c.l.b16 %v15
  %v820 = vunpack.c.l.b16 %v16
  %v821 = vunpack.c.l.b16 %v17
  %v822 = vunpack.c.l.b16 %v18
  %v823 = vunpack.c.l.b16 %v19
  %v824 = vunpack.c.l.b16 %v20
  %v825 = vunpack.c.l.b16 %v21
  %v826 = vunpack.c.l.b16 %v22
  %v827 = vunpack.c.l.b16 %v23
  %v828 = vunpack.c.l.b16 %v24
  %v829 = vunpack.c.l.b16 %v25
  %v830 = vunpack.c.l.b16 %v26
  %v831 = vunpack.c.l.b16 %v27
  %v832 = vunpack.c.l.b16 %v28
  %v833 = vunpack.c.l.b16 %v29
  %v834 = vunpack.c.l.b16 %v30
  %v835 = vunpack.c.l.b16 %v31
  %v836 = vunpack.c.l.b16 %v32
  %v837 = vunpack.c.l.b16 %v33
  %v838 = vunpack.c.l.b16 %v34
  %v839 = vunpack.c.l.b16 %v35
  %v840 = vunpack.c.l.b16 %v36
  %v841 = vunpack.c.l.b16 %v37
  %v842 = vunpack.c.l.b16 %v38
  %v843 = vunpack.c.l.b16 %v39
  %v844 = vunpack.c.l.b16 %v40
  %v845 = vunpack.c.l.b16 %v41
  %v846 = vunpack.c.l.b16 %v42
  %v847 = vunpack.c.l.b16 %v43
  %v848 = vunpack.c.l.b16 %v44
  %v849 = vunpack.c.l.b16 %v45
  %v850 = vunpack.c.l.b16 %v46
  %v851 = vunpack.c.l.b16 %v47
  %v852 = vunpack.c.l.b16 %v48
  %v853 = vunpack.c.l.b16 %v49
  %v854 = vunpack.c.l.b16 %v50
  %v855 = vunpack.c.l.b16 %v51
  %v856 = vunpack.c.l.b16 %v52
  %v857 = vunpack.c.l.b16 %v53
  %v858 = vunpack.c.l.b16 %v54
  %v859 = vunpack.c.l.b16 %v55
  %v860 = vunpack.c.l.b16 %v56
  %v861 = vunpack.c.l.b16 %v57
  %v862 = vunpack.c.l.b16 %v58
  %v863 = vunpack.c.l.b16 %v59
  %v864 = vunpack.c.l.b16 %v60
  %v865 = vunpack.c.l.b16 %v61
  %v866 = vunpack.c.l.b16 %v62
  %v867 = vunpack.c.l.b16 %v63
  %v868 = vunpack.c.l.b16 %v64
  %v869 = vunpack.c.l.b16 %v65
  %v870 = vunpack.c.l.b16 %v66
  %v871 = vunpack.c.l.b16 %v67
  %v872 = vunpack.c.l.b16 %v68
  %v873 = vunpack.c.l.b16 %v69
  %v874 = vunpack.c.l.b16 %v70
  %v875 = vunpack.c.l.b16 %v71
  %v876 = vunpack.c.l.b16 %v72
  %v877 = vunpack.c.l.b16 %v73
  %v878 = vunpack.c.l.b16 %v74
  %v879 = vunpack.c.l.b16 %v75
  %v880 = vunpack.c.l.b16 %v76
  %v881 = vunpack.c.l.b16 %v77
  %v882 = vunpack.c.l.b16 %v78
  %v883 = vunpack.c.l.b16 %v79
  %v884 = vunpack.c.l.b16 %v80
  %v885 = vunpack.c.l.b16 %v81
  %v886 = vunpack.c.l.b16 %v82
  %v887 = vunpack.c.l.b16 %v83
  %v888 = vunpack.c.l.b16 %v84
  %v889 = vunpack.c.l.b16 %v85
  %v890 = vunpack.c.l.b16 %v86
  %v891 = vunpack.c.l.b16 %v87
  %v892 = vunpack.c.l.b16 %v88
  %v893 = vunpack.c.l.b16 %v89
  %v894 = vunpack.c.l.b16 %v90
  %v895 = vunpack.c.l.b16 %v91
  %v896 = vunpack.c.l.b16 %v92
  %v897 = vunpack.c.l.b16 %v93
  %v898 = vunpack.c.l.b16 %v94
  %v899 = vunpack.c.l.b16 %v95
  %v900 = vunpack.c.l.b16 %v96
  %v901 = vunpack.c.l.b16 %v97
  %v902 = vunpack.c.l.b16 %v98
  %v903 = vunpack.c.l.b16 %v99
  %v904 = vunpack.c.l.b16 %v100
  %v905 = vunpack.c.l.b16 %v101
  %v906 = vunpack.c.l.b16 %v102
  %v907 = vunpack.c.l.b16 %v103
  %v908 = vunpack.c.l.b16 %v104
  %v909 = vunpack.c.l.b16 %v105
  %v910 = vunpack.c.l.b16 %v106
  %v911 = vunpack.c.l.b16 %v107
  %v912 = vunpack.c.l.b16 %v108
  %v913 = vunpack.c.l.b16 %v109
  %v914 = vunpack.c.l.b16 %v110
  %v915 = vunpack.c.l.b16 %v111
  %v916 = vunpack.c.l.b16 %v112
  %v917 = vunpack.c.l.b16 %v113
  %v918 = vunpack.c.l.b16 %v114
  %v919 = vunpack.c.l.b16 %v115
  %v920 = vunpack.c.l.b16 %v116
  %v921 = vunpack.c.l.b16 %v117
  %v922 = vunpack.c.l.b16 %v118
  %v923 = vunpack.c.l.b16 %v119
  %v924 = vunpack.c.l.b16 %v120
  %v925 = vunpack.c.l.b16 %v121
  %v926 = vunpack.c.l.b16 %v122
  %v927 = vunpack.c.l.b16 %v123
  %v928 = vunpack.c.l.b16 %v124
  %v929 = vunpack.c.l.b16 %v125
  %v930 = vunpack.c.l.b16 %v126
  %v931 = vunpack.c.l.b16 %v127
  %v932 = vunpack.c.l.b16 %v128
  %v933 = vunpack.c.l.b16 %v129
  %v934 = vunpack.c.l.b16 %v130
  %v935 = vunpack.c.l.b16 %v131
  %v936 = vunpack.c.l.b16 %v132
  %v937 = vunpack.c.l.b16 %v133
  %v938 = vunpack.c.l.b16 %v134
  %v939 = vunpack.c.l.b16 %v135
  %v940 = vunpack.c.l.b16 %v136
  %v941 = vunpack.c.l.b16 %v137
  %v942 = vunpack.c.l.b16 %v138
  %v943 = vunpack.c.l.b16 %v139
  %v944 = vunpack.c.l.b16 %v140
  %v945 = vunpack.c.l.b16 %v141
  %v946 = vunpack.c.l.b16 %v142
  %v947 = vunpack.c.l.b16 %v143
  %v948 = vunpack.c.l.b16 %v144
  %v949 = vunpack.c.l.b16 %v145
  %v950 = vunpack.c.l.b16 %v146
  %v951 = vunpack.c.l.b16 %v147
  %v952 = vunpack.c.l.b16 %v148
  %v953 = vunpack.c.l.b16 %v149
  %v954 = vunpack.c.l.b16 %v150
  %v955 = vunpack.c.l.b16 %v151
  %v956 = vunpack.c.l.b16 %v152
  %v957 = vunpack.c.l.b16 %v153
  %v958 = vunpack.c.l.b16 %v154
  %v959 = vunpack.c.l.b16 %v155
  %v960 = vunpack.c.l.b16 %v156
  %v961 = vunpack.c.l.b16 %v157
  %v962 = vunpack.c.l.b16 %v158
  %v963 = vunpack.c.l.b16 %v159
  %v964 = vunpack.c.l.b16 %v160
  %v965 = vunpack.c.l.b16 %v161
  %v966 = vunpack.c.l.b16 %v162
  %v967 = vunpack.c.l.b16 %v163
  %v968 = vunpack.c.l.b16 %v164
  %v969 = vunpack.c.l.b16 %v165
  %v970 = vunpack.c.l.b16 %v166
  %v971 = vunpack.c.l.b16 %v167
  %v972 = vunpack.c.l.b16 %v168
  %v973 = vunpack.c.l.b16 %v169
  %v974 = vunpack.c.l.b16 %v170
  %v975 = vunpack.c.l.b16 %v171
  %v976 = vunpack.c.l.b16 %v172
  %v977 = vunpack.c.l.b16 %v173
  %v978 = vunpack.c.l.b16 %v174
  %v979 = vunpack.c.l.b16 %v175
  %v980 = vunpack.c.l.b16 %v176
  %v981 = vunpack.c.l.b16 %v177
  %v982 = vunpack.c.l.b16 %v178
  %v983 = vunpack.c.l.b16 %v179
  %v984 = vunpack.c.l.b16 %v180
  %v985 = vunpack.c.l.b16 %v181
  %v986 = vunpack.c.l.b16 %v182
  %v987 = vunpack.c.l.b16 %v183
  %v988 = vunpack.c.l.b16 %v184
  %v989 = vunpack.c.l.b16 %v185
  %v990 = vunpack.c.l.b16 %v186
  %v991 = vunpack.c.l.b16 %v187
  %v992 = vunpack.c.l.b16 %v188
  %v993 = vunpack.c.l.b16 %v189
  %v994 = vunpack.c.l.b16 %v190
  %v995 = vunpack.c.l.b16 %v191
  %v996 = vunpack.c.l.b16 %v192
  %v997 = vunpack.c.l.b16 %v193
  %v998 = vunpack.c.l.b16 %v194
  %v999 = vunpack.c.l.b16 %v195
  %v1000 = vunpack.c.l.b16 %v196
  %v1001 = vunpack.c.l.b16 %v197
  %v1002 = vunpack.c.l.b16 %v198
  %v1003 = vunpack.c.l.b16 %v199
  %v1004 = vunpack.c.l.b16 %v200
  %v1005 = vunpack.c.l.b16 %v201
  %v1006 = vunpack.c.l.b16 %v202
  %v1007 = vunpack.c.l.b16 %v203
  %v1008 = vunpack.c.l.b16 %v204
  %v1009 = vunpack.c.l.b16 %v205
  %v1010 = vunpack.c.l.b16 %v206
  %v1011 = vunpack.c.l.b16 %v207
  %v1012 = vunpack.c.l.b16 %v208
  %v1013 = vunpack.c.l.b16 %v209
  %v1014 = vunpack.c.l.b16 %v210
  %v1015 = vunpack.c.l.b16 %v211
  %v1016 = vunpack.c.l.b16 %v212
  %v1017 = vunpack.c.l.b16 %v213
  %v1018 = vunpack.c.l.b16 %v214
  %v1019 = vunpack.c.l.b16 %v215
  %v1020 = vunpack.c.l.b16 %v216
  %v1021 = vunpack.c.l.b16 %v217
  %v1022 = vunpack.c.l.b16 %v218
  %v1023 = vunpack.c.l.b16 %v219
  %v1024 = vunpack.c.l.b16 %v220
  %v1025 = vunpack.c.l.b16 %v221
  %v1026 = vunpack.c.l.b16 %v222
  %v1027 = vunpack.c.l.b16 %v223
  %v1028 = vunpack.c.l.b16 %v224
  %v1029 = vunpack.c.l.b16 %v225
  %v1030 = vunpack.c.l.b16 %v226
  %v1031 = vunpack.c.l.b16 %v227
  %v1032 = vunpack.c.l.b16 %v228
  %v1033 = vunpack.c.l.b16 %v229
  %v1034 = vunpack.c.l.b16 %v230
  %v1035 = vunpack.c.l.b16 %v231
  %v1036 = vunpack.c.l.b16 %v232
  %v1037 = vunpack.c.l.b16 %v233
  %v1038 = vunpack.c.l.b16 %v234
  %v1039 = vunpack.c.l.b16 %v235
  %v1040 = vunpack.c.l.b16 %v236
  %v1041 = vunpack.c.l.b16 %v237
  %v1042 = vunpack.c.l.b16 %v238
  %v1043 = vunpack.c.l.b16 %v239
  %v1044 = vunpack.c.l.b16 %v240
  %v1045 = vunpack.c.l.b16 %v241
  %v1046 = vunpack.c.l.b16 %v242
  %v1047 = vunpack.c.l.b16 %v243
  %v1048 = vunpack.c.l.b16 %v244
  %v1049 = vunpack.c.l.b16 %v245
  %v1050 = vunpack.c.l.b16 %v246
  %v1051 = vunpack.c.l.b16 %v247
  %v1052 = vunpack.c.l.b16 %v248
  %v1053 = vunpack.c.l.b16 %v249
  %v1054 = vunpack.c.l.b16 %v250
  %v1055 = vunpack.c.l.b16 %v251
  %v1056 = vunpack.c.l.b16 %v252
  %v1057 = vunpack.c.l.b16 %v253
  %v1058 = vunpack.c.l.b16 %v254
  %v1059 = vunpack.c.l.b16 %v255
  %v1060 = vunpack.c.l.b16 %v256
  %v1061 = vunpack.c.l.b16 %v257
  %v1062 = vunpack.c.l.b16 %v258
  %v1063 = vunpack.c.l.b16 %v259
  %v1064 = vunpack.c.l.b16 %v260
  %v1065 = vunpack.c.l.b16 %v261
  %v1066 = vunpack.c.l.b16 %v262
  %v1067 = vunpack.c.l.b16 %v263
  %v1068 = vunpack.c.l.b16 %v264
  %v1069 = vunpack.c.l.b16 %v265
  %v1070 = vunpack.c.l.b16 %v266
  %v1071 = vunpack.c.l.b16 %v267
  %v1072 = vunpack.c.l.b16 %v268
  %v1073 = vunpack.c.l.b16 %v269
  %v1074 = vunpack.c.l.b16 %v270
  %v1075 = vunpack.c.l.b16 %v271
  %v1076 = vunpack.c.l.b16 %v272
  %v1077 = vunpack.c.l.b16 %v273
  %v1078 = vunpack.c.l.b16 %v274
  %v1079 = vunpack.c.l.b16 %v275
  %v1080 = vunpack.c.l.b16 %v276
  %v1081 = vunpack.c.l.b16 %v277
  %v1082 = vunpack.c.l.b16 %v278
  %v1083 = vunpack.c.l.b16 %v279
  %v1084 = vunpack.c.l.b16 %v280
  %v1085 = vunpack.c.l.b16 %v281
  %v1086 = vunpack.c.l.b16 %v282
  %v1087 = vunpack.c.l.b16 %v283
  %v1088 = vunpack.c.l.b16 %v284
  %v1089 = vunpack.c.l.b16 %v285
  %v1090 = vunpack.c.l.b16 %v286
  %v1091 = vunpack.c.l.b16 %v287
  %v1092 = vunpack.c.l.b16 %v288
  %v1093 = vunpack.c.l.b16 %v289
  %v1094 = vunpack.c.l.b16 %v290
  %v1095 = vunpack.c.l.b16 %v291
  %v1096 = vunpack.c.l.b16 %v292
  %v1097 = vunpack.c.l.b16 %v293
  %v1098 = vunpack.c.l.b16 %v294
  %v1099 = vunpack.c.l.b16 %v295
  %v1100 = vunpack.c.l.b16 %v296
  %v1101 = vunpack.c.l.b16 %v297
  %v1102 = vunpack.c.l.b16 %v298
  %v1103 = vunpack.c.l.b16 %v299
  %v1104 = vunpack.c.l.b16 %v300
  %v1105 = vunpack.c.l.b16 %v301
  %v1106 = vunpack.c.l.b16 %v302
  %v1107 = vunpack.c.l.b16 %v303
  %v1108 = vunpack.c.l.b16 %v304
  %v1109 = vunpack.c.l.b16 %v305
  %v1110 = vunpack.c.l.b16 %v306
  %v1111 = vunpack.c.l.b16 %v307
  %v1112 = vunpack.c.l.b16 %v308
  %v1113 = vunpack.c.l.b16 %v309
  %v1114 = vunpack.c.l.b16 %v310
  %v1115 = vunpack.c.l.b16 %v311
  %v1116 = vunpack.c.l.b16 %v312
  %v1117 = vunpack.c.l.b16 %v313
  %v1118 = vunpack.c.l.b16 %v314
  %v1119 = vunpack.c.l.b16 %v315
  %v1120 = vunpack.c.l.b16 %v316
  %v1121 = vunpack.c.l.b16 %v317
  %v1122 = vunpack.c.l.b16 %v318
  %v1123 = vunpack.c.l.b16 %v319
  %v1124 = vunpack.c.l.b16 %v320
  %v1125 = vunpack.c.l.b16 %v321
  %v1126 = vunpack.c.l.b16 %v322
  %v1127 = vunpack.c.l.b16 %v323
  %v1128 = vunpack.c.l.b16 %v324
  %v1129 = vunpack.c.l.b16 %v325
  %v1130 = vunpack.c.l.b16 %v326
  %v1131 = vunpack.c.l.b16 %v327
  %v1132 = vunpack.c.l.b16 %v328
  %v1133 = vunpack.c.l.b16 %v329
  %v1134 = vunpack.c.l.b16 %v330
  %v1135 = vunpack.c.l.b16 %v331
  %v1136 = vunpack.c.l.b16 %v332
  %v1137 = vunpack.c.l.b16 %v333
  %v1138 = vunpack.c.l.b16 %v334
  %v1139 = vunpack.c.l.b16 %v335
  %v1140 = vunpack.c.l.b16 %v336
  %v1141 = vunpack.c.l.b16 %v337
  %v1142 = vunpack.c.l.b16 %v338
  %v1143 = vunpack.c.l.b16 %v339
  %v1144 = vunpack.c.l.b16 %v340
  %v1145 = vunpack.c.l.b16 %v341
  %v1146 = vunpack.c.l.b16 %v342
  %v1147 = vunpack.c.l.b16 %v343
  %v1148 = vunpack.c.l.b16 %v344
  %v1149 = vunpack.c.l.b16 %v345
  %v1150 = vunpack.c.l.b16 %v346
  %v1151 = vunpack.c.l.b16 %v347
  %v1152 = vunpack.c.l.b16 %v348
  %v1153 = vunpack.c.l.b16 %v349
  %v1154 = vunpack.c.l.b16 %v350
  %v1155 = vunpack.c.l.b16 %v351
  %v1156 = vunpack.c.l.b16 %v352
  %v1157 = vunpack.c.l.b16 %v353
  %v1158 = vunpack.c.l.b16 %v354
  %v1159 = vunpack.c.l.b16 %v355
  %v1160 = vunpack.c.l.b16 %v356
  %v1161 = vunpack.c.l.b16 %v357
  %v1162 = vunpack.c.l.b16 %v358
  %v1163 = vunpack.c.l.b16 %v359
  %v1164 = vunpack.c.l.b16 %v360
  %v1165 = vunpack.c.l.b16 %v361
  %v1166 = vunpack.c.l.b16 %v362
  %v1167 = vunpack.c.l.b16 %v363
  %v1168 = vunpack.c.l.b16 %v364
  %v1169 = vunpack.c.l.b16 %v365
  %v1170 = vunpack.c.l.b16 %v366
  %v1171 = vunpack.c.l.b16 %v367
  %v1172 = vunpack.c.l.b16 %v368
  %v1173 = vunpack.c.l.b16 %v369
  %v1174 = vunpack.c.l.b16 %v370
  %v1175 = vunpack.c.l.b16 %v371
  %v1176 = vunpack.c.l.b16 %v372
  %v1177 = vunpack.c.l.b16 %v373
  %v1178 = vunpack.c.l.b16 %v374
  %v1179 = vunpack.c.l.b16 %v375
  %v1180 = vunpack.c.l.b16 %v376
  %v1181 = vunpack.c.l.b16 %v377
  %v1182 = vunpack.c.l.b16 %v378
  %v1183 = vunpack.c.l.b16 %v379
  %v1184 = vunpack.c.l.b16 %v380
  %v1185 = vunpack.c.l.b16 %v381
  %v1186 = vunpack.c.l.b16 %v382
  %v1187 = vunpack.c.l.b16 %v383
  %v1188 = vunpack.c.l.b16 %v384
  %v1189 = vunpack.c.l.b16 %v385
  %v1190 = vunpack.c.l.b16 %v386
  %v1191 = vunpack.c.l.b16 %v387
  %v1192 = vunpack.c.l.b16 %v388
  %v1193 = vunpack.c.l.b16 %v389
  %v1194 = vunpack.c.l.b16 %v390
  %v1195 = vunpack.c.l.b16 %v391
  %v1196 = vunpack.c.l.b16 %v392
  %v1197 = vunpack.c.l.b16 %v393
  %v1198 = vunpack.c.l.b16 %v394
  %v1199 = vunpack.c.l.b16 %v395
  %v1200 = vunpack.c.l.b16 %v396
  %v1201 = vunpack.c.l.b16 %v397
  %v1202 = vunpack.c.l.b16 %v398
  %v1203 = vunpack.c.l.b16 %v399
  %v1204 = vunpack.c.l.b16 %v400
  %v1205 = vunpack.c.l.b16 %v401
  %v1206 = vunpack.c.l.b16 %v402
  %v1207 = vunpack.c.l.b16 %v403
  %v1208 = vunpack.c.l.b16 %v404
  %v1209 = vunpack.c.l.b16 %v405
  %v1210 = vunpack.c.l.b16 %v406
  %v1211 = vpack.c.b16 %v820, %v819
  %v1212 = vpack.c.b16 %v822, %v821
  %v1213 = vpack.c.b16 %v824, %v823
  %v1214 = vpack.c.b16 %v826, %v825
  %v1215 = vpack.c.b16 %v828, %v827
  %v1216 = vpack.c.b16 %v830, %v829
  %v1217 = vpack.c.b16 %v832, %v831
  %v1218 = vpack.c.b16 %v834, %v833
  %v1219 = vpack.c.b16 %v836, %v835
  %v1220 = vpack.c.b16 %v838, %v837
  %v1221 = vpack.c.b16 %v840, %v839
  %v1222 = vpack.c.b16 %v842, %v841
  %v1223 = vpack.c.b16 %v844, %v843
  %v1224 = vpack.c.b16 %v846, %v845
  %v1225 = vpack.c.b16 %v848, %v847
  %v1226 = vpack.c.b16 %v850, %v849
  %v1227 = vpack.c.b16 %v852, %v851
  %v1228 = vpack.c.b16 %v854, %v853
  %v1229 = vpack.c.b16 %v856, %v855
  %v1230 = vpack.c.b16 %v858, %v857
  %v1231 = vpack.c.b16 %v860, %v859
  %v1232 = vpack.c.b16 %v862, %v861
  %v1233 = vpack.c.b16 %v864, %v863
  %v1234 = vpack.c.b16 %v866, %v865
  %v1235 = vpack.c.b16 %v868, %v867
  %v1236 = vpack.c.b16 %v870, %v869
  %v1237 = vpack.c.b16 %v872, %v871
  %v1238 = vpack.c.b16 %v874, %v873
  %v1239 = vpack.c.b16 %v876, %v875
  %v1240 = vpack.c.b16 %v878, %v877
  %v1241 = vpack.c.b16 %v880, %v879
  %v1242 = vpack.c.b16 %v882, %v881
  %v1243 = vpack.c.b16 %v884, %v883
  %v1244 = vpack.c.b16 %v886, %v885
  %v1245 = vpack.c.b16 %v888, %v887
  %v1246 = vpack.c.b16 %v890, %v889
  %v1247 = vpack.c.b16 %v892, %v891
  %v1248 = vpack.c.b16 %v894, %v893
  %v1249 = vpack.c.b16 %v896, %v895
  %v1250 = vpack.c.b16 %v898, %v897
  %v1251 = vpack.c.b16 %v900, %v899
  %v1252 = vpack.c.b16 %v902, %v901
  %v1253 = vpack.c.b16 %v904, %v903
  %v1254 = vpack.c.b16 %v906, %v905
  %v1255 = vpack.c.b16 %v908, %v907
  %v1256 = vpack.c.b16 %v910, %v909
  %v1257 = vpack.c.b16 %v912, %v911
  %v1258 = vpack.c.b16 %v914, %v913
  %v1259 = vpack.c.b16 %v916, %v915
  %v1260 = vpack.c.b16 %v918, %v917
  %v1261 = vpack.c.b16 %v920, %v919
  %v1262 = vpack.c.b16 %v922, %v921
  %v1263 = vpack.c.b16 %v924, %v923
  %v1264 = vpack.c.b16 %v926, %v925
  %v1265 = vpack.c.b16 %v928, %v927
  %v1266 = vpack.c.b16 %v930, %v929
  %v1267 = vpack.c.b16 %v932, %v931
  %v1268 = vpack.c.b16 %v934, %v933
  %v1269 = vpack.c.b16 %v936, %v935
  %v1270 = vpack.c.b16 %v938, %v937
  %v1271 = vpack.c.b16 %v940, %v939
  %v1272 = vpack.c.b16 %v942, %v941
  %v1273 = vpack.c.b16 %v944, %v943
  %v1274 = vpack.c.b16 %v946, %v945
  %v1275 = vpack.c.b16 %v948, %v947
  %v1276 = vpack.c.b16 %v950, %v949
  %v1277 = vpack.c.b16 %v952, %v951
  %v1278 = vpack.c.b16 %v954, %v953
  %v1279 = vpack.c.b16 %v956, %v955
  %v1280 = vpack.c.b16 %v958, %v957
  %v1281 = vpack.c.b16 %v960, %v959
  %v1282 = vpack.c.b16 %v962, %v961
  %v1283 = vpack.c.b16 %v964, %v963
  %v1284 = vpack.c.b16 %v966, %v965
  %v1285 = vpack.c.b16 %v968, %v967
  %v1286 = vpack.c.b16 %v970, %v969
  %v1287 = vpack.c.b16 %v972, %v971
  %v1288 = vpack.c.b16 %v974, %v973
  %v1289 = vpack.c.b16 %v976, %v975
  %v1290 = vpack.c.b16 %v978, %v977
  %v1291 = vpack.c.b16 %v980, %v979
  %v1292 = vpack.c.b16 %v982, %v981
  %v1293 = vpack.c.b16 %v984, %v983
  %v1294 = vpack.c.b16 %v986, %v985
  %v1295 = vpack.c.b16 %v988, %v987
  %v1296 = vpack.c.b16 %v990, %v989
  %v1297 = vpack.c.b16 %v992, %v991
  %v1298 = vpack.c.b16 %v994, %v993
  %v1299 = vpack.c.b16 %v996, %v995
  %v1300 = vpack.c.b16 %v998, %v997
  %v1301 = vpack.c.b16 %v1000, %v999
  %v1302 = vpack.c.b16 %v1002, %v1001
  %v1303 = vpack.c.b16 %v1004, %v1003
  %v1304 = vpack.c.b16 %v1006, %v1005
  %v1305 = vpack.c.b16 %v1008, %v1007
  %v1306 = vpack.c.b16 %v1010, %v1009
  %v1307 = vpack.c.b16 %v1012, %v1011
  %v1308 = vpack.c.b16 %v1014, %v1013
  %v1309 = vpack.c.b16 %v1016, %v1015
  %v1310 = vpack.c.b16 %v1018, %v1017
  %v1311 = vpack.c.b16 %v1020, %v1019
  %v1312 = vpack.c.b16 %v1022, %v1021
  %v1313 = vpack.c.b16 %v1024, %v1023
  %v1314 = vpack.c.b16 %v1026, %v1025
  %v1315 = vpack.c.b16 %v1028, %v1027
  %v1316 = vpack.c.b16 %v1030, %v1029
  %v1317 = vpack.c.b16 %v1032, %v1031
  %v1318 = vpack.c.b16 %v1034, %v1033
  %v1319 = vpack.c.b16 %v1036, %v1035
  %v1320 = vpack.c.b16 %v1038, %v1037
  %v1321 = vpack.c.b16 %v1040, %v1039
  %v1322 = vpack.c.b16 %v1042, %v1041
  %v1323 = vpack.c.b16 %v1044, %v1043
  %v1324 = vpack.c.b16 %v1046, %v1045
  %v1325 = vpack.c.b16 %v1048, %v1047
  %v1326 = vpack.c.b16 %v1050, %v1049
  %v1327 = vpack.c.b16 %v1052, %v1051
  %v1328 = vpack.c.b16 %v1054, %v1053
  %v1329 = vpack.c.b16 %v1056, %v1055
  %v1330 = vpack.c.b16 %v1058, %v1057
  %v1331 = vpack.c.b16 %v1060, %v1059
  %v1332 = vpack.c.b16 %v1062, %v1061
  %v1333 = vpack.c.b16 %v1064, %v1063
  %v1334 = vpack.c.b16 %v1066, %v1065
  %v1335 = vpack.c.b16 %v1068, %v1067
  %v1336 = vpack.c.b16 %v1070, %v1069
  %v1337 = vpack.c.b16 %v1072, %v1071
  %v1338 = vpack.c.b16 %v1074, %v1073
  %v1339 = vpack.c.b16 %v1076, %v1075
  %v1340 = vpack.c.b16 %v1078, %v1077
  %v1341 = vpack.c.b16 %v1080, %v1079
  %v1342 = vpack.c.b16 %v1082, %v1081
  %v1343 = vpack.c.b16 %v1084, %v1083
  %v1344 = vpack.c.b16 %v1086, %v1085
  %v1345 = vpack.c.b16 %v1088, %v1087
  %v1346 = vpack.c.b16 %v1090, %v1089
  %v1347 = vpack.c.b16 %v1092, %v1091
  %v1348 = vpack.c.b16 %v1094, %v1093
  %v1349 = vpack.c.b16 %v1096, %v1095
  %v1350 = vpack.c.b16 %v1098, %v1097
  %v1351 = vpack.c.b16 %v1100, %v1099
  %v1352 = vpack.c.b16 %v1102, %v1101
  %v1353 = vpack.c.b16 %v1104, %v1103
  %v1354 = vpack.c.b16 %v1106, %v1105
  %v1355 = vpack.c.b16 %v1108, %v1107
  %v1356 = vpack.c.b16 %v1110, %v1109
  %v1357 = vpack.c.b16 %v1112, %v1111
  %v1358 = vpack.c.b16 %v1114, %v1113
  %v1359 = vpack.c.b16 %v1116, %v1115
  %v1360 = vpack.c.b16 %v1118, %v1117
  %v1361 = vpack.c.b16 %v1120, %v1119
  %v1362 = vpack.c.b16 %v1122, %v1121
  %v1363 = vpack.c.b16 %v1124, %v1123
  %v1364 = vpack.c.b16 %v1126, %v1125
  %v1365 = vpack.c.b16 %v1128, %v1127
  %v1366 = vpack.c.b16 %v1130, %v1129
  %v1367 = vpack.c.b16 %v1132, %v1131
  %v1368 = vpack.c.b16 %v1134, %v1133
  %v1369 = vpack.c.b16 %v1136, %v1135
  %v1370 = vpack.c.b16 %v1138, %v1137
  %v1371 = vpack.c.b16 %v1140, %v1139
  %v1372 = vpack.c.b16 %v1142, %v1141
  %v1373 = vpack.c.b16 %v1144, %v1143
  %v1374 = vpack.c.b16 %v1146, %v1145
  %v1375 = vpack.c.b16 %v1148, %v1147
  %v1376 = vpack.c.b16 %v1150, %v1149
  %v1377 = vpack.c.b16 %v1152, %v1151
  %v1378 = vpack.c.b16 %v1154, %v1153
  %v1379 = vpack.c.b16 %v1156, %v1155
  %v1380 = vpack.c.b16 %v1158, %v1157
  %v1381 = vpack.c.b16 %v1160, %v1159
  %v1382 = vpack.c.b16 %v1162, %v1161
  %v1383 = vpack.c.b16 %v1164, %v1163
  %v1384 = vpack.c.b16 %v1166, %v1165
  %v1385 = vpack.c.b16 %v1168, %v1167
  %v1386 = vpack.c.b16 %v1170, %v1169
  %v1387 = vpack.c.b16 %v1172, %v1171
  %v1388 = vpack.c.b16 %v1174, %v1173
  %v1389 = vpack.c.b16 %v1176, %v1175
  %v1390 = vpack.c.b16 %v1178, %v1177
  %v1391 = vpack.c.b16 %v1180, %v1179
  %v1392 = vpack.c.b16 %v1182, %v1181
  %v1393 = vpack.c.b16 %v1184, %v1183
  %v1394 = vpack.c.b16 %v1186, %v1185
  %v1395 = vpack.c.b16 %v1188, %v1187
  %v1396 = vpack.c.b16 %v1190, %v1189
  %v1397 = vpack.c.b16 %v1192, %v1191
  %v1398 = vpack.c.b16 %v1194, %v1193
  %v1399 = vpack.c.b16 %v1196, %v1195
  %v1400 = vpack.c.b16 %v1198, %v1197
  %v1401 = vpack.c.b16 %v1200, %v1199
  %v1402 = vpack.c.b16 %v1202, %v1201
  %v1403 = vpack.c.b16 %v1204, %v1203
  %v1404 = vpack.c.b16 %v1206, %v1205
  %v1405 = vpack.c.b16 %v1208, %v1207
  %v1406 = vpack.c.b16 %v1210, %v1209
  %v1415 = vunpack.c.l.b16 %v407
  %v1416 = vunpack.c.h.b16 %v407
  %v1417 = vunpack.c.l.b16 %v408
  %v1418 = vunpack.c.h.b16 %v408
  %v1419 = vunpack.c.l.b16 %v409
  %v1420 = vunpack.c.h.b16 %v409
  %v1421 = vunpack.c.l.b16 %v410
  %v1422 = vunpack.c.h.b16 %v410
  %v1423 = vunpack.c.l.b16 %v411
  %v1424 = vunpack.c.h.b16 %v411
  %v1425 = vunpack.c.l.b16 %v412
  %v1426 = vunpack.c.h.b16 %v412
  %v1427 = vunpack.c.l.b16 %v413
  %v1428 = vunpack.c.h.b16 %v413
  %v1429 = vunpack.c.l.b16 %v414
  %v1430 = vunpack.c.h.b16 %v414
  %v1431 = vpack.c.b16 %v1417, %v1415
  %v1432 = vpack.c.b16 %v1418, %v1416
  %v1433 = vpack.c.b16 %v1421, %v1419
  %v1434 = vpack.c.b16 %v1422, %v1420
  %v1435 = vpack.c.b16 %v1425, %v1423
  %v1436 = vpack.c.b16 %v1426, %v1424
  %v1437 = vpack.c.b16 %v1429, %v1427
  %v1438 = vpack.c.b16 %v1430, %v1428
  %vm1447 = vcmask 523264
  %v1449 = vsel %vm1447, %v1211, 0
  %v1452 = vsel %vm1447, %v1212, 0
  %v1455 = vsel %vm1447, %v1213, 0
  %v1458 = vsel %vm1447, %v1214, 0
  %v1461 = vsel %vm1447, %v1215, 0
  %v1464 = vsel %vm1447, %v1216, 0
  %v1467 = vsel %vm1447, %v1217, 0
  %v1470 = vsel %vm1447, %v1218, 0
  %v1473 = vsel %vm1447, %v1219, 0
  %v1476 = vsel %vm1447, %v1220, 0
  %v1479 = vsel %vm1447, %v1221, 0
  %v1482 = vsel %vm1447, %v1222, 0
  %v1485 = vsel %vm1447, %v1223, 0
  %v1488 = vsel %vm1447, %v1224, 0
  %v1491 = vsel %vm1447, %v1225, 0
  %v1494 = vsel %vm1447, %v1226, 0
  %v1497 = vsel %vm1447, %v1227, 0
  %v1500 = vsel %vm1447, %v1228, 0
  %v1503 = vsel %vm1447, %v1229, 0
  %v1506 = vsel %vm1447, %v1230, 0
  %v1509 = vsel %vm1447, %v1231, 0
  %v1512 = vsel %vm1447, %v1232, 0
  %v1515 = vsel %vm1447, %v1233, 0
  %v1518 = vsel %vm1447, %v1234, 0
  %v1521 = vsel %vm1447, %v1235, 0
  %v1524 = vsel %vm1447, %v1236, 0
  %v1527 = vsel %vm1447, %v1237, 0
  %v1530 = vsel %vm1447, %v1238, 0
  %v1533 = vsel %vm1447, %v1239, 0
  %v1536 = vsel %vm1447, %v1240, 0
  %v1539 = vsel %vm1447, %v1241, 0
  %v1542 = vsel %vm1447, %v1242, 0
  %v1545 = vsel %vm1447, %v1243, 0
  %v1548 = vsel %vm1447, %v1244, 0
  %v1551 = vsel %vm1447, %v1245, 0
  %v1554 = vsel %vm1447, %v1246, 0
  %v1557 = vsel %vm1447, %v1247, 0
  %v1560 = vsel %vm1447, %v1248, 0
  %v1563 = vsel %vm1447, %v1249, 0
  %v1566 = vsel %vm1447, %v1250, 0
  %v1569 = vsel %vm1447, %v1251, 0
  %v1572 = vsel %vm1447, %v1252, 0
  %v1575 = vsel %vm1447, %v1253, 0
  %v1578 = vsel %vm1447, %v1254, 0
  %v1581 = vsel %vm1447, %v1255, 0
  %v1584 = vsel %vm1447, %v1256, 0
  %v1587 = vsel %vm1447, %v1257, 0
  %v1590 = vsel %vm1447, %v1258, 0
  %v1593 = vsel %vm1447, %v1259, 0
  %v1596 = vsel %vm1447, %v1260, 0
  %v1599 = vsel %vm1447, %v1261, 0
  %v1602 = vsel %vm1447, %v1262, 0
  %v1605 = vsel %vm1447, %v1263, 0
  %v1608 = vsel %vm1447, %v1264, 0
  %v1611 = vsel %vm1447, %v1265, 0
  %v1614 = vsel %vm1447, %v1266, 0
  %v1617 = vsel %vm1447, %v1267, 0
  %v1620 = vsel %vm1447, %v1268, 0
  %v1623 = vsel %vm1447, %v1269, 0
  %v1626 = vsel %vm1447, %v1270, 0
  %v1629 = vsel %vm1447, %v1271, 0
  %v1632 = vsel %vm1447, %v1272, 0
  %v1635 = vsel %vm1447, %v1273, 0
  %v1638 = vsel %vm1447, %v1274, 0
  %v1641 = vsel %vm1447, %v1275, 0
  %v1644 = vsel %vm1447, %v1276, 0
  %v1647 = vsel %vm1447, %v1277, 0
  %v1650 = vsel %vm1447, %v1278, 0
  %v1653 = vsel %vm1447, %v1279, 0
  %v1656 = vsel %vm1447, %v1280, 0
  %v1659 = vsel %vm1447, %v1281, 0
  %v1662 = vsel %vm1447, %v1282, 0
  %v1665 = vsel %vm1447, %v1283, 0
  %v1668 = vsel %vm1447, %v1284, 0
  %v1671 = vsel %vm1447, %v1285, 0
  %v1674 = vsel %vm1447, %v1286, 0
  %v1677 = vsel %vm1447, %v1287, 0
  %v1680 = vsel %vm1447, %v1288, 0
  %v1683 = vsel %vm1447, %v1289, 0
  %v1686 = vsel %vm1447, %v1290, 0
  %v1689 = vsel %vm1447, %v1291, 0
  %v1692 = vsel %vm1447, %v1292, 0
  %v1695 = vsel %vm1447, %v1293, 0
  %v1698 = vsel %vm1447, %v1294, 0
  %v1701 = vsel %vm1447, %v1295, 0
  %v1704 = vsel %vm1447, %v1296, 0
  %v1707 = vsel %vm1447, %v1297, 0
  %v1710 = vsel %vm1447, %v1298, 0
  %v1713 = vsel %vm1447, %v1299, 0
  %v1716 = vsel %vm1447, %v1300, 0
  %v1719 = vsel %vm1447, %v1301, 0
  %v1722 = vsel %vm1447, %v1302, 0
  %v1725 = vsel %vm1447, %v1303, 0
  %v1728 = vsel %vm1447, %v1304, 0
  %v1731 = vsel %vm1447, %v1305, 0
  %v1734 = vsel %vm1447, %v1306, 0
  %v1737 = vsel %vm1447, %v1307, 0
  %v1740 = vsel %vm1447, %v1308, 0
  %v1743 = vsel %vm1447, %v1309, 0
  %v1746 = vsel %vm1447, %v1310, 0
  %v1749 = vsel %vm1447, %v1311, 0
  %v1752 = vsel %vm1447, %v1312, 0
  %v1755 = vsel %vm1447, %v1313, 0
  %v1758 = vsel %vm1447, %v1314, 0
  %v1761 = vsel %vm1447, %v1315, 0
  %v1764 = vsel %vm1447, %v1316, 0
  %v1767 = vsel %vm1447, %v1317, 0
  %v1770 = vsel %vm1447, %v1318, 0
  %v1773 = vsel %vm1447, %v1319, 0
  %v1776 = vsel %vm1447, %v1320, 0
  %v1779 = vsel %vm1447, %v1321, 0
  %v1782 = vsel %vm1447, %v1322, 0
  %v1785 = vsel %vm1447, %v1323, 0
  %v1788 = vsel %vm1447, %v1324, 0
  %v1791 = vsel %vm1447, %v1325, 0
  %v1794 = vsel %vm1447, %v1326, 0
  %v1797 = vsel %vm1447, %v1327, 0
  %v1800 = vsel %vm1447, %v1328, 0
  %v1803 = vsel %vm1447, %v1329, 0
  %v1806 = vsel %vm1447, %v1330, 0
  %v1809 = vsel %vm1447, %v1331, 0
  %v1812 = vsel %vm1447, %v1332, 0
  %v1815 = vsel %vm1447, %v1333, 0
  %v1818 = vsel %vm1447, %v1334, 0
  %v1821 = vsel %vm1447, %v1335, 0
  %v1824 = vsel %vm1447, %v1336, 0
  %v1827 = vsel %vm1447, %v1337, 0
  %v1830 = vsel %vm1447, %v1338, 0
  %v1833 = vsel %vm1447, %v1339, 0
  %v1836 = vsel %vm1447, %v1340, 0
  %v1839 = vsel %vm1447, %v1341, 0
  %v1842 = vsel %vm1447, %v1342, 0
  %v1845 = vsel %vm1447, %v1343, 0
  %v1848 = vsel %vm1447, %v1344, 0
  %v1851 = vsel %vm1447, %v1345, 0
  %v1854 = vsel %vm1447, %v1346, 0
  %v1857 = vsel %vm1447, %v1347, 0
  %v1860 = vsel %vm1447, %v1348, 0
  %v1863 = vsel %vm1447, %v1349, 0
  %v1866 = vsel %vm1447, %v1350, 0
  %v1869 = vsel %vm1447, %v1351, 0
  %v1872 = vsel %vm1447, %v1352, 0
  %v1875 = vsel %vm1447, %v1353, 0
  %v1878 = vsel %vm1447, %v1354, 0
  %v1881 = vsel %vm1447, %v1355, 0
  %v1884 = vsel %vm1447, %v1356, 0
  %v1887 = vsel %vm1447, %v1357, 0
  %v1890 = vsel %vm1447, %v1358, 0
  %v1893 = vsel %vm1447, %v1359, 0
  %v1896 = vsel %vm1447, %v1360, 0
  %v1899 = vsel %vm1447, %v1361, 0
  %v1902 = vsel %vm1447, %v1362, 0
  %v1905 = vsel %vm1447, %v1363, 0
  %v1908 = vsel %vm1447, %v1364, 0
  %v1911 = vsel %vm1447, %v1365, 0
  %v1914 = vsel %vm1447, %v1366, 0
  %v1917 = vsel %vm1447, %v1367, 0
  %v1920 = vsel %vm1447, %v1368, 0
  %v1923 = vsel %vm1447, %v1369, 0
  %v1926 = vsel %vm1447, %v1370, 0
  %v1929 = vsel %vm1447, %v1371, 0
  %v1932 = vsel %vm1447, %v1372, 0
  %v1935 = vsel %vm1447, %v1373, 0
  %v1938 = vsel %vm1447, %v1374, 0
  %v1941 = vsel %vm1447, %v1375, 0
  %v1944 = vsel %vm1447, %v1376, 0
  %v1947 = vsel %vm1447, %v1377, 0
  %v1950 = vsel %vm1447, %v1378, 0
  %v1953 = vsel %vm1447, %v1379, 0
  %v1956 = vsel %vm1447, %v1380, 0
  %v1959 = vsel %vm1447, %v1381, 0
  %v1962 = vsel %vm1447, %v1382, 0
  %v1965 = vsel %vm1447, %v1383, 0
  %v1968 = vsel %vm1447, %v1384, 0
  %v1971 = vsel %vm1447, %v1385, 0
  %v1974 = vsel %vm1447, %v1386, 0
  %v1977 = vsel %vm1447, %v1387, 0
  %v1980 = vsel %vm1447, %v1388, 0
  %v1983 = vsel %vm1447, %v1389, 0
  %v1986 = vsel %vm1447, %v1390, 0
  %v1989 = vsel %vm1447, %v1391, 0
  %v1992 = vsel %vm1447, %v1392, 0
  %v1995 = vsel %vm1447, %v1393, 0
  %v1998 = vsel %vm1447, %v1394, 0
  %v2001 = vsel %vm1447, %v1395, 0
  %v2004 = vsel %vm1447, %v1396, 0
  %v2007 = vsel %vm1447, %v1397, 0
  %v2010 = vsel %vm1447, %v1398, 0
  %v2013 = vsel %vm1447, %v1399, 0
  %v2016 = vsel %vm1447, %v1400, 0
  %v2019 = vsel %vm1447, %v1401, 0
  %v2022 = vsel %vm1447, %v1402, 0
  %v2025 = vsel %vm1447, %v1403, 0
  %v2028 = vsel %vm1447, %v1404, 0
  %v2031 = vsel %vm1447, %v1405, 0
  %v2034 = vsel %vm1447, %v1406, 0
  %2036 = vmatprep.subr.bf16.mxu0 0
  %2037 = vmatpush1.bf16.msra.mxu0 0
  %2038 = vmatprep.subr.bf16.mxu0 0
  %2039 = vmatpush1.bf16.msra.mxu0 0
  %2040 = vmatprep.subr.bf16.mxu0 0
  %2041 = vmatpush1.bf16.msra.mxu0 0
  %2042 = vmatprep.subr.bf16.mxu0 0
  %2043 = vmatpush1.bf16.msra.mxu0 0
  %2044 = vmatprep.subr.bf16.mxu0 %v1438
  %2045 = vmatpush1.bf16.msra.mxu0 %v1437
  %2046 = vmatprep.subr.bf16.mxu0 %v1436
  %2047 = vmatpush1.bf16.msra.mxu0 %v1435
  %2048 = vmatprep.subr.bf16.mxu0 %v1434
  %2049 = vmatpush1.bf16.msra.mxu0 %v1433
  %2050 = vmatprep.subr.bf16.mxu0 %v1432
  %2051 = vmatpush1.bf16.msra.mxu0 %v1431
  %2052 = vmatprep.subr.bf16.mxu0 0
  %2053 = vmatpush2.bf16.msra.mxu0 0
  %2054 = vmatprep.subr.bf16.mxu0 0
  %2055 = vmatpush2.bf16.msra.mxu0 0
  %2056 = vmatprep.subr.bf16.mxu0 0
  %2057 = vmatpush2.bf16.msra.mxu0 0
  %2058 = vmatprep.subr.bf16.mxu0 0
  %2059 = vmatpush2.bf16.msra.mxu0 0
  %2060 = vmatprep.subr.bf16.mxu0 0
  %2061 = vmatpush2.bf16.msra.mxu0 0
  %2062 = vmatprep.subr.bf16.mxu0 0
  %2063 = vmatpush2.bf16.msra.mxu0 0
  %2064 = vmatprep.subr.bf16.mxu0 0
  %2065 = vmatpush2.bf16.msra.mxu0 0
  %2066 = vmatprep.subr.bf16.mxu0 0
  %2067 = vmatpush2.bf16.msra.mxu0 0
  %2068 = vmatprep.mubr.bf16.mxu0 0
  %2069 = vmatmul.mubr.bf16.gmra.mxu0 %v1449
  %v2070 = vpop.f32.mrf.mxu0
  %v2071 = vadd.f32 %v420, %v2070
  %v2072 = vpop.f32.mrf.mxu0
  %v2073 = vadd.f32 %v424, %v2072
  %v2074 = vpop.f32.mrf.mxu0
  %v2075 = vadd.f32 %v420, %v2074
  %v2076 = vpop.f32.mrf.mxu0
  %v2077 = vadd.f32 %v424, %v2076
  %2078 = vmatprep.mubr.bf16.mxu0 0
  %2079 = vmatmul.mubr.bf16.gmra.mxu0 %v1452
  %v2080 = vpop.f32.mrf.mxu0
  %v2081 = vadd.f32 %v420, %v2080
  %v2082 = vpop.f32.mrf.mxu0
  %v2083 = vadd.f32 %v424, %v2082
  %v2084 = vpop.f32.mrf.mxu0
  %v2085 = vadd.f32 %v420, %v2084
  %v2086 = vpop.f32.mrf.mxu0
  %v2087 = vadd.f32 %v424, %v2086
  %2088 = vmatprep.mubr.bf16.mxu0 0
  %2089 = vmatmul.mubr.bf16.gmra.mxu0 %v1455
  %v2090 = vpop.f32.mrf.mxu0
  %v2091 = vadd.f32 %v420, %v2090
  %v2092 = vpop.f32.mrf.mxu0
  %v2093 = vadd.f32 %v424, %v2092
  %v2094 = vpop.f32.mrf.mxu0
  %v2095 = vadd.f32 %v420, %v2094
  %v2096 = vpop.f32.mrf.mxu0
  %v2097 = vadd.f32 %v424, %v2096
  %2098 = vmatprep.mubr.bf16.mxu0 0
  %2099 = vmatmul.mubr.bf16.gmra.mxu0 %v1458
  %v2100 = vpop.f32.mrf.mxu0
  %v2101 = vadd.f32 %v420, %v2100
  %v2102 = vpop.f32.mrf.mxu0
  %v2103 = vadd.f32 %v424, %v2102
  %v2104 = vpop.f32.mrf.mxu0
  %v2105 = vadd.f32 %v420, %v2104
  %v2106 = vpop.f32.mrf.mxu0
  %v2107 = vadd.f32 %v424, %v2106
  %2108 = vmatprep.mubr.bf16.mxu0 0
  %2109 = vmatmul.mubr.bf16.gmra.mxu0 %v1461
  %v2110 = vpop.f32.mrf.mxu0
  %v2111 = vadd.f32 %v420, %v2110
  %v2112 = vpop.f32.mrf.mxu0
  %v2113 = vadd.f32 %v424, %v2112
  %v2114 = vpop.f32.mrf.mxu0
  %v2115 = vadd.f32 %v420, %v2114
  %v2116 = vpop.f32.mrf.mxu0
  %v2117 = vadd.f32 %v424, %v2116
  %2118 = vmatprep.mubr.bf16.mxu0 0
  %2119 = vmatmul.mubr.bf16.gmra.mxu0 %v1464
  %v2120 = vpop.f32.mrf.mxu0
  %v2121 = vadd.f32 %v420, %v2120
  %v2122 = vpop.f32.mrf.mxu0
  %v2123 = vadd.f32 %v424, %v2122
  %v2124 = vpop.f32.mrf.mxu0
  %v2125 = vadd.f32 %v420, %v2124
  %v2126 = vpop.f32.mrf.mxu0
  %v2127 = vadd.f32 %v424, %v2126
  %2128 = vmatprep.mubr.bf16.mxu0 0
  %2129 = vmatmul.mubr.bf16.gmra.mxu0 %v1467
  %v2130 = vpop.f32.mrf.mxu0
  %v2131 = vadd.f32 %v420, %v2130
  %v2132 = vpop.f32.mrf.mxu0
  %v2133 = vadd.f32 %v424, %v2132
  %v2134 = vpop.f32.mrf.mxu0
  %v2135 = vadd.f32 %v420, %v2134
  %v2136 = vpop.f32.mrf.mxu0
  %v2137 = vadd.f32 %v424, %v2136
  %2138 = vmatprep.mubr.bf16.mxu0 0
  %2139 = vmatmul.mubr.bf16.gmra.mxu0 %v1470
  %v2140 = vpop.f32.mrf.mxu0
  %v2141 = vadd.f32 %v420, %v2140
  %v2142 = vpop.f32.mrf.mxu0
  %v2143 = vadd.f32 %v424, %v2142
  %v2144 = vpop.f32.mrf.mxu0
  %v2145 = vadd.f32 %v420, %v2144
  %v2146 = vpop.f32.mrf.mxu0
  %v2147 = vadd.f32 %v424, %v2146
  %2148 = vmatprep.mubr.bf16.mxu0 0
  %2149 = vmatmul.mubr.bf16.gmra.mxu0 %v1473
  %v2150 = vpop.f32.mrf.mxu0
  %v2151 = vadd.f32 %v420, %v2150
  %v2152 = vpop.f32.mrf.mxu0
  %v2153 = vadd.f32 %v424, %v2152
  %v2154 = vpop.f32.mrf.mxu0
  %v2155 = vadd.f32 %v420, %v2154
  %v2156 = vpop.f32.mrf.mxu0
  %v2157 = vadd.f32 %v424, %v2156
  %2158 = vmatprep.mubr.bf16.mxu0 0
  %2159 = vmatmul.mubr.bf16.gmra.mxu0 %v1476
  %v2160 = vpop.f32.mrf.mxu0
  %v2161 = vadd.f32 %v420, %v2160
  %v2162 = vpop.f32.mrf.mxu0
  %v2163 = vadd.f32 %v424, %v2162
  %v2164 = vpop.f32.mrf.mxu0
  %v2165 = vadd.f32 %v420, %v2164
  %v2166 = vpop.f32.mrf.mxu0
  %v2167 = vadd.f32 %v424, %v2166
  %2168 = vmatprep.mubr.bf16.mxu0 0
  %2169 = vmatmul.mubr.bf16.gmra.mxu0 %v1479
  %v2170 = vpop.f32.mrf.mxu0
  %v2171 = vadd.f32 %v420, %v2170
  %v2172 = vpop.f32.mrf.mxu0
  %v2173 = vadd.f32 %v424, %v2172
  %v2174 = vpop.f32.mrf.mxu0
  %v2175 = vadd.f32 %v420, %v2174
  %v2176 = vpop.f32.mrf.mxu0
  %v2177 = vadd.f32 %v424, %v2176
  %2178 = vmatprep.mubr.bf16.mxu0 0
  %2179 = vmatmul.mubr.bf16.gmra.mxu0 %v1482
  %v2180 = vpop.f32.mrf.mxu0
  %v2181 = vadd.f32 %v420, %v2180
  %v2182 = vpop.f32.mrf.mxu0
  %v2183 = vadd.f32 %v424, %v2182
  %v2184 = vpop.f32.mrf.mxu0
  %v2185 = vadd.f32 %v420, %v2184
  %v2186 = vpop.f32.mrf.mxu0
  %v2187 = vadd.f32 %v424, %v2186
  %2188 = vmatprep.mubr.bf16.mxu0 0
  %2189 = vmatmul.mubr.bf16.gmra.mxu0 %v1485
  %v2190 = vpop.f32.mrf.mxu0
  %v2191 = vadd.f32 %v420, %v2190
  %v2192 = vpop.f32.mrf.mxu0
  %v2193 = vadd.f32 %v424, %v2192
  %v2194 = vpop.f32.mrf.mxu0
  %v2195 = vadd.f32 %v420, %v2194
  %v2196 = vpop.f32.mrf.mxu0
  %v2197 = vadd.f32 %v424, %v2196
  %2198 = vmatprep.mubr.bf16.mxu0 0
  %2199 = vmatmul.mubr.bf16.gmra.mxu0 %v1488
  %v2200 = vpop.f32.mrf.mxu0
  %v2201 = vadd.f32 %v420, %v2200
  %v2202 = vpop.f32.mrf.mxu0
  %v2203 = vadd.f32 %v424, %v2202
  %v2204 = vpop.f32.mrf.mxu0
  %v2205 = vadd.f32 %v420, %v2204
  %v2206 = vpop.f32.mrf.mxu0
  %v2207 = vadd.f32 %v424, %v2206
  %2208 = vmatprep.mubr.bf16.mxu0 0
  %2209 = vmatmul.mubr.bf16.gmra.mxu0 %v1491
  %v2210 = vpop.f32.mrf.mxu0
  %v2211 = vadd.f32 %v420, %v2210
  %v2212 = vpop.f32.mrf.mxu0
  %v2213 = vadd.f32 %v424, %v2212
  %v2214 = vpop.f32.mrf.mxu0
  %v2215 = vadd.f32 %v420, %v2214
  %v2216 = vpop.f32.mrf.mxu0
  %v2217 = vadd.f32 %v424, %v2216
  %2218 = vmatprep.mubr.bf16.mxu0 0
  %2219 = vmatmul.mubr.bf16.gmra.mxu0 %v1494
  %v2220 = vpop.f32.mrf.mxu0
  %v2221 = vadd.f32 %v420, %v2220
  %v2222 = vpop.f32.mrf.mxu0
  %v2223 = vadd.f32 %v424, %v2222
  %v2224 = vpop.f32.mrf.mxu0
  %v2225 = vadd.f32 %v420, %v2224
  %v2226 = vpop.f32.mrf.mxu0
  %v2227 = vadd.f32 %v424, %v2226
  %2228 = vmatprep.mubr.bf16.mxu0 0
  %2229 = vmatmul.mubr.bf16.gmra.mxu0 %v1497
  %v2230 = vpop.f32.mrf.mxu0
  %v2231 = vadd.f32 %v420, %v2230
  %v2232 = vpop.f32.mrf.mxu0
  %v2233 = vadd.f32 %v424, %v2232
  %v2234 = vpop.f32.mrf.mxu0
  %v2235 = vadd.f32 %v420, %v2234
  %v2236 = vpop.f32.mrf.mxu0
  %v2237 = vadd.f32 %v424, %v2236
  %2238 = vmatprep.mubr.bf16.mxu0 0
  %2239 = vmatmul.mubr.bf16.gmra.mxu0 %v1500
  %v2240 = vpop.f32.mrf.mxu0
  %v2241 = vadd.f32 %v420, %v2240
  %v2242 = vpop.f32.mrf.mxu0
  %v2243 = vadd.f32 %v424, %v2242
  %v2244 = vpop.f32.mrf.mxu0
  %v2245 = vadd.f32 %v420, %v2244
  %v2246 = vpop.f32.mrf.mxu0
  %v2247 = vadd.f32 %v424, %v2246
  %2248 = vmatprep.mubr.bf16.mxu0 0
  %2249 = vmatmul.mubr.bf16.gmra.mxu0 %v1503
  %v2250 = vpop.f32.mrf.mxu0
  %v2251 = vadd.f32 %v420, %v2250
  %v2252 = vpop.f32.mrf.mxu0
  %v2253 = vadd.f32 %v424, %v2252
  %v2254 = vpop.f32.mrf.mxu0
  %v2255 = vadd.f32 %v420, %v2254
  %v2256 = vpop.f32.mrf.mxu0
  %v2257 = vadd.f32 %v424, %v2256
  %2258 = vmatprep.mubr.bf16.mxu0 0
  %2259 = vmatmul.mubr.bf16.gmra.mxu0 %v1506
  %v2260 = vpop.f32.mrf.mxu0
  %v2261 = vadd.f32 %v420, %v2260
  %v2262 = vpop.f32.mrf.mxu0
  %v2263 = vadd.f32 %v424, %v2262
  %v2264 = vpop.f32.mrf.mxu0
  %v2265 = vadd.f32 %v420, %v2264
  %v2266 = vpop.f32.mrf.mxu0
  %v2267 = vadd.f32 %v424, %v2266
  %2268 = vmatprep.mubr.bf16.mxu0 0
  %2269 = vmatmul.mubr.bf16.gmra.mxu0 %v1509
  %v2270 = vpop.f32.mrf.mxu0
  %v2271 = vadd.f32 %v420, %v2270
  %v2272 = vpop.f32.mrf.mxu0
  %v2273 = vadd.f32 %v424, %v2272
  %v2274 = vpop.f32.mrf.mxu0
  %v2275 = vadd.f32 %v420, %v2274
  %v2276 = vpop.f32.mrf.mxu0
  %v2277 = vadd.f32 %v424, %v2276
  %2278 = vmatprep.mubr.bf16.mxu0 0
  %2279 = vmatmul.mubr.bf16.gmra.mxu0 %v1512
  %v2280 = vpop.f32.mrf.mxu0
  %v2281 = vadd.f32 %v420, %v2280
  %v2282 = vpop.f32.mrf.mxu0
  %v2283 = vadd.f32 %v424, %v2282
  %v2284 = vpop.f32.mrf.mxu0
  %v2285 = vadd.f32 %v420, %v2284
  %v2286 = vpop.f32.mrf.mxu0
  %v2287 = vadd.f32 %v424, %v2286
  %2288 = vmatprep.mubr.bf16.mxu0 0
  %2289 = vmatmul.mubr.bf16.gmra.mxu0 %v1515
  %v2290 = vpop.f32.mrf.mxu0
  %v2291 = vadd.f32 %v420, %v2290
  %v2292 = vpop.f32.mrf.mxu0
  %v2293 = vadd.f32 %v424, %v2292
  %v2294 = vpop.f32.mrf.mxu0
  %v2295 = vadd.f32 %v420, %v2294
  %v2296 = vpop.f32.mrf.mxu0
  %v2297 = vadd.f32 %v424, %v2296
  %2298 = vmatprep.mubr.bf16.mxu0 0
  %2299 = vmatmul.mubr.bf16.gmra.mxu0 %v1518
  %v2300 = vpop.f32.mrf.mxu0
  %v2301 = vadd.f32 %v420, %v2300
  %v2302 = vpop.f32.mrf.mxu0
  %v2303 = vadd.f32 %v424, %v2302
  %v2304 = vpop.f32.mrf.mxu0
  %v2305 = vadd.f32 %v420, %v2304
  %v2306 = vpop.f32.mrf.mxu0
  %v2307 = vadd.f32 %v424, %v2306
  %2308 = vmatprep.mubr.bf16.mxu0 0
  %2309 = vmatmul.mubr.bf16.gmra.mxu0 %v1521
  %v2310 = vpop.f32.mrf.mxu0
  %v2311 = vadd.f32 %v420, %v2310
  %v2312 = vpop.f32.mrf.mxu0
  %v2313 = vadd.f32 %v424, %v2312
  %v2314 = vpop.f32.mrf.mxu0
  %v2315 = vadd.f32 %v420, %v2314
  %v2316 = vpop.f32.mrf.mxu0
  %v2317 = vadd.f32 %v424, %v2316
  %2318 = vmatprep.mubr.bf16.mxu0 0
  %2319 = vmatmul.mubr.bf16.gmra.mxu0 %v1524
  %v2320 = vpop.f32.mrf.mxu0
  %v2321 = vadd.f32 %v420, %v2320
  %v2322 = vpop.f32.mrf.mxu0
  %v2323 = vadd.f32 %v424, %v2322
  %v2324 = vpop.f32.mrf.mxu0
  %v2325 = vadd.f32 %v420, %v2324
  %v2326 = vpop.f32.mrf.mxu0
  %v2327 = vadd.f32 %v424, %v2326
  %2328 = vmatprep.mubr.bf16.mxu0 0
  %2329 = vmatmul.mubr.bf16.gmra.mxu0 %v1527
  %v2330 = vpop.f32.mrf.mxu0
  %v2331 = vadd.f32 %v420, %v2330
  %v2332 = vpop.f32.mrf.mxu0
  %v2333 = vadd.f32 %v424, %v2332
  %v2334 = vpop.f32.mrf.mxu0
  %v2335 = vadd.f32 %v420, %v2334
  %v2336 = vpop.f32.mrf.mxu0
  %v2337 = vadd.f32 %v424, %v2336
  %2338 = vmatprep.mubr.bf16.mxu0 0
  %2339 = vmatmul.mubr.bf16.gmra.mxu0 %v1530
  %v2340 = vpop.f32.mrf.mxu0
  %v2341 = vadd.f32 %v420, %v2340
  %v2342 = vpop.f32.mrf.mxu0
  %v2343 = vadd.f32 %v424, %v2342
  %v2344 = vpop.f32.mrf.mxu0
  %v2345 = vadd.f32 %v420, %v2344
  %v2346 = vpop.f32.mrf.mxu0
  %v2347 = vadd.f32 %v424, %v2346
  %2348 = vmatprep.mubr.bf16.mxu0 0
  %2349 = vmatmul.mubr.bf16.gmra.mxu0 %v1533
  %v2350 = vpop.f32.mrf.mxu0
  %v2351 = vadd.f32 %v420, %v2350
  %v2352 = vpop.f32.mrf.mxu0
  %v2353 = vadd.f32 %v424, %v2352
  %v2354 = vpop.f32.mrf.mxu0
  %v2355 = vadd.f32 %v420, %v2354
  %v2356 = vpop.f32.mrf.mxu0
  %v2357 = vadd.f32 %v424, %v2356
  %2358 = vmatprep.mubr.bf16.mxu0 0
  %2359 = vmatmul.mubr.bf16.gmra.mxu0 %v1536
  %v2360 = vpop.f32.mrf.mxu0
  %v2361 = vadd.f32 %v420, %v2360
  %v2362 = vpop.f32.mrf.mxu0
  %v2363 = vadd.f32 %v424, %v2362
  %v2364 = vpop.f32.mrf.mxu0
  %v2365 = vadd.f32 %v420, %v2364
  %v2366 = vpop.f32.mrf.mxu0
  %v2367 = vadd.f32 %v424, %v2366
  %2368 = vmatprep.mubr.bf16.mxu0 0
  %2369 = vmatmul.mubr.bf16.gmra.mxu0 %v1539
  %v2370 = vpop.f32.mrf.mxu0
  %v2371 = vadd.f32 %v420, %v2370
  %v2372 = vpop.f32.mrf.mxu0
  %v2373 = vadd.f32 %v424, %v2372
  %v2374 = vpop.f32.mrf.mxu0
  %v2375 = vadd.f32 %v420, %v2374
  %v2376 = vpop.f32.mrf.mxu0
  %v2377 = vadd.f32 %v424, %v2376
  %2378 = vmatprep.mubr.bf16.mxu0 0
  %2379 = vmatmul.mubr.bf16.gmra.mxu0 %v1542
  %v2380 = vpop.f32.mrf.mxu0
  %v2381 = vadd.f32 %v420, %v2380
  %v2382 = vpop.f32.mrf.mxu0
  %v2383 = vadd.f32 %v424, %v2382
  %v2384 = vpop.f32.mrf.mxu0
  %v2385 = vadd.f32 %v420, %v2384
  %v2386 = vpop.f32.mrf.mxu0
  %v2387 = vadd.f32 %v424, %v2386
  %2388 = vmatprep.mubr.bf16.mxu0 0
  %2389 = vmatmul.mubr.bf16.gmra.mxu0 %v1545
  %v2390 = vpop.f32.mrf.mxu0
  %v2391 = vadd.f32 %v420, %v2390
  %v2392 = vpop.f32.mrf.mxu0
  %v2393 = vadd.f32 %v424, %v2392
  %v2394 = vpop.f32.mrf.mxu0
  %v2395 = vadd.f32 %v420, %v2394
  %v2396 = vpop.f32.mrf.mxu0
  %v2397 = vadd.f32 %v424, %v2396
  %2398 = vmatprep.mubr.bf16.mxu0 0
  %2399 = vmatmul.mubr.bf16.gmra.mxu0 %v1548
  %v2400 = vpop.f32.mrf.mxu0
  %v2401 = vadd.f32 %v420, %v2400
  %v2402 = vpop.f32.mrf.mxu0
  %v2403 = vadd.f32 %v424, %v2402
  %v2404 = vpop.f32.mrf.mxu0
  %v2405 = vadd.f32 %v420, %v2404
  %v2406 = vpop.f32.mrf.mxu0
  %v2407 = vadd.f32 %v424, %v2406
  %2408 = vmatprep.mubr.bf16.mxu0 0
  %2409 = vmatmul.mubr.bf16.gmra.mxu0 %v1551
  %v2410 = vpop.f32.mrf.mxu0
  %v2411 = vadd.f32 %v420, %v2410
  %v2412 = vpop.f32.mrf.mxu0
  %v2413 = vadd.f32 %v424, %v2412
  %v2414 = vpop.f32.mrf.mxu0
  %v2415 = vadd.f32 %v420, %v2414
  %v2416 = vpop.f32.mrf.mxu0
  %v2417 = vadd.f32 %v424, %v2416
  %2418 = vmatprep.mubr.bf16.mxu0 0
  %2419 = vmatmul.mubr.bf16.gmra.mxu0 %v1554
  %v2420 = vpop.f32.mrf.mxu0
  %v2421 = vadd.f32 %v420, %v2420
  %v2422 = vpop.f32.mrf.mxu0
  %v2423 = vadd.f32 %v424, %v2422
  %v2424 = vpop.f32.mrf.mxu0
  %v2425 = vadd.f32 %v420, %v2424
  %v2426 = vpop.f32.mrf.mxu0
  %v2427 = vadd.f32 %v424, %v2426
  %2428 = vmatprep.mubr.bf16.mxu0 0
  %2429 = vmatmul.mubr.bf16.gmra.mxu0 %v1557
  %v2430 = vpop.f32.mrf.mxu0
  %v2431 = vadd.f32 %v420, %v2430
  %v2432 = vpop.f32.mrf.mxu0
  %v2433 = vadd.f32 %v424, %v2432
  %v2434 = vpop.f32.mrf.mxu0
  %v2435 = vadd.f32 %v420, %v2434
  %v2436 = vpop.f32.mrf.mxu0
  %v2437 = vadd.f32 %v424, %v2436
  %2438 = vmatprep.mubr.bf16.mxu0 0
  %2439 = vmatmul.mubr.bf16.gmra.mxu0 %v1560
  %v2440 = vpop.f32.mrf.mxu0
  %v2441 = vadd.f32 %v420, %v2440
  %v2442 = vpop.f32.mrf.mxu0
  %v2443 = vadd.f32 %v424, %v2442
  %v2444 = vpop.f32.mrf.mxu0
  %v2445 = vadd.f32 %v420, %v2444
  %v2446 = vpop.f32.mrf.mxu0
  %v2447 = vadd.f32 %v424, %v2446
  %2448 = vmatprep.mubr.bf16.mxu0 0
  %2449 = vmatmul.mubr.bf16.gmra.mxu0 %v1563
  %v2450 = vpop.f32.mrf.mxu0
  %v2451 = vadd.f32 %v420, %v2450
  %v2452 = vpop.f32.mrf.mxu0
  %v2453 = vadd.f32 %v424, %v2452
  %v2454 = vpop.f32.mrf.mxu0
  %v2455 = vadd.f32 %v420, %v2454
  %v2456 = vpop.f32.mrf.mxu0
  %v2457 = vadd.f32 %v424, %v2456
  %2458 = vmatprep.mubr.bf16.mxu0 0
  %2459 = vmatmul.mubr.bf16.gmra.mxu0 %v1566
  %v2460 = vpop.f32.mrf.mxu0
  %v2461 = vadd.f32 %v420, %v2460
  %v2462 = vpop.f32.mrf.mxu0
  %v2463 = vadd.f32 %v424, %v2462
  %v2464 = vpop.f32.mrf.mxu0
  %v2465 = vadd.f32 %v420, %v2464
  %v2466 = vpop.f32.mrf.mxu0
  %v2467 = vadd.f32 %v424, %v2466
  %2468 = vmatprep.mubr.bf16.mxu0 0
  %2469 = vmatmul.mubr.bf16.gmra.mxu0 %v1569
  %v2470 = vpop.f32.mrf.mxu0
  %v2471 = vadd.f32 %v420, %v2470
  %v2472 = vpop.f32.mrf.mxu0
  %v2473 = vadd.f32 %v424, %v2472
  %v2474 = vpop.f32.mrf.mxu0
  %v2475 = vadd.f32 %v420, %v2474
  %v2476 = vpop.f32.mrf.mxu0
  %v2477 = vadd.f32 %v424, %v2476
  %2478 = vmatprep.mubr.bf16.mxu0 0
  %2479 = vmatmul.mubr.bf16.gmra.mxu0 %v1572
  %v2480 = vpop.f32.mrf.mxu0
  %v2481 = vadd.f32 %v420, %v2480
  %v2482 = vpop.f32.mrf.mxu0
  %v2483 = vadd.f32 %v424, %v2482
  %v2484 = vpop.f32.mrf.mxu0
  %v2485 = vadd.f32 %v420, %v2484
  %v2486 = vpop.f32.mrf.mxu0
  %v2487 = vadd.f32 %v424, %v2486
  %2488 = vmatprep.mubr.bf16.mxu0 0
  %2489 = vmatmul.mubr.bf16.gmra.mxu0 %v1575
  %v2490 = vpop.f32.mrf.mxu0
  %v2491 = vadd.f32 %v420, %v2490
  %v2492 = vpop.f32.mrf.mxu0
  %v2493 = vadd.f32 %v424, %v2492
  %v2494 = vpop.f32.mrf.mxu0
  %v2495 = vadd.f32 %v420, %v2494
  %v2496 = vpop.f32.mrf.mxu0
  %v2497 = vadd.f32 %v424, %v2496
  %2498 = vmatprep.mubr.bf16.mxu0 0
  %2499 = vmatmul.mubr.bf16.gmra.mxu0 %v1578
  %v2500 = vpop.f32.mrf.mxu0
  %v2501 = vadd.f32 %v420, %v2500
  %v2502 = vpop.f32.mrf.mxu0
  %v2503 = vadd.f32 %v424, %v2502
  %v2504 = vpop.f32.mrf.mxu0
  %v2505 = vadd.f32 %v420, %v2504
  %v2506 = vpop.f32.mrf.mxu0
  %v2507 = vadd.f32 %v424, %v2506
  %2508 = vmatprep.mubr.bf16.mxu0 0
  %2509 = vmatmul.mubr.bf16.gmra.mxu0 %v1581
  %v2510 = vpop.f32.mrf.mxu0
  %v2511 = vadd.f32 %v420, %v2510
  %v2512 = vpop.f32.mrf.mxu0
  %v2513 = vadd.f32 %v424, %v2512
  %v2514 = vpop.f32.mrf.mxu0
  %v2515 = vadd.f32 %v420, %v2514
  %v2516 = vpop.f32.mrf.mxu0
  %v2517 = vadd.f32 %v424, %v2516
  %2518 = vmatprep.mubr.bf16.mxu0 0
  %2519 = vmatmul.mubr.bf16.gmra.mxu0 %v1584
  %v2520 = vpop.f32.mrf.mxu0
  %v2521 = vadd.f32 %v420, %v2520
  %v2522 = vpop.f32.mrf.mxu0
  %v2523 = vadd.f32 %v424, %v2522
  %v2524 = vpop.f32.mrf.mxu0
  %v2525 = vadd.f32 %v420, %v2524
  %v2526 = vpop.f32.mrf.mxu0
  %v2527 = vadd.f32 %v424, %v2526
  %2528 = vmatprep.mubr.bf16.mxu0 0
  %2529 = vmatmul.mubr.bf16.gmra.mxu0 %v1587
  %v2530 = vpop.f32.mrf.mxu0
  %v2531 = vadd.f32 %v420, %v2530
  %v2532 = vpop.f32.mrf.mxu0
  %v2533 = vadd.f32 %v424, %v2532
  %v2534 = vpop.f32.mrf.mxu0
  %v2535 = vadd.f32 %v420, %v2534
  %v2536 = vpop.f32.mrf.mxu0
  %v2537 = vadd.f32 %v424, %v2536
  %2538 = vmatprep.mubr.bf16.mxu0 0
  %2539 = vmatmul.mubr.bf16.gmra.mxu0 %v1590
  %v2540 = vpop.f32.mrf.mxu0
  %v2541 = vadd.f32 %v420, %v2540
  %v2542 = vpop.f32.mrf.mxu0
  %v2543 = vadd.f32 %v424, %v2542
  %v2544 = vpop.f32.mrf.mxu0
  %v2545 = vadd.f32 %v420, %v2544
  %v2546 = vpop.f32.mrf.mxu0
  %v2547 = vadd.f32 %v424, %v2546
  %2548 = vmatprep.mubr.bf16.mxu0 0
  %2549 = vmatmul.mubr.bf16.gmra.mxu0 %v1593
  %v2550 = vpop.f32.mrf.mxu0
  %v2551 = vadd.f32 %v420, %v2550
  %v2552 = vpop.f32.mrf.mxu0
  %v2553 = vadd.f32 %v424, %v2552
  %v2554 = vpop.f32.mrf.mxu0
  %v2555 = vadd.f32 %v420, %v2554
  %v2556 = vpop.f32.mrf.mxu0
  %v2557 = vadd.f32 %v424, %v2556
  %2558 = vmatprep.mubr.bf16.mxu0 0
  %2559 = vmatmul.mubr.bf16.gmra.mxu0 %v1596
  %v2560 = vpop.f32.mrf.mxu0
  %v2561 = vadd.f32 %v420, %v2560
  %v2562 = vpop.f32.mrf.mxu0
  %v2563 = vadd.f32 %v424, %v2562
  %v2564 = vpop.f32.mrf.mxu0
  %v2565 = vadd.f32 %v420, %v2564
  %v2566 = vpop.f32.mrf.mxu0
  %v2567 = vadd.f32 %v424, %v2566
  %2568 = vmatprep.mubr.bf16.mxu0 0
  %2569 = vmatmul.mubr.bf16.gmra.mxu0 %v1599
  %v2570 = vpop.f32.mrf.mxu0
  %v2571 = vadd.f32 %v420, %v2570
  %v2572 = vpop.f32.mrf.mxu0
  %v2573 = vadd.f32 %v424, %v2572
  %v2574 = vpop.f32.mrf.mxu0
  %v2575 = vadd.f32 %v420, %v2574
  %v2576 = vpop.f32.mrf.mxu0
  %v2577 = vadd.f32 %v424, %v2576
  %2578 = vmatprep.mubr.bf16.mxu0 0
  %2579 = vmatmul.mubr.bf16.gmra.mxu0 %v1602
  %v2580 = vpop.f32.mrf.mxu0
  %v2581 = vadd.f32 %v420, %v2580
  %v2582 = vpop.f32.mrf.mxu0
  %v2583 = vadd.f32 %v424, %v2582
  %v2584 = vpop.f32.mrf.mxu0
  %v2585 = vadd.f32 %v420, %v2584
  %v2586 = vpop.f32.mrf.mxu0
  %v2587 = vadd.f32 %v424, %v2586
  %2588 = vmatprep.mubr.bf16.mxu0 0
  %2589 = vmatmul.mubr.bf16.gmra.mxu0 %v1605
  %v2590 = vpop.f32.mrf.mxu0
  %v2591 = vadd.f32 %v420, %v2590
  %v2592 = vpop.f32.mrf.mxu0
  %v2593 = vadd.f32 %v424, %v2592
  %v2594 = vpop.f32.mrf.mxu0
  %v2595 = vadd.f32 %v420, %v2594
  %v2596 = vpop.f32.mrf.mxu0
  %v2597 = vadd.f32 %v424, %v2596
  %2598 = vmatprep.mubr.bf16.mxu0 0
  %2599 = vmatmul.mubr.bf16.gmra.mxu0 %v1608
  %v2600 = vpop.f32.mrf.mxu0
  %v2601 = vadd.f32 %v420, %v2600
  %v2602 = vpop.f32.mrf.mxu0
  %v2603 = vadd.f32 %v424, %v2602
  %v2604 = vpop.f32.mrf.mxu0
  %v2605 = vadd.f32 %v420, %v2604
  %v2606 = vpop.f32.mrf.mxu0
  %v2607 = vadd.f32 %v424, %v2606
  %2608 = vmatprep.mubr.bf16.mxu0 0
  %2609 = vmatmul.mubr.bf16.gmra.mxu0 %v1611
  %v2610 = vpop.f32.mrf.mxu0
  %v2611 = vadd.f32 %v420, %v2610
  %v2612 = vpop.f32.mrf.mxu0
  %v2613 = vadd.f32 %v424, %v2612
  %v2614 = vpop.f32.mrf.mxu0
  %v2615 = vadd.f32 %v420, %v2614
  %v2616 = vpop.f32.mrf.mxu0
  %v2617 = vadd.f32 %v424, %v2616
  %2618 = vmatprep.mubr.bf16.mxu0 0
  %2619 = vmatmul.mubr.bf16.gmra.mxu0 %v1614
  %v2620 = vpop.f32.mrf.mxu0
  %v2621 = vadd.f32 %v420, %v2620
  %v2622 = vpop.f32.mrf.mxu0
  %v2623 = vadd.f32 %v424, %v2622
  %v2624 = vpop.f32.mrf.mxu0
  %v2625 = vadd.f32 %v420, %v2624
  %v2626 = vpop.f32.mrf.mxu0
  %v2627 = vadd.f32 %v424, %v2626
  %2628 = vmatprep.mubr.bf16.mxu0 0
  %2629 = vmatmul.mubr.bf16.gmra.mxu0 %v1617
  %v2630 = vpop.f32.mrf.mxu0
  %v2631 = vadd.f32 %v420, %v2630
  %v2632 = vpop.f32.mrf.mxu0
  %v2633 = vadd.f32 %v424, %v2632
  %v2634 = vpop.f32.mrf.mxu0
  %v2635 = vadd.f32 %v420, %v2634
  %v2636 = vpop.f32.mrf.mxu0
  %v2637 = vadd.f32 %v424, %v2636
  %2638 = vmatprep.mubr.bf16.mxu0 0
  %2639 = vmatmul.mubr.bf16.gmra.mxu0 %v1620
  %v2640 = vpop.f32.mrf.mxu0
  %v2641 = vadd.f32 %v420, %v2640
  %v2642 = vpop.f32.mrf.mxu0
  %v2643 = vadd.f32 %v424, %v2642
  %v2644 = vpop.f32.mrf.mxu0
  %v2645 = vadd.f32 %v420, %v2644
  %v2646 = vpop.f32.mrf.mxu0
  %v2647 = vadd.f32 %v424, %v2646
  %2648 = vmatprep.mubr.bf16.mxu0 0
  %2649 = vmatmul.mubr.bf16.gmra.mxu0 %v1623
  %v2650 = vpop.f32.mrf.mxu0
  %v2651 = vadd.f32 %v420, %v2650
  %v2652 = vpop.f32.mrf.mxu0
  %v2653 = vadd.f32 %v424, %v2652
  %v2654 = vpop.f32.mrf.mxu0
  %v2655 = vadd.f32 %v420, %v2654
  %v2656 = vpop.f32.mrf.mxu0
  %v2657 = vadd.f32 %v424, %v2656
  %2658 = vmatprep.mubr.bf16.mxu0 0
  %2659 = vmatmul.mubr.bf16.gmra.mxu0 %v1626
  %v2660 = vpop.f32.mrf.mxu0
  %v2661 = vadd.f32 %v420, %v2660
  %v2662 = vpop.f32.mrf.mxu0
  %v2663 = vadd.f32 %v424, %v2662
  %v2664 = vpop.f32.mrf.mxu0
  %v2665 = vadd.f32 %v420, %v2664
  %v2666 = vpop.f32.mrf.mxu0
  %v2667 = vadd.f32 %v424, %v2666
  %2668 = vmatprep.mubr.bf16.mxu0 0
  %2669 = vmatmul.mubr.bf16.gmra.mxu0 %v1629
  %v2670 = vpop.f32.mrf.mxu0
  %v2671 = vadd.f32 %v420, %v2670
  %v2672 = vpop.f32.mrf.mxu0
  %v2673 = vadd.f32 %v424, %v2672
  %v2674 = vpop.f32.mrf.mxu0
  %v2675 = vadd.f32 %v420, %v2674
  %v2676 = vpop.f32.mrf.mxu0
  %v2677 = vadd.f32 %v424, %v2676
  %2678 = vmatprep.mubr.bf16.mxu0 0
  %2679 = vmatmul.mubr.bf16.gmra.mxu0 %v1632
  %v2680 = vpop.f32.mrf.mxu0
  %v2681 = vadd.f32 %v420, %v2680
  %v2682 = vpop.f32.mrf.mxu0
  %v2683 = vadd.f32 %v424, %v2682
  %v2684 = vpop.f32.mrf.mxu0
  %v2685 = vadd.f32 %v420, %v2684
  %v2686 = vpop.f32.mrf.mxu0
  %v2687 = vadd.f32 %v424, %v2686
  %2688 = vmatprep.mubr.bf16.mxu0 0
  %2689 = vmatmul.mubr.bf16.gmra.mxu0 %v1635
  %v2690 = vpop.f32.mrf.mxu0
  %v2691 = vadd.f32 %v420, %v2690
  %v2692 = vpop.f32.mrf.mxu0
  %v2693 = vadd.f32 %v424, %v2692
  %v2694 = vpop.f32.mrf.mxu0
  %v2695 = vadd.f32 %v420, %v2694
  %v2696 = vpop.f32.mrf.mxu0
  %v2697 = vadd.f32 %v424, %v2696
  %2698 = vmatprep.mubr.bf16.mxu0 0
  %2699 = vmatmul.mubr.bf16.gmra.mxu0 %v1638
  %v2700 = vpop.f32.mrf.mxu0
  %v2701 = vadd.f32 %v420, %v2700
  %v2702 = vpop.f32.mrf.mxu0
  %v2703 = vadd.f32 %v424, %v2702
  %v2704 = vpop.f32.mrf.mxu0
  %v2705 = vadd.f32 %v420, %v2704
  %v2706 = vpop.f32.mrf.mxu0
  %v2707 = vadd.f32 %v424, %v2706
  %2708 = vmatprep.mubr.bf16.mxu0 0
  %2709 = vmatmul.mubr.bf16.gmra.mxu0 %v1641
  %v2710 = vpop.f32.mrf.mxu0
  %v2711 = vadd.f32 %v420, %v2710
  %v2712 = vpop.f32.mrf.mxu0
  %v2713 = vadd.f32 %v424, %v2712
  %v2714 = vpop.f32.mrf.mxu0
  %v2715 = vadd.f32 %v420, %v2714
  %v2716 = vpop.f32.mrf.mxu0
  %v2717 = vadd.f32 %v424, %v2716
  %2718 = vmatprep.mubr.bf16.mxu0 0
  %2719 = vmatmul.mubr.bf16.gmra.mxu0 %v1644
  %v2720 = vpop.f32.mrf.mxu0
  %v2721 = vadd.f32 %v420, %v2720
  %v2722 = vpop.f32.mrf.mxu0
  %v2723 = vadd.f32 %v424, %v2722
  %v2724 = vpop.f32.mrf.mxu0
  %v2725 = vadd.f32 %v420, %v2724
  %v2726 = vpop.f32.mrf.mxu0
  %v2727 = vadd.f32 %v424, %v2726
  %2728 = vmatprep.mubr.bf16.mxu0 0
  %2729 = vmatmul.mubr.bf16.gmra.mxu0 %v1647
  %v2730 = vpop.f32.mrf.mxu0
  %v2731 = vadd.f32 %v420, %v2730
  %v2732 = vpop.f32.mrf.mxu0
  %v2733 = vadd.f32 %v424, %v2732
  %v2734 = vpop.f32.mrf.mxu0
  %v2735 = vadd.f32 %v420, %v2734
  %v2736 = vpop.f32.mrf.mxu0
  %v2737 = vadd.f32 %v424, %v2736
  %2738 = vmatprep.mubr.bf16.mxu0 0
  %2739 = vmatmul.mubr.bf16.gmra.mxu0 %v1650
  %v2740 = vpop.f32.mrf.mxu0
  %v2741 = vadd.f32 %v420, %v2740
  %v2742 = vpop.f32.mrf.mxu0
  %v2743 = vadd.f32 %v424, %v2742
  %v2744 = vpop.f32.mrf.mxu0
  %v2745 = vadd.f32 %v420, %v2744
  %v2746 = vpop.f32.mrf.mxu0
  %v2747 = vadd.f32 %v424, %v2746
  %2748 = vmatprep.mubr.bf16.mxu0 0
  %2749 = vmatmul.mubr.bf16.gmra.mxu0 %v1653
  %v2750 = vpop.f32.mrf.mxu0
  %v2751 = vadd.f32 %v420, %v2750
  %v2752 = vpop.f32.mrf.mxu0
  %v2753 = vadd.f32 %v424, %v2752
  %v2754 = vpop.f32.mrf.mxu0
  %v2755 = vadd.f32 %v420, %v2754
  %v2756 = vpop.f32.mrf.mxu0
  %v2757 = vadd.f32 %v424, %v2756
  %2758 = vmatprep.mubr.bf16.mxu0 0
  %2759 = vmatmul.mubr.bf16.gmra.mxu0 %v1656
  %v2760 = vpop.f32.mrf.mxu0
  %v2761 = vadd.f32 %v420, %v2760
  %v2762 = vpop.f32.mrf.mxu0
  %v2763 = vadd.f32 %v424, %v2762
  %v2764 = vpop.f32.mrf.mxu0
  %v2765 = vadd.f32 %v420, %v2764
  %v2766 = vpop.f32.mrf.mxu0
  %v2767 = vadd.f32 %v424, %v2766
  %2768 = vmatprep.mubr.bf16.mxu0 0
  %2769 = vmatmul.mubr.bf16.gmra.mxu0 %v1659
  %v2770 = vpop.f32.mrf.mxu0
  %v2771 = vadd.f32 %v420, %v2770
  %v2772 = vpop.f32.mrf.mxu0
  %v2773 = vadd.f32 %v424, %v2772
  %v2774 = vpop.f32.mrf.mxu0
  %v2775 = vadd.f32 %v420, %v2774
  %v2776 = vpop.f32.mrf.mxu0
  %v2777 = vadd.f32 %v424, %v2776
  %2778 = vmatprep.mubr.bf16.mxu0 0
  %2779 = vmatmul.mubr.bf16.gmra.mxu0 %v1662
  %v2780 = vpop.f32.mrf.mxu0
  %v2781 = vadd.f32 %v420, %v2780
  %v2782 = vpop.f32.mrf.mxu0
  %v2783 = vadd.f32 %v424, %v2782
  %v2784 = vpop.f32.mrf.mxu0
  %v2785 = vadd.f32 %v420, %v2784
  %v2786 = vpop.f32.mrf.mxu0
  %v2787 = vadd.f32 %v424, %v2786
  %2788 = vmatprep.mubr.bf16.mxu0 0
  %2789 = vmatmul.mubr.bf16.gmra.mxu0 %v1665
  %v2790 = vpop.f32.mrf.mxu0
  %v2791 = vadd.f32 %v420, %v2790
  %v2792 = vpop.f32.mrf.mxu0
  %v2793 = vadd.f32 %v424, %v2792
  %v2794 = vpop.f32.mrf.mxu0
  %v2795 = vadd.f32 %v420, %v2794
  %v2796 = vpop.f32.mrf.mxu0
  %v2797 = vadd.f32 %v424, %v2796
  %2798 = vmatprep.mubr.bf16.mxu0 0
  %2799 = vmatmul.mubr.bf16.gmra.mxu0 %v1668
  %v2800 = vpop.f32.mrf.mxu0
  %v2801 = vadd.f32 %v420, %v2800
  %v2802 = vpop.f32.mrf.mxu0
  %v2803 = vadd.f32 %v424, %v2802
  %v2804 = vpop.f32.mrf.mxu0
  %v2805 = vadd.f32 %v420, %v2804
  %v2806 = vpop.f32.mrf.mxu0
  %v2807 = vadd.f32 %v424, %v2806
  %2808 = vmatprep.mubr.bf16.mxu0 0
  %2809 = vmatmul.mubr.bf16.gmra.mxu0 %v1671
  %v2810 = vpop.f32.mrf.mxu0
  %v2811 = vadd.f32 %v420, %v2810
  %v2812 = vpop.f32.mrf.mxu0
  %v2813 = vadd.f32 %v424, %v2812
  %v2814 = vpop.f32.mrf.mxu0
  %v2815 = vadd.f32 %v420, %v2814
  %v2816 = vpop.f32.mrf.mxu0
  %v2817 = vadd.f32 %v424, %v2816
  %2818 = vmatprep.mubr.bf16.mxu0 0
  %2819 = vmatmul.mubr.bf16.gmra.mxu0 %v1674
  %v2820 = vpop.f32.mrf.mxu0
  %v2821 = vadd.f32 %v420, %v2820
  %v2822 = vpop.f32.mrf.mxu0
  %v2823 = vadd.f32 %v424, %v2822
  %v2824 = vpop.f32.mrf.mxu0
  %v2825 = vadd.f32 %v420, %v2824
  %v2826 = vpop.f32.mrf.mxu0
  %v2827 = vadd.f32 %v424, %v2826
  %2828 = vmatprep.mubr.bf16.mxu0 0
  %2829 = vmatmul.mubr.bf16.gmra.mxu0 %v1677
  %v2830 = vpop.f32.mrf.mxu0
  %v2831 = vadd.f32 %v420, %v2830
  %v2832 = vpop.f32.mrf.mxu0
  %v2833 = vadd.f32 %v424, %v2832
  %v2834 = vpop.f32.mrf.mxu0
  %v2835 = vadd.f32 %v420, %v2834
  %v2836 = vpop.f32.mrf.mxu0
  %v2837 = vadd.f32 %v424, %v2836
  %2838 = vmatprep.mubr.bf16.mxu0 0
  %2839 = vmatmul.mubr.bf16.gmra.mxu0 %v1680
  %v2840 = vpop.f32.mrf.mxu0
  %v2841 = vadd.f32 %v420, %v2840
  %v2842 = vpop.f32.mrf.mxu0
  %v2843 = vadd.f32 %v424, %v2842
  %v2844 = vpop.f32.mrf.mxu0
  %v2845 = vadd.f32 %v420, %v2844
  %v2846 = vpop.f32.mrf.mxu0
  %v2847 = vadd.f32 %v424, %v2846
  %2848 = vmatprep.mubr.bf16.mxu0 0
  %2849 = vmatmul.mubr.bf16.gmra.mxu0 %v1683
  %v2850 = vpop.f32.mrf.mxu0
  %v2851 = vadd.f32 %v420, %v2850
  %v2852 = vpop.f32.mrf.mxu0
  %v2853 = vadd.f32 %v424, %v2852
  %v2854 = vpop.f32.mrf.mxu0
  %v2855 = vadd.f32 %v420, %v2854
  %v2856 = vpop.f32.mrf.mxu0
  %v2857 = vadd.f32 %v424, %v2856
  %2858 = vmatprep.mubr.bf16.mxu0 0
  %2859 = vmatmul.mubr.bf16.gmra.mxu0 %v1686
  %v2860 = vpop.f32.mrf.mxu0
  %v2861 = vadd.f32 %v420, %v2860
  %v2862 = vpop.f32.mrf.mxu0
  %v2863 = vadd.f32 %v424, %v2862
  %v2864 = vpop.f32.mrf.mxu0
  %v2865 = vadd.f32 %v420, %v2864
  %v2866 = vpop.f32.mrf.mxu0
  %v2867 = vadd.f32 %v424, %v2866
  %2868 = vmatprep.mubr.bf16.mxu0 0
  %2869 = vmatmul.mubr.bf16.gmra.mxu0 %v1689
  %v2870 = vpop.f32.mrf.mxu0
  %v2871 = vadd.f32 %v420, %v2870
  %v2872 = vpop.f32.mrf.mxu0
  %v2873 = vadd.f32 %v424, %v2872
  %v2874 = vpop.f32.mrf.mxu0
  %v2875 = vadd.f32 %v420, %v2874
  %v2876 = vpop.f32.mrf.mxu0
  %v2877 = vadd.f32 %v424, %v2876
  %2878 = vmatprep.mubr.bf16.mxu0 0
  %2879 = vmatmul.mubr.bf16.gmra.mxu0 %v1692
  %v2880 = vpop.f32.mrf.mxu0
  %v2881 = vadd.f32 %v420, %v2880
  %v2882 = vpop.f32.mrf.mxu0
  %v2883 = vadd.f32 %v424, %v2882
  %v2884 = vpop.f32.mrf.mxu0
  %v2885 = vadd.f32 %v420, %v2884
  %v2886 = vpop.f32.mrf.mxu0
  %v2887 = vadd.f32 %v424, %v2886
  %2888 = vmatprep.mubr.bf16.mxu0 0
  %2889 = vmatmul.mubr.bf16.gmra.mxu0 %v1695
  %v2890 = vpop.f32.mrf.mxu0
  %v2891 = vadd.f32 %v420, %v2890
  %v2892 = vpop.f32.mrf.mxu0
  %v2893 = vadd.f32 %v424, %v2892
  %v2894 = vpop.f32.mrf.mxu0
  %v2895 = vadd.f32 %v420, %v2894
  %v2896 = vpop.f32.mrf.mxu0
  %v2897 = vadd.f32 %v424, %v2896
  %2898 = vmatprep.mubr.bf16.mxu0 0
  %2899 = vmatmul.mubr.bf16.gmra.mxu0 %v1698
  %v2900 = vpop.f32.mrf.mxu0
  %v2901 = vadd.f32 %v420, %v2900
  %v2902 = vpop.f32.mrf.mxu0
  %v2903 = vadd.f32 %v424, %v2902
  %v2904 = vpop.f32.mrf.mxu0
  %v2905 = vadd.f32 %v420, %v2904
  %v2906 = vpop.f32.mrf.mxu0
  %v2907 = vadd.f32 %v424, %v2906
  %2908 = vmatprep.mubr.bf16.mxu0 0
  %2909 = vmatmul.mubr.bf16.gmra.mxu0 %v1701
  %v2910 = vpop.f32.mrf.mxu0
  %v2911 = vadd.f32 %v420, %v2910
  %v2912 = vpop.f32.mrf.mxu0
  %v2913 = vadd.f32 %v424, %v2912
  %v2914 = vpop.f32.mrf.mxu0
  %v2915 = vadd.f32 %v420, %v2914
  %v2916 = vpop.f32.mrf.mxu0
  %v2917 = vadd.f32 %v424, %v2916
  %2918 = vmatprep.mubr.bf16.mxu0 0
  %2919 = vmatmul.mubr.bf16.gmra.mxu0 %v1704
  %v2920 = vpop.f32.mrf.mxu0
  %v2921 = vadd.f32 %v420, %v2920
  %v2922 = vpop.f32.mrf.mxu0
  %v2923 = vadd.f32 %v424, %v2922
  %v2924 = vpop.f32.mrf.mxu0
  %v2925 = vadd.f32 %v420, %v2924
  %v2926 = vpop.f32.mrf.mxu0
  %v2927 = vadd.f32 %v424, %v2926
  %2928 = vmatprep.mubr.bf16.mxu0 0
  %2929 = vmatmul.mubr.bf16.gmra.mxu0 %v1707
  %v2930 = vpop.f32.mrf.mxu0
  %v2931 = vadd.f32 %v420, %v2930
  %v2932 = vpop.f32.mrf.mxu0
  %v2933 = vadd.f32 %v424, %v2932
  %v2934 = vpop.f32.mrf.mxu0
  %v2935 = vadd.f32 %v420, %v2934
  %v2936 = vpop.f32.mrf.mxu0
  %v2937 = vadd.f32 %v424, %v2936
  %2938 = vmatprep.mubr.bf16.mxu0 0
  %2939 = vmatmul.mubr.bf16.gmra.mxu0 %v1710
  %v2940 = vpop.f32.mrf.mxu0
  %v2941 = vadd.f32 %v420, %v2940
  %v2942 = vpop.f32.mrf.mxu0
  %v2943 = vadd.f32 %v424, %v2942
  %v2944 = vpop.f32.mrf.mxu0
  %v2945 = vadd.f32 %v420, %v2944
  %v2946 = vpop.f32.mrf.mxu0
  %v2947 = vadd.f32 %v424, %v2946
  %2948 = vmatprep.mubr.bf16.mxu0 0
  %2949 = vmatmul.mubr.bf16.gmra.mxu0 %v1713
  %v2950 = vpop.f32.mrf.mxu0
  %v2951 = vadd.f32 %v420, %v2950
  %v2952 = vpop.f32.mrf.mxu0
  %v2953 = vadd.f32 %v424, %v2952
  %v2954 = vpop.f32.mrf.mxu0
  %v2955 = vadd.f32 %v420, %v2954
  %v2956 = vpop.f32.mrf.mxu0
  %v2957 = vadd.f32 %v424, %v2956
  %2958 = vmatprep.mubr.bf16.mxu0 0
  %2959 = vmatmul.mubr.bf16.gmra.mxu0 %v1716
  %v2960 = vpop.f32.mrf.mxu0
  %v2961 = vadd.f32 %v420, %v2960
  %v2962 = vpop.f32.mrf.mxu0
  %v2963 = vadd.f32 %v424, %v2962
  %v2964 = vpop.f32.mrf.mxu0
  %v2965 = vadd.f32 %v420, %v2964
  %v2966 = vpop.f32.mrf.mxu0
  %v2967 = vadd.f32 %v424, %v2966
  %2968 = vmatprep.mubr.bf16.mxu0 0
  %2969 = vmatmul.mubr.bf16.gmra.mxu0 %v1719
  %v2970 = vpop.f32.mrf.mxu0
  %v2971 = vadd.f32 %v420, %v2970
  %v2972 = vpop.f32.mrf.mxu0
  %v2973 = vadd.f32 %v424, %v2972
  %v2974 = vpop.f32.mrf.mxu0
  %v2975 = vadd.f32 %v420, %v2974
  %v2976 = vpop.f32.mrf.mxu0
  %v2977 = vadd.f32 %v424, %v2976
  %2978 = vmatprep.mubr.bf16.mxu0 0
  %2979 = vmatmul.mubr.bf16.gmra.mxu0 %v1722
  %v2980 = vpop.f32.mrf.mxu0
  %v2981 = vadd.f32 %v420, %v2980
  %v2982 = vpop.f32.mrf.mxu0
  %v2983 = vadd.f32 %v424, %v2982
  %v2984 = vpop.f32.mrf.mxu0
  %v2985 = vadd.f32 %v420, %v2984
  %v2986 = vpop.f32.mrf.mxu0
  %v2987 = vadd.f32 %v424, %v2986
  %2988 = vmatprep.mubr.bf16.mxu0 0
  %2989 = vmatmul.mubr.bf16.gmra.mxu0 %v1725
  %v2990 = vpop.f32.mrf.mxu0
  %v2991 = vadd.f32 %v420, %v2990
  %v2992 = vpop.f32.mrf.mxu0
  %v2993 = vadd.f32 %v424, %v2992
  %v2994 = vpop.f32.mrf.mxu0
  %v2995 = vadd.f32 %v420, %v2994
  %v2996 = vpop.f32.mrf.mxu0
  %v2997 = vadd.f32 %v424, %v2996
  %2998 = vmatprep.mubr.bf16.mxu0 0
  %2999 = vmatmul.mubr.bf16.gmra.mxu0 %v1728
  %v3000 = vpop.f32.mrf.mxu0
  %v3001 = vadd.f32 %v420, %v3000
  %v3002 = vpop.f32.mrf.mxu0
  %v3003 = vadd.f32 %v424, %v3002
  %v3004 = vpop.f32.mrf.mxu0
  %v3005 = vadd.f32 %v420, %v3004
  %v3006 = vpop.f32.mrf.mxu0
  %v3007 = vadd.f32 %v424, %v3006
  %3008 = vmatprep.mubr.bf16.mxu0 0
  %3009 = vmatmul.mubr.bf16.gmra.mxu0 %v1731
  %v3010 = vpop.f32.mrf.mxu0
  %v3011 = vadd.f32 %v420, %v3010
  %v3012 = vpop.f32.mrf.mxu0
  %v3013 = vadd.f32 %v424, %v3012
  %v3014 = vpop.f32.mrf.mxu0
  %v3015 = vadd.f32 %v420, %v3014
  %v3016 = vpop.f32.mrf.mxu0
  %v3017 = vadd.f32 %v424, %v3016
  %3018 = vmatprep.mubr.bf16.mxu0 0
  %3019 = vmatmul.mubr.bf16.gmra.mxu0 %v1734
  %v3020 = vpop.f32.mrf.mxu0
  %v3021 = vadd.f32 %v420, %v3020
  %v3022 = vpop.f32.mrf.mxu0
  %v3023 = vadd.f32 %v424, %v3022
  %v3024 = vpop.f32.mrf.mxu0
  %v3025 = vadd.f32 %v420, %v3024
  %v3026 = vpop.f32.mrf.mxu0
  %v3027 = vadd.f32 %v424, %v3026
  %3028 = vmatprep.mubr.bf16.mxu0 0
  %3029 = vmatmul.mubr.bf16.gmra.mxu0 %v1737
  %v3030 = vpop.f32.mrf.mxu0
  %v3031 = vadd.f32 %v420, %v3030
  %v3032 = vpop.f32.mrf.mxu0
  %v3033 = vadd.f32 %v424, %v3032
  %v3034 = vpop.f32.mrf.mxu0
  %v3035 = vadd.f32 %v420, %v3034
  %v3036 = vpop.f32.mrf.mxu0
  %v3037 = vadd.f32 %v424, %v3036
  %3038 = vmatprep.mubr.bf16.mxu0 0
  %3039 = vmatmul.mubr.bf16.gmra.mxu0 %v1740
  %v3040 = vpop.f32.mrf.mxu0
  %v3041 = vadd.f32 %v420, %v3040
  %v3042 = vpop.f32.mrf.mxu0
  %v3043 = vadd.f32 %v424, %v3042
  %v3044 = vpop.f32.mrf.mxu0
  %v3045 = vadd.f32 %v420, %v3044
  %v3046 = vpop.f32.mrf.mxu0
  %v3047 = vadd.f32 %v424, %v3046
  %3048 = vmatprep.mubr.bf16.mxu0 0
  %3049 = vmatmul.mubr.bf16.gmra.mxu0 %v1743
  %v3050 = vpop.f32.mrf.mxu0
  %v3051 = vadd.f32 %v420, %v3050
  %v3052 = vpop.f32.mrf.mxu0
  %v3053 = vadd.f32 %v424, %v3052
  %v3054 = vpop.f32.mrf.mxu0
  %v3055 = vadd.f32 %v420, %v3054
  %v3056 = vpop.f32.mrf.mxu0
  %v3057 = vadd.f32 %v424, %v3056
  %3058 = vmatprep.mubr.bf16.mxu0 0
  %3059 = vmatmul.mubr.bf16.gmra.mxu0 %v1746
  %v3060 = vpop.f32.mrf.mxu0
  %v3061 = vadd.f32 %v420, %v3060
  %v3062 = vpop.f32.mrf.mxu0
  %v3063 = vadd.f32 %v424, %v3062
  %v3064 = vpop.f32.mrf.mxu0
  %v3065 = vadd.f32 %v420, %v3064
  %v3066 = vpop.f32.mrf.mxu0
  %v3067 = vadd.f32 %v424, %v3066
  %3068 = vmatprep.mubr.bf16.mxu0 0
  %3069 = vmatmul.mubr.bf16.gmra.mxu0 %v1749
  %v3070 = vpop.f32.mrf.mxu0
  %v3071 = vadd.f32 %v420, %v3070
  %v3072 = vpop.f32.mrf.mxu0
  %v3073 = vadd.f32 %v424, %v3072
  %v3074 = vpop.f32.mrf.mxu0
  %v3075 = vadd.f32 %v420, %v3074
  %v3076 = vpop.f32.mrf.mxu0
  %v3077 = vadd.f32 %v424, %v3076
  %3078 = vmatprep.mubr.bf16.mxu0 0
  %3079 = vmatmul.mubr.bf16.gmra.mxu0 %v1752
  %v3080 = vpop.f32.mrf.mxu0
  %v3081 = vadd.f32 %v420, %v3080
  %v3082 = vpop.f32.mrf.mxu0
  %v3083 = vadd.f32 %v424, %v3082
  %v3084 = vpop.f32.mrf.mxu0
  %v3085 = vadd.f32 %v420, %v3084
  %v3086 = vpop.f32.mrf.mxu0
  %v3087 = vadd.f32 %v424, %v3086
  %3088 = vmatprep.mubr.bf16.mxu0 0
  %3089 = vmatmul.mubr.bf16.gmra.mxu0 %v1755
  %v3090 = vpop.f32.mrf.mxu0
  %v3091 = vadd.f32 %v420, %v3090
  %v3092 = vpop.f32.mrf.mxu0
  %v3093 = vadd.f32 %v424, %v3092
  %v3094 = vpop.f32.mrf.mxu0
  %v3095 = vadd.f32 %v420, %v3094
  %v3096 = vpop.f32.mrf.mxu0
  %v3097 = vadd.f32 %v424, %v3096
  %3098 = vmatprep.mubr.bf16.mxu0 0
  %3099 = vmatmul.mubr.bf16.gmra.mxu0 %v1758
  %v3100 = vpop.f32.mrf.mxu0
  %v3101 = vadd.f32 %v420, %v3100
  %v3102 = vpop.f32.mrf.mxu0
  %v3103 = vadd.f32 %v424, %v3102
  %v3104 = vpop.f32.mrf.mxu0
  %v3105 = vadd.f32 %v420, %v3104
  %v3106 = vpop.f32.mrf.mxu0
  %v3107 = vadd.f32 %v424, %v3106
  %3108 = vmatprep.mubr.bf16.mxu0 0
  %3109 = vmatmul.mubr.bf16.gmra.mxu0 %v1761
  %v3110 = vpop.f32.mrf.mxu0
  %v3111 = vadd.f32 %v420, %v3110
  %v3112 = vpop.f32.mrf.mxu0
  %v3113 = vadd.f32 %v424, %v3112
  %v3114 = vpop.f32.mrf.mxu0
  %v3115 = vadd.f32 %v420, %v3114
  %v3116 = vpop.f32.mrf.mxu0
  %v3117 = vadd.f32 %v424, %v3116
  %3118 = vmatprep.mubr.bf16.mxu0 0
  %3119 = vmatmul.mubr.bf16.gmra.mxu0 %v1764
  %v3120 = vpop.f32.mrf.mxu0
  %v3121 = vadd.f32 %v420, %v3120
  %v3122 = vpop.f32.mrf.mxu0
  %v3123 = vadd.f32 %v424, %v3122
  %v3124 = vpop.f32.mrf.mxu0
  %v3125 = vadd.f32 %v420, %v3124
  %v3126 = vpop.f32.mrf.mxu0
  %v3127 = vadd.f32 %v424, %v3126
  %3128 = vmatprep.mubr.bf16.mxu0 0
  %3129 = vmatmul.mubr.bf16.gmra.mxu0 %v1767
  %v3130 = vpop.f32.mrf.mxu0
  %v3131 = vadd.f32 %v420, %v3130
  %v3132 = vpop.f32.mrf.mxu0
  %v3133 = vadd.f32 %v424, %v3132
  %v3134 = vpop.f32.mrf.mxu0
  %v3135 = vadd.f32 %v420, %v3134
  %v3136 = vpop.f32.mrf.mxu0
  %v3137 = vadd.f32 %v424, %v3136
  %3138 = vmatprep.mubr.bf16.mxu0 0
  %3139 = vmatmul.mubr.bf16.gmra.mxu0 %v1770
  %v3140 = vpop.f32.mrf.mxu0
  %v3141 = vadd.f32 %v420, %v3140
  %v3142 = vpop.f32.mrf.mxu0
  %v3143 = vadd.f32 %v424, %v3142
  %v3144 = vpop.f32.mrf.mxu0
  %v3145 = vadd.f32 %v420, %v3144
  %v3146 = vpop.f32.mrf.mxu0
  %v3147 = vadd.f32 %v424, %v3146
  %3148 = vmatprep.mubr.bf16.mxu0 0
  %3149 = vmatmul.mubr.bf16.gmra.mxu0 %v1773
  %v3150 = vpop.f32.mrf.mxu0
  %v3151 = vadd.f32 %v420, %v3150
  %v3152 = vpop.f32.mrf.mxu0
  %v3153 = vadd.f32 %v424, %v3152
  %v3154 = vpop.f32.mrf.mxu0
  %v3155 = vadd.f32 %v420, %v3154
  %v3156 = vpop.f32.mrf.mxu0
  %v3157 = vadd.f32 %v424, %v3156
  %3158 = vmatprep.mubr.bf16.mxu0 0
  %3159 = vmatmul.mubr.bf16.gmra.mxu0 %v1776
  %v3160 = vpop.f32.mrf.mxu0
  %v3161 = vadd.f32 %v420, %v3160
  %v3162 = vpop.f32.mrf.mxu0
  %v3163 = vadd.f32 %v424, %v3162
  %v3164 = vpop.f32.mrf.mxu0
  %v3165 = vadd.f32 %v420, %v3164
  %v3166 = vpop.f32.mrf.mxu0
  %v3167 = vadd.f32 %v424, %v3166
  %3168 = vmatprep.mubr.bf16.mxu0 0
  %3169 = vmatmul.mubr.bf16.gmra.mxu0 %v1779
  %v3170 = vpop.f32.mrf.mxu0
  %v3171 = vadd.f32 %v420, %v3170
  %v3172 = vpop.f32.mrf.mxu0
  %v3173 = vadd.f32 %v424, %v3172
  %v3174 = vpop.f32.mrf.mxu0
  %v3175 = vadd.f32 %v420, %v3174
  %v3176 = vpop.f32.mrf.mxu0
  %v3177 = vadd.f32 %v424, %v3176
  %3178 = vmatprep.mubr.bf16.mxu0 0
  %3179 = vmatmul.mubr.bf16.gmra.mxu0 %v1782
  %v3180 = vpop.f32.mrf.mxu0
  %v3181 = vadd.f32 %v420, %v3180
  %v3182 = vpop.f32.mrf.mxu0
  %v3183 = vadd.f32 %v424, %v3182
  %v3184 = vpop.f32.mrf.mxu0
  %v3185 = vadd.f32 %v420, %v3184
  %v3186 = vpop.f32.mrf.mxu0
  %v3187 = vadd.f32 %v424, %v3186
  %3188 = vmatprep.mubr.bf16.mxu0 0
  %3189 = vmatmul.mubr.bf16.gmra.mxu0 %v1785
  %v3190 = vpop.f32.mrf.mxu0
  %v3191 = vadd.f32 %v420, %v3190
  %v3192 = vpop.f32.mrf.mxu0
  %v3193 = vadd.f32 %v424, %v3192
  %v3194 = vpop.f32.mrf.mxu0
  %v3195 = vadd.f32 %v420, %v3194
  %v3196 = vpop.f32.mrf.mxu0
  %v3197 = vadd.f32 %v424, %v3196
  %3198 = vmatprep.mubr.bf16.mxu0 0
  %3199 = vmatmul.mubr.bf16.gmra.mxu0 %v1788
  %v3200 = vpop.f32.mrf.mxu0
  %v3201 = vadd.f32 %v420, %v3200
  %v3202 = vpop.f32.mrf.mxu0
  %v3203 = vadd.f32 %v424, %v3202
  %v3204 = vpop.f32.mrf.mxu0
  %v3205 = vadd.f32 %v420, %v3204
  %v3206 = vpop.f32.mrf.mxu0
  %v3207 = vadd.f32 %v424, %v3206
  %3208 = vmatprep.mubr.bf16.mxu0 0
  %3209 = vmatmul.mubr.bf16.gmra.mxu0 %v1791
  %v3210 = vpop.f32.mrf.mxu0
  %v3211 = vadd.f32 %v420, %v3210
  %v3212 = vpop.f32.mrf.mxu0
  %v3213 = vadd.f32 %v424, %v3212
  %v3214 = vpop.f32.mrf.mxu0
  %v3215 = vadd.f32 %v420, %v3214
  %v3216 = vpop.f32.mrf.mxu0
  %v3217 = vadd.f32 %v424, %v3216
  %3218 = vmatprep.mubr.bf16.mxu0 0
  %3219 = vmatmul.mubr.bf16.gmra.mxu0 %v1794
  %v3220 = vpop.f32.mrf.mxu0
  %v3221 = vadd.f32 %v420, %v3220
  %v3222 = vpop.f32.mrf.mxu0
  %v3223 = vadd.f32 %v424, %v3222
  %v3224 = vpop.f32.mrf.mxu0
  %v3225 = vadd.f32 %v420, %v3224
  %v3226 = vpop.f32.mrf.mxu0
  %v3227 = vadd.f32 %v424, %v3226
  %3228 = vmatprep.mubr.bf16.mxu0 0
  %3229 = vmatmul.mubr.bf16.gmra.mxu0 %v1797
  %v3230 = vpop.f32.mrf.mxu0
  %v3231 = vadd.f32 %v420, %v3230
  %v3232 = vpop.f32.mrf.mxu0
  %v3233 = vadd.f32 %v424, %v3232
  %v3234 = vpop.f32.mrf.mxu0
  %v3235 = vadd.f32 %v420, %v3234
  %v3236 = vpop.f32.mrf.mxu0
  %v3237 = vadd.f32 %v424, %v3236
  %3238 = vmatprep.mubr.bf16.mxu0 0
  %3239 = vmatmul.mubr.bf16.gmra.mxu0 %v1800
  %v3240 = vpop.f32.mrf.mxu0
  %v3241 = vadd.f32 %v420, %v3240
  %v3242 = vpop.f32.mrf.mxu0
  %v3243 = vadd.f32 %v424, %v3242
  %v3244 = vpop.f32.mrf.mxu0
  %v3245 = vadd.f32 %v420, %v3244
  %v3246 = vpop.f32.mrf.mxu0
  %v3247 = vadd.f32 %v424, %v3246
  %3248 = vmatprep.mubr.bf16.mxu0 0
  %3249 = vmatmul.mubr.bf16.gmra.mxu0 %v1803
  %v3250 = vpop.f32.mrf.mxu0
  %v3251 = vadd.f32 %v420, %v3250
  %v3252 = vpop.f32.mrf.mxu0
  %v3253 = vadd.f32 %v424, %v3252
  %v3254 = vpop.f32.mrf.mxu0
  %v3255 = vadd.f32 %v420, %v3254
  %v3256 = vpop.f32.mrf.mxu0
  %v3257 = vadd.f32 %v424, %v3256
  %3258 = vmatprep.mubr.bf16.mxu0 0
  %3259 = vmatmul.mubr.bf16.gmra.mxu0 %v1806
  %v3260 = vpop.f32.mrf.mxu0
  %v3261 = vadd.f32 %v420, %v3260
  %v3262 = vpop.f32.mrf.mxu0
  %v3263 = vadd.f32 %v424, %v3262
  %v3264 = vpop.f32.mrf.mxu0
  %v3265 = vadd.f32 %v420, %v3264
  %v3266 = vpop.f32.mrf.mxu0
  %v3267 = vadd.f32 %v424, %v3266
  %3268 = vmatprep.mubr.bf16.mxu0 0
  %3269 = vmatmul.mubr.bf16.gmra.mxu0 %v1809
  %v3270 = vpop.f32.mrf.mxu0
  %v3271 = vadd.f32 %v420, %v3270
  %v3272 = vpop.f32.mrf.mxu0
  %v3273 = vadd.f32 %v424, %v3272
  %v3274 = vpop.f32.mrf.mxu0
  %v3275 = vadd.f32 %v420, %v3274
  %v3276 = vpop.f32.mrf.mxu0
  %v3277 = vadd.f32 %v424, %v3276
  %3278 = vmatprep.mubr.bf16.mxu0 0
  %3279 = vmatmul.mubr.bf16.gmra.mxu0 %v1812
  %v3280 = vpop.f32.mrf.mxu0
  %v3281 = vadd.f32 %v420, %v3280
  %v3282 = vpop.f32.mrf.mxu0
  %v3283 = vadd.f32 %v424, %v3282
  %v3284 = vpop.f32.mrf.mxu0
  %v3285 = vadd.f32 %v420, %v3284
  %v3286 = vpop.f32.mrf.mxu0
  %v3287 = vadd.f32 %v424, %v3286
  %3288 = vmatprep.mubr.bf16.mxu0 0
  %3289 = vmatmul.mubr.bf16.gmra.mxu0 %v1815
  %v3290 = vpop.f32.mrf.mxu0
  %v3291 = vadd.f32 %v420, %v3290
  %v3292 = vpop.f32.mrf.mxu0
  %v3293 = vadd.f32 %v424, %v3292
  %v3294 = vpop.f32.mrf.mxu0
  %v3295 = vadd.f32 %v420, %v3294
  %v3296 = vpop.f32.mrf.mxu0
  %v3297 = vadd.f32 %v424, %v3296
  %3298 = vmatprep.mubr.bf16.mxu0 0
  %3299 = vmatmul.mubr.bf16.gmra.mxu0 %v1818
  %v3300 = vpop.f32.mrf.mxu0
  %v3301 = vadd.f32 %v420, %v3300
  %v3302 = vpop.f32.mrf.mxu0
  %v3303 = vadd.f32 %v424, %v3302
  %v3304 = vpop.f32.mrf.mxu0
  %v3305 = vadd.f32 %v420, %v3304
  %v3306 = vpop.f32.mrf.mxu0
  %v3307 = vadd.f32 %v424, %v3306
  %3308 = vmatprep.mubr.bf16.mxu0 0
  %3309 = vmatmul.mubr.bf16.gmra.mxu0 %v1821
  %v3310 = vpop.f32.mrf.mxu0
  %v3311 = vadd.f32 %v420, %v3310
  %v3312 = vpop.f32.mrf.mxu0
  %v3313 = vadd.f32 %v424, %v3312
  %v3314 = vpop.f32.mrf.mxu0
  %v3315 = vadd.f32 %v420, %v3314
  %v3316 = vpop.f32.mrf.mxu0
  %v3317 = vadd.f32 %v424, %v3316
  %3318 = vmatprep.mubr.bf16.mxu0 0
  %3319 = vmatmul.mubr.bf16.gmra.mxu0 %v1824
  %v3320 = vpop.f32.mrf.mxu0
  %v3321 = vadd.f32 %v420, %v3320
  %v3322 = vpop.f32.mrf.mxu0
  %v3323 = vadd.f32 %v424, %v3322
  %v3324 = vpop.f32.mrf.mxu0
  %v3325 = vadd.f32 %v420, %v3324
  %v3326 = vpop.f32.mrf.mxu0
  %v3327 = vadd.f32 %v424, %v3326
  %3328 = vmatprep.mubr.bf16.mxu0 0
  %3329 = vmatmul.mubr.bf16.gmra.mxu0 %v1827
  %v3330 = vpop.f32.mrf.mxu0
  %v3331 = vadd.f32 %v420, %v3330
  %v3332 = vpop.f32.mrf.mxu0
  %v3333 = vadd.f32 %v424, %v3332
  %v3334 = vpop.f32.mrf.mxu0
  %v3335 = vadd.f32 %v420, %v3334
  %v3336 = vpop.f32.mrf.mxu0
  %v3337 = vadd.f32 %v424, %v3336
  %3338 = vmatprep.mubr.bf16.mxu0 0
  %3339 = vmatmul.mubr.bf16.gmra.mxu0 %v1830
  %v3340 = vpop.f32.mrf.mxu0
  %v3341 = vadd.f32 %v420, %v3340
  %v3342 = vpop.f32.mrf.mxu0
  %v3343 = vadd.f32 %v424, %v3342
  %v3344 = vpop.f32.mrf.mxu0
  %v3345 = vadd.f32 %v420, %v3344
  %v3346 = vpop.f32.mrf.mxu0
  %v3347 = vadd.f32 %v424, %v3346
  %3348 = vmatprep.mubr.bf16.mxu0 0
  %3349 = vmatmul.mubr.bf16.gmra.mxu0 %v1833
  %v3350 = vpop.f32.mrf.mxu0
  %v3351 = vadd.f32 %v420, %v3350
  %v3352 = vpop.f32.mrf.mxu0
  %v3353 = vadd.f32 %v424, %v3352
  %v3354 = vpop.f32.mrf.mxu0
  %v3355 = vadd.f32 %v420, %v3354
  %v3356 = vpop.f32.mrf.mxu0
  %v3357 = vadd.f32 %v424, %v3356
  %3358 = vmatprep.mubr.bf16.mxu0 0
  %3359 = vmatmul.mubr.bf16.gmra.mxu0 %v1836
  %v3360 = vpop.f32.mrf.mxu0
  %v3361 = vadd.f32 %v420, %v3360
  %v3362 = vpop.f32.mrf.mxu0
  %v3363 = vadd.f32 %v424, %v3362
  %v3364 = vpop.f32.mrf.mxu0
  %v3365 = vadd.f32 %v420, %v3364
  %v3366 = vpop.f32.mrf.mxu0
  %v3367 = vadd.f32 %v424, %v3366
  %3368 = vmatprep.mubr.bf16.mxu0 0
  %3369 = vmatmul.mubr.bf16.gmra.mxu0 %v1839
  %v3370 = vpop.f32.mrf.mxu0
  %v3371 = vadd.f32 %v420, %v3370
  %v3372 = vpop.f32.mrf.mxu0
  %v3373 = vadd.f32 %v424, %v3372
  %v3374 = vpop.f32.mrf.mxu0
  %v3375 = vadd.f32 %v420, %v3374
  %v3376 = vpop.f32.mrf.mxu0
  %v3377 = vadd.f32 %v424, %v3376
  %3378 = vmatprep.mubr.bf16.mxu0 0
  %3379 = vmatmul.mubr.bf16.gmra.mxu0 %v1842
  %v3380 = vpop.f32.mrf.mxu0
  %v3381 = vadd.f32 %v420, %v3380
  %v3382 = vpop.f32.mrf.mxu0
  %v3383 = vadd.f32 %v424, %v3382
  %v3384 = vpop.f32.mrf.mxu0
  %v3385 = vadd.f32 %v420, %v3384
  %v3386 = vpop.f32.mrf.mxu0
  %v3387 = vadd.f32 %v424, %v3386
  %3388 = vmatprep.mubr.bf16.mxu0 0
  %3389 = vmatmul.mubr.bf16.gmra.mxu0 %v1845
  %v3390 = vpop.f32.mrf.mxu0
  %v3391 = vadd.f32 %v420, %v3390
  %v3392 = vpop.f32.mrf.mxu0
  %v3393 = vadd.f32 %v424, %v3392
  %v3394 = vpop.f32.mrf.mxu0
  %v3395 = vadd.f32 %v420, %v3394
  %v3396 = vpop.f32.mrf.mxu0
  %v3397 = vadd.f32 %v424, %v3396
  %3398 = vmatprep.mubr.bf16.mxu0 0
  %3399 = vmatmul.mubr.bf16.gmra.mxu0 %v1848
  %v3400 = vpop.f32.mrf.mxu0
  %v3401 = vadd.f32 %v420, %v3400
  %v3402 = vpop.f32.mrf.mxu0
  %v3403 = vadd.f32 %v424, %v3402
  %v3404 = vpop.f32.mrf.mxu0
  %v3405 = vadd.f32 %v420, %v3404
  %v3406 = vpop.f32.mrf.mxu0
  %v3407 = vadd.f32 %v424, %v3406
  %3408 = vmatprep.mubr.bf16.mxu0 0
  %3409 = vmatmul.mubr.bf16.gmra.mxu0 %v1851
  %v3410 = vpop.f32.mrf.mxu0
  %v3411 = vadd.f32 %v420, %v3410
  %v3412 = vpop.f32.mrf.mxu0
  %v3413 = vadd.f32 %v424, %v3412
  %v3414 = vpop.f32.mrf.mxu0
  %v3415 = vadd.f32 %v420, %v3414
  %v3416 = vpop.f32.mrf.mxu0
  %v3417 = vadd.f32 %v424, %v3416
  %3418 = vmatprep.mubr.bf16.mxu0 0
  %3419 = vmatmul.mubr.bf16.gmra.mxu0 %v1854
  %v3420 = vpop.f32.mrf.mxu0
  %v3421 = vadd.f32 %v420, %v3420
  %v3422 = vpop.f32.mrf.mxu0
  %v3423 = vadd.f32 %v424, %v3422
  %v3424 = vpop.f32.mrf.mxu0
  %v3425 = vadd.f32 %v420, %v3424
  %v3426 = vpop.f32.mrf.mxu0
  %v3427 = vadd.f32 %v424, %v3426
  %3428 = vmatprep.mubr.bf16.mxu0 0
  %3429 = vmatmul.mubr.bf16.gmra.mxu0 %v1857
  %v3430 = vpop.f32.mrf.mxu0
  %v3431 = vadd.f32 %v420, %v3430
  %v3432 = vpop.f32.mrf.mxu0
  %v3433 = vadd.f32 %v424, %v3432
  %v3434 = vpop.f32.mrf.mxu0
  %v3435 = vadd.f32 %v420, %v3434
  %v3436 = vpop.f32.mrf.mxu0
  %v3437 = vadd.f32 %v424, %v3436
  %3438 = vmatprep.mubr.bf16.mxu0 0
  %3439 = vmatmul.mubr.bf16.gmra.mxu0 %v1860
  %v3440 = vpop.f32.mrf.mxu0
  %v3441 = vadd.f32 %v420, %v3440
  %v3442 = vpop.f32.mrf.mxu0
  %v3443 = vadd.f32 %v424, %v3442
  %v3444 = vpop.f32.mrf.mxu0
  %v3445 = vadd.f32 %v420, %v3444
  %v3446 = vpop.f32.mrf.mxu0
  %v3447 = vadd.f32 %v424, %v3446
  %3448 = vmatprep.mubr.bf16.mxu0 0
  %3449 = vmatmul.mubr.bf16.gmra.mxu0 %v1863
  %v3450 = vpop.f32.mrf.mxu0
  %v3451 = vadd.f32 %v420, %v3450
  %v3452 = vpop.f32.mrf.mxu0
  %v3453 = vadd.f32 %v424, %v3452
  %v3454 = vpop.f32.mrf.mxu0
  %v3455 = vadd.f32 %v420, %v3454
  %v3456 = vpop.f32.mrf.mxu0
  %v3457 = vadd.f32 %v424, %v3456
  %3458 = vmatprep.mubr.bf16.mxu0 0
  %3459 = vmatmul.mubr.bf16.gmra.mxu0 %v1866
  %v3460 = vpop.f32.mrf.mxu0
  %v3461 = vadd.f32 %v420, %v3460
  %v3462 = vpop.f32.mrf.mxu0
  %v3463 = vadd.f32 %v424, %v3462
  %v3464 = vpop.f32.mrf.mxu0
  %v3465 = vadd.f32 %v420, %v3464
  %v3466 = vpop.f32.mrf.mxu0
  %v3467 = vadd.f32 %v424, %v3466
  %3468 = vmatprep.mubr.bf16.mxu0 0
  %3469 = vmatmul.mubr.bf16.gmra.mxu0 %v1869
  %v3470 = vpop.f32.mrf.mxu0
  %v3471 = vadd.f32 %v420, %v3470
  %v3472 = vpop.f32.mrf.mxu0
  %v3473 = vadd.f32 %v424, %v3472
  %v3474 = vpop.f32.mrf.mxu0
  %v3475 = vadd.f32 %v420, %v3474
  %v3476 = vpop.f32.mrf.mxu0
  %v3477 = vadd.f32 %v424, %v3476
  %3478 = vmatprep.mubr.bf16.mxu0 0
  %3479 = vmatmul.mubr.bf16.gmra.mxu0 %v1872
  %v3480 = vpop.f32.mrf.mxu0
  %v3481 = vadd.f32 %v420, %v3480
  %v3482 = vpop.f32.mrf.mxu0
  %v3483 = vadd.f32 %v424, %v3482
  %v3484 = vpop.f32.mrf.mxu0
  %v3485 = vadd.f32 %v420, %v3484
  %v3486 = vpop.f32.mrf.mxu0
  %v3487 = vadd.f32 %v424, %v3486
  %3488 = vmatprep.mubr.bf16.mxu0 0
  %3489 = vmatmul.mubr.bf16.gmra.mxu0 %v1875
  %v3490 = vpop.f32.mrf.mxu0
  %v3491 = vadd.f32 %v420, %v3490
  %v3492 = vpop.f32.mrf.mxu0
  %v3493 = vadd.f32 %v424, %v3492
  %v3494 = vpop.f32.mrf.mxu0
  %v3495 = vadd.f32 %v420, %v3494
  %v3496 = vpop.f32.mrf.mxu0
  %v3497 = vadd.f32 %v424, %v3496
  %3498 = vmatprep.mubr.bf16.mxu0 0
  %3499 = vmatmul.mubr.bf16.gmra.mxu0 %v1878
  %v3500 = vpop.f32.mrf.mxu0
  %v3501 = vadd.f32 %v420, %v3500
  %v3502 = vpop.f32.mrf.mxu0
  %v3503 = vadd.f32 %v424, %v3502
  %v3504 = vpop.f32.mrf.mxu0
  %v3505 = vadd.f32 %v420, %v3504
  %v3506 = vpop.f32.mrf.mxu0
  %v3507 = vadd.f32 %v424, %v3506
  %3508 = vmatprep.mubr.bf16.mxu0 0
  %3509 = vmatmul.mubr.bf16.gmra.mxu0 %v1881
  %v3510 = vpop.f32.mrf.mxu0
  %v3511 = vadd.f32 %v420, %v3510
  %v3512 = vpop.f32.mrf.mxu0
  %v3513 = vadd.f32 %v424, %v3512
  %v3514 = vpop.f32.mrf.mxu0
  %v3515 = vadd.f32 %v420, %v3514
  %v3516 = vpop.f32.mrf.mxu0
  %v3517 = vadd.f32 %v424, %v3516
  %3518 = vmatprep.mubr.bf16.mxu0 0
  %3519 = vmatmul.mubr.bf16.gmra.mxu0 %v1884
  %v3520 = vpop.f32.mrf.mxu0
  %v3521 = vadd.f32 %v420, %v3520
  %v3522 = vpop.f32.mrf.mxu0
  %v3523 = vadd.f32 %v424, %v3522
  %v3524 = vpop.f32.mrf.mxu0
  %v3525 = vadd.f32 %v420, %v3524
  %v3526 = vpop.f32.mrf.mxu0
  %v3527 = vadd.f32 %v424, %v3526
  %3528 = vmatprep.mubr.bf16.mxu0 0
  %3529 = vmatmul.mubr.bf16.gmra.mxu0 %v1887
  %v3530 = vpop.f32.mrf.mxu0
  %v3531 = vadd.f32 %v420, %v3530
  %v3532 = vpop.f32.mrf.mxu0
  %v3533 = vadd.f32 %v424, %v3532
  %v3534 = vpop.f32.mrf.mxu0
  %v3535 = vadd.f32 %v420, %v3534
  %v3536 = vpop.f32.mrf.mxu0
  %v3537 = vadd.f32 %v424, %v3536
  %3538 = vmatprep.mubr.bf16.mxu0 0
  %3539 = vmatmul.mubr.bf16.gmra.mxu0 %v1890
  %v3540 = vpop.f32.mrf.mxu0
  %v3541 = vadd.f32 %v420, %v3540
  %v3542 = vpop.f32.mrf.mxu0
  %v3543 = vadd.f32 %v424, %v3542
  %v3544 = vpop.f32.mrf.mxu0
  %v3545 = vadd.f32 %v420, %v3544
  %v3546 = vpop.f32.mrf.mxu0
  %v3547 = vadd.f32 %v424, %v3546
  %3548 = vmatprep.mubr.bf16.mxu0 0
  %3549 = vmatmul.mubr.bf16.gmra.mxu0 %v1893
  %v3550 = vpop.f32.mrf.mxu0
  %v3551 = vadd.f32 %v420, %v3550
  %v3552 = vpop.f32.mrf.mxu0
  %v3553 = vadd.f32 %v424, %v3552
  %v3554 = vpop.f32.mrf.mxu0
  %v3555 = vadd.f32 %v420, %v3554
  %v3556 = vpop.f32.mrf.mxu0
  %v3557 = vadd.f32 %v424, %v3556
  %3558 = vmatprep.mubr.bf16.mxu0 0
  %3559 = vmatmul.mubr.bf16.gmra.mxu0 %v1896
  %v3560 = vpop.f32.mrf.mxu0
  %v3561 = vadd.f32 %v420, %v3560
  %v3562 = vpop.f32.mrf.mxu0
  %v3563 = vadd.f32 %v424, %v3562
  %v3564 = vpop.f32.mrf.mxu0
  %v3565 = vadd.f32 %v420, %v3564
  %v3566 = vpop.f32.mrf.mxu0
  %v3567 = vadd.f32 %v424, %v3566
  %3568 = vmatprep.mubr.bf16.mxu0 0
  %3569 = vmatmul.mubr.bf16.gmra.mxu0 %v1899
  %v3570 = vpop.f32.mrf.mxu0
  %v3571 = vadd.f32 %v420, %v3570
  %v3572 = vpop.f32.mrf.mxu0
  %v3573 = vadd.f32 %v424, %v3572
  %v3574 = vpop.f32.mrf.mxu0
  %v3575 = vadd.f32 %v420, %v3574
  %v3576 = vpop.f32.mrf.mxu0
  %v3577 = vadd.f32 %v424, %v3576
  %3578 = vmatprep.mubr.bf16.mxu0 0
  %3579 = vmatmul.mubr.bf16.gmra.mxu0 %v1902
  %v3580 = vpop.f32.mrf.mxu0
  %v3581 = vadd.f32 %v420, %v3580
  %v3582 = vpop.f32.mrf.mxu0
  %v3583 = vadd.f32 %v424, %v3582
  %v3584 = vpop.f32.mrf.mxu0
  %v3585 = vadd.f32 %v420, %v3584
  %v3586 = vpop.f32.mrf.mxu0
  %v3587 = vadd.f32 %v424, %v3586
  %3588 = vmatprep.mubr.bf16.mxu0 0
  %3589 = vmatmul.mubr.bf16.gmra.mxu0 %v1905
  %v3590 = vpop.f32.mrf.mxu0
  %v3591 = vadd.f32 %v420, %v3590
  %v3592 = vpop.f32.mrf.mxu0
  %v3593 = vadd.f32 %v424, %v3592
  %v3594 = vpop.f32.mrf.mxu0
  %v3595 = vadd.f32 %v420, %v3594
  %v3596 = vpop.f32.mrf.mxu0
  %v3597 = vadd.f32 %v424, %v3596
  %3598 = vmatprep.mubr.bf16.mxu0 0
  %3599 = vmatmul.mubr.bf16.gmra.mxu0 %v1908
  %v3600 = vpop.f32.mrf.mxu0
  %v3601 = vadd.f32 %v420, %v3600
  %v3602 = vpop.f32.mrf.mxu0
  %v3603 = vadd.f32 %v424, %v3602
  %v3604 = vpop.f32.mrf.mxu0
  %v3605 = vadd.f32 %v420, %v3604
  %v3606 = vpop.f32.mrf.mxu0
  %v3607 = vadd.f32 %v424, %v3606
  %3608 = vmatprep.mubr.bf16.mxu0 0
  %3609 = vmatmul.mubr.bf16.gmra.mxu0 %v1911
  %v3610 = vpop.f32.mrf.mxu0
  %v3611 = vadd.f32 %v420, %v3610
  %v3612 = vpop.f32.mrf.mxu0
  %v3613 = vadd.f32 %v424, %v3612
  %v3614 = vpop.f32.mrf.mxu0
  %v3615 = vadd.f32 %v420, %v3614
  %v3616 = vpop.f32.mrf.mxu0
  %v3617 = vadd.f32 %v424, %v3616
  %3618 = vmatprep.mubr.bf16.mxu0 0
  %3619 = vmatmul.mubr.bf16.gmra.mxu0 %v1914
  %v3620 = vpop.f32.mrf.mxu0
  %v3621 = vadd.f32 %v420, %v3620
  %v3622 = vpop.f32.mrf.mxu0
  %v3623 = vadd.f32 %v424, %v3622
  %v3624 = vpop.f32.mrf.mxu0
  %v3625 = vadd.f32 %v420, %v3624
  %v3626 = vpop.f32.mrf.mxu0
  %v3627 = vadd.f32 %v424, %v3626
  %3628 = vmatprep.mubr.bf16.mxu0 0
  %3629 = vmatmul.mubr.bf16.gmra.mxu0 %v1917
  %v3630 = vpop.f32.mrf.mxu0
  %v3631 = vadd.f32 %v420, %v3630
  %v3632 = vpop.f32.mrf.mxu0
  %v3633 = vadd.f32 %v424, %v3632
  %v3634 = vpop.f32.mrf.mxu0
  %v3635 = vadd.f32 %v420, %v3634
  %v3636 = vpop.f32.mrf.mxu0
  %v3637 = vadd.f32 %v424, %v3636
  %3638 = vmatprep.mubr.bf16.mxu0 0
  %3639 = vmatmul.mubr.bf16.gmra.mxu0 %v1920
  %v3640 = vpop.f32.mrf.mxu0
  %v3641 = vadd.f32 %v420, %v3640
  %v3642 = vpop.f32.mrf.mxu0
  %v3643 = vadd.f32 %v424, %v3642
  %v3644 = vpop.f32.mrf.mxu0
  %v3645 = vadd.f32 %v420, %v3644
  %v3646 = vpop.f32.mrf.mxu0
  %v3647 = vadd.f32 %v424, %v3646
  %3648 = vmatprep.mubr.bf16.mxu0 0
  %3649 = vmatmul.mubr.bf16.gmra.mxu0 %v1923
  %v3650 = vpop.f32.mrf.mxu0
  %v3651 = vadd.f32 %v420, %v3650
  %v3652 = vpop.f32.mrf.mxu0
  %v3653 = vadd.f32 %v424, %v3652
  %v3654 = vpop.f32.mrf.mxu0
  %v3655 = vadd.f32 %v420, %v3654
  %v3656 = vpop.f32.mrf.mxu0
  %v3657 = vadd.f32 %v424, %v3656
  %3658 = vmatprep.mubr.bf16.mxu0 0
  %3659 = vmatmul.mubr.bf16.gmra.mxu0 %v1926
  %v3660 = vpop.f32.mrf.mxu0
  %v3661 = vadd.f32 %v420, %v3660
  %v3662 = vpop.f32.mrf.mxu0
  %v3663 = vadd.f32 %v424, %v3662
  %v3664 = vpop.f32.mrf.mxu0
  %v3665 = vadd.f32 %v420, %v3664
  %v3666 = vpop.f32.mrf.mxu0
  %v3667 = vadd.f32 %v424, %v3666
  %3668 = vmatprep.mubr.bf16.mxu0 0
  %3669 = vmatmul.mubr.bf16.gmra.mxu0 %v1929
  %v3670 = vpop.f32.mrf.mxu0
  %v3671 = vadd.f32 %v420, %v3670
  %v3672 = vpop.f32.mrf.mxu0
  %v3673 = vadd.f32 %v424, %v3672
  %v3674 = vpop.f32.mrf.mxu0
  %v3675 = vadd.f32 %v420, %v3674
  %v3676 = vpop.f32.mrf.mxu0
  %v3677 = vadd.f32 %v424, %v3676
  %3678 = vmatprep.mubr.bf16.mxu0 0
  %3679 = vmatmul.mubr.bf16.gmra.mxu0 %v1932
  %v3680 = vpop.f32.mrf.mxu0
  %v3681 = vadd.f32 %v420, %v3680
  %v3682 = vpop.f32.mrf.mxu0
  %v3683 = vadd.f32 %v424, %v3682
  %v3684 = vpop.f32.mrf.mxu0
  %v3685 = vadd.f32 %v420, %v3684
  %v3686 = vpop.f32.mrf.mxu0
  %v3687 = vadd.f32 %v424, %v3686
  %3688 = vmatprep.mubr.bf16.mxu0 0
  %3689 = vmatmul.mubr.bf16.gmra.mxu0 %v1935
  %v3690 = vpop.f32.mrf.mxu0
  %v3691 = vadd.f32 %v420, %v3690
  %v3692 = vpop.f32.mrf.mxu0
  %v3693 = vadd.f32 %v424, %v3692
  %v3694 = vpop.f32.mrf.mxu0
  %v3695 = vadd.f32 %v420, %v3694
  %v3696 = vpop.f32.mrf.mxu0
  %v3697 = vadd.f32 %v424, %v3696
  %3698 = vmatprep.mubr.bf16.mxu0 0
  %3699 = vmatmul.mubr.bf16.gmra.mxu0 %v1938
  %v3700 = vpop.f32.mrf.mxu0
  %v3701 = vadd.f32 %v420, %v3700
  %v3702 = vpop.f32.mrf.mxu0
  %v3703 = vadd.f32 %v424, %v3702
  %v3704 = vpop.f32.mrf.mxu0
  %v3705 = vadd.f32 %v420, %v3704
  %v3706 = vpop.f32.mrf.mxu0
  %v3707 = vadd.f32 %v424, %v3706
  %3708 = vmatprep.mubr.bf16.mxu0 0
  %3709 = vmatmul.mubr.bf16.gmra.mxu0 %v1941
  %v3710 = vpop.f32.mrf.mxu0
  %v3711 = vadd.f32 %v420, %v3710
  %v3712 = vpop.f32.mrf.mxu0
  %v3713 = vadd.f32 %v424, %v3712
  %v3714 = vpop.f32.mrf.mxu0
  %v3715 = vadd.f32 %v420, %v3714
  %v3716 = vpop.f32.mrf.mxu0
  %v3717 = vadd.f32 %v424, %v3716
  %3718 = vmatprep.mubr.bf16.mxu0 0
  %3719 = vmatmul.mubr.bf16.gmra.mxu0 %v1944
  %v3720 = vpop.f32.mrf.mxu0
  %v3721 = vadd.f32 %v420, %v3720
  %v3722 = vpop.f32.mrf.mxu0
  %v3723 = vadd.f32 %v424, %v3722
  %v3724 = vpop.f32.mrf.mxu0
  %v3725 = vadd.f32 %v420, %v3724
  %v3726 = vpop.f32.mrf.mxu0
  %v3727 = vadd.f32 %v424, %v3726
  %3728 = vmatprep.mubr.bf16.mxu0 0
  %3729 = vmatmul.mubr.bf16.gmra.mxu0 %v1947
  %v3730 = vpop.f32.mrf.mxu0
  %v3731 = vadd.f32 %v420, %v3730
  %v3732 = vpop.f32.mrf.mxu0
  %v3733 = vadd.f32 %v424, %v3732
  %v3734 = vpop.f32.mrf.mxu0
  %v3735 = vadd.f32 %v420, %v3734
  %v3736 = vpop.f32.mrf.mxu0
  %v3737 = vadd.f32 %v424, %v3736
  %3738 = vmatprep.mubr.bf16.mxu0 0
  %3739 = vmatmul.mubr.bf16.gmra.mxu0 %v1950
  %v3740 = vpop.f32.mrf.mxu0
  %v3741 = vadd.f32 %v420, %v3740
  %v3742 = vpop.f32.mrf.mxu0
  %v3743 = vadd.f32 %v424, %v3742
  %v3744 = vpop.f32.mrf.mxu0
  %v3745 = vadd.f32 %v420, %v3744
  %v3746 = vpop.f32.mrf.mxu0
  %v3747 = vadd.f32 %v424, %v3746
  %3748 = vmatprep.mubr.bf16.mxu0 0
  %3749 = vmatmul.mubr.bf16.gmra.mxu0 %v1953
  %v3750 = vpop.f32.mrf.mxu0
  %v3751 = vadd.f32 %v420, %v3750
  %v3752 = vpop.f32.mrf.mxu0
  %v3753 = vadd.f32 %v424, %v3752
  %v3754 = vpop.f32.mrf.mxu0
  %v3755 = vadd.f32 %v420, %v3754
  %v3756 = vpop.f32.mrf.mxu0
  %v3757 = vadd.f32 %v424, %v3756
  %3758 = vmatprep.mubr.bf16.mxu0 0
  %3759 = vmatmul.mubr.bf16.gmra.mxu0 %v1956
  %v3760 = vpop.f32.mrf.mxu0
  %v3761 = vadd.f32 %v420, %v3760
  %v3762 = vpop.f32.mrf.mxu0
  %v3763 = vadd.f32 %v424, %v3762
  %v3764 = vpop.f32.mrf.mxu0
  %v3765 = vadd.f32 %v420, %v3764
  %v3766 = vpop.f32.mrf.mxu0
  %v3767 = vadd.f32 %v424, %v3766
  %3768 = vmatprep.mubr.bf16.mxu0 0
  %3769 = vmatmul.mubr.bf16.gmra.mxu0 %v1959
  %v3770 = vpop.f32.mrf.mxu0
  %v3771 = vadd.f32 %v420, %v3770
  %v3772 = vpop.f32.mrf.mxu0
  %v3773 = vadd.f32 %v424, %v3772
  %v3774 = vpop.f32.mrf.mxu0
  %v3775 = vadd.f32 %v420, %v3774
  %v3776 = vpop.f32.mrf.mxu0
  %v3777 = vadd.f32 %v424, %v3776
  %3778 = vmatprep.mubr.bf16.mxu0 0
  %3779 = vmatmul.mubr.bf16.gmra.mxu0 %v1962
  %v3780 = vpop.f32.mrf.mxu0
  %v3781 = vadd.f32 %v420, %v3780
  %v3782 = vpop.f32.mrf.mxu0
  %v3783 = vadd.f32 %v424, %v3782
  %v3784 = vpop.f32.mrf.mxu0
  %v3785 = vadd.f32 %v420, %v3784
  %v3786 = vpop.f32.mrf.mxu0
  %v3787 = vadd.f32 %v424, %v3786
  %3788 = vmatprep.mubr.bf16.mxu0 0
  %3789 = vmatmul.mubr.bf16.gmra.mxu0 %v1965
  %v3790 = vpop.f32.mrf.mxu0
  %v3791 = vadd.f32 %v420, %v3790
  %v3792 = vpop.f32.mrf.mxu0
  %v3793 = vadd.f32 %v424, %v3792
  %v3794 = vpop.f32.mrf.mxu0
  %v3795 = vadd.f32 %v420, %v3794
  %v3796 = vpop.f32.mrf.mxu0
  %v3797 = vadd.f32 %v424, %v3796
  %3798 = vmatprep.mubr.bf16.mxu0 0
  %3799 = vmatmul.mubr.bf16.gmra.mxu0 %v1968
  %v3800 = vpop.f32.mrf.mxu0
  %v3801 = vadd.f32 %v420, %v3800
  %v3802 = vpop.f32.mrf.mxu0
  %v3803 = vadd.f32 %v424, %v3802
  %v3804 = vpop.f32.mrf.mxu0
  %v3805 = vadd.f32 %v420, %v3804
  %v3806 = vpop.f32.mrf.mxu0
  %v3807 = vadd.f32 %v424, %v3806
  %3808 = vmatprep.mubr.bf16.mxu0 0
  %3809 = vmatmul.mubr.bf16.gmra.mxu0 %v1971
  %v3810 = vpop.f32.mrf.mxu0
  %v3811 = vadd.f32 %v420, %v3810
  %v3812 = vpop.f32.mrf.mxu0
  %v3813 = vadd.f32 %v424, %v3812
  %v3814 = vpop.f32.mrf.mxu0
  %v3815 = vadd.f32 %v420, %v3814
  %v3816 = vpop.f32.mrf.mxu0
  %v3817 = vadd.f32 %v424, %v3816
  %3818 = vmatprep.mubr.bf16.mxu0 0
  %3819 = vmatmul.mubr.bf16.gmra.mxu0 %v1974
  %v3820 = vpop.f32.mrf.mxu0
  %v3821 = vadd.f32 %v420, %v3820
  %v3822 = vpop.f32.mrf.mxu0
  %v3823 = vadd.f32 %v424, %v3822
  %v3824 = vpop.f32.mrf.mxu0
  %v3825 = vadd.f32 %v420, %v3824
  %v3826 = vpop.f32.mrf.mxu0
  %v3827 = vadd.f32 %v424, %v3826
  %3828 = vmatprep.mubr.bf16.mxu0 0
  %3829 = vmatmul.mubr.bf16.gmra.mxu0 %v1977
  %v3830 = vpop.f32.mrf.mxu0
  %v3831 = vadd.f32 %v420, %v3830
  %v3832 = vpop.f32.mrf.mxu0
  %v3833 = vadd.f32 %v424, %v3832
  %v3834 = vpop.f32.mrf.mxu0
  %v3835 = vadd.f32 %v420, %v3834
  %v3836 = vpop.f32.mrf.mxu0
  %v3837 = vadd.f32 %v424, %v3836
  %3838 = vmatprep.mubr.bf16.mxu0 0
  %3839 = vmatmul.mubr.bf16.gmra.mxu0 %v1980
  %v3840 = vpop.f32.mrf.mxu0
  %v3841 = vadd.f32 %v420, %v3840
  %v3842 = vpop.f32.mrf.mxu0
  %v3843 = vadd.f32 %v424, %v3842
  %v3844 = vpop.f32.mrf.mxu0
  %v3845 = vadd.f32 %v420, %v3844
  %v3846 = vpop.f32.mrf.mxu0
  %v3847 = vadd.f32 %v424, %v3846
  %3848 = vmatprep.mubr.bf16.mxu0 0
  %3849 = vmatmul.mubr.bf16.gmra.mxu0 %v1983
  %v3850 = vpop.f32.mrf.mxu0
  %v3851 = vadd.f32 %v420, %v3850
  %v3852 = vpop.f32.mrf.mxu0
  %v3853 = vadd.f32 %v424, %v3852
  %v3854 = vpop.f32.mrf.mxu0
  %v3855 = vadd.f32 %v420, %v3854
  %v3856 = vpop.f32.mrf.mxu0
  %v3857 = vadd.f32 %v424, %v3856
  %3858 = vmatprep.mubr.bf16.mxu0 0
  %3859 = vmatmul.mubr.bf16.gmra.mxu0 %v1986
  %v3860 = vpop.f32.mrf.mxu0
  %v3861 = vadd.f32 %v420, %v3860
  %v3862 = vpop.f32.mrf.mxu0
  %v3863 = vadd.f32 %v424, %v3862
  %v3864 = vpop.f32.mrf.mxu0
  %v3865 = vadd.f32 %v420, %v3864
  %v3866 = vpop.f32.mrf.mxu0
  %v3867 = vadd.f32 %v424, %v3866
  %3868 = vmatprep.mubr.bf16.mxu0 0
  %3869 = vmatmul.mubr.bf16.gmra.mxu0 %v1989
  %v3870 = vpop.f32.mrf.mxu0
  %v3871 = vadd.f32 %v420, %v3870
  %v3872 = vpop.f32.mrf.mxu0
  %v3873 = vadd.f32 %v424, %v3872
  %v3874 = vpop.f32.mrf.mxu0
  %v3875 = vadd.f32 %v420, %v3874
  %v3876 = vpop.f32.mrf.mxu0
  %v3877 = vadd.f32 %v424, %v3876
  %3878 = vmatprep.mubr.bf16.mxu0 0
  %3879 = vmatmul.mubr.bf16.gmra.mxu0 %v1992
  %v3880 = vpop.f32.mrf.mxu0
  %v3881 = vadd.f32 %v420, %v3880
  %v3882 = vpop.f32.mrf.mxu0
  %v3883 = vadd.f32 %v424, %v3882
  %v3884 = vpop.f32.mrf.mxu0
  %v3885 = vadd.f32 %v420, %v3884
  %v3886 = vpop.f32.mrf.mxu0
  %v3887 = vadd.f32 %v424, %v3886
  %3888 = vmatprep.mubr.bf16.mxu0 0
  %3889 = vmatmul.mubr.bf16.gmra.mxu0 %v1995
  %v3890 = vpop.f32.mrf.mxu0
  %v3891 = vadd.f32 %v420, %v3890
  %v3892 = vpop.f32.mrf.mxu0
  %v3893 = vadd.f32 %v424, %v3892
  %v3894 = vpop.f32.mrf.mxu0
  %v3895 = vadd.f32 %v420, %v3894
  %v3896 = vpop.f32.mrf.mxu0
  %v3897 = vadd.f32 %v424, %v3896
  %3898 = vmatprep.mubr.bf16.mxu0 0
  %3899 = vmatmul.mubr.bf16.gmra.mxu0 %v1998
  %v3900 = vpop.f32.mrf.mxu0
  %v3901 = vadd.f32 %v420, %v3900
  %v3902 = vpop.f32.mrf.mxu0
  %v3903 = vadd.f32 %v424, %v3902
  %v3904 = vpop.f32.mrf.mxu0
  %v3905 = vadd.f32 %v420, %v3904
  %v3906 = vpop.f32.mrf.mxu0
  %v3907 = vadd.f32 %v424, %v3906
  %3908 = vmatprep.mubr.bf16.mxu0 0
  %3909 = vmatmul.mubr.bf16.gmra.mxu0 %v2001
  %v3910 = vpop.f32.mrf.mxu0
  %v3911 = vadd.f32 %v420, %v3910
  %v3912 = vpop.f32.mrf.mxu0
  %v3913 = vadd.f32 %v424, %v3912
  %v3914 = vpop.f32.mrf.mxu0
  %v3915 = vadd.f32 %v420, %v3914
  %v3916 = vpop.f32.mrf.mxu0
  %v3917 = vadd.f32 %v424, %v3916
  %3918 = vmatprep.mubr.bf16.mxu0 0
  %3919 = vmatmul.mubr.bf16.gmra.mxu0 %v2004
  %v3920 = vpop.f32.mrf.mxu0
  %v3921 = vadd.f32 %v420, %v3920
  %v3922 = vpop.f32.mrf.mxu0
  %v3923 = vadd.f32 %v424, %v3922
  %v3924 = vpop.f32.mrf.mxu0
  %v3925 = vadd.f32 %v420, %v3924
  %v3926 = vpop.f32.mrf.mxu0
  %v3927 = vadd.f32 %v424, %v3926
  %3928 = vmatprep.mubr.bf16.mxu0 0
  %3929 = vmatmul.mubr.bf16.gmra.mxu0 %v2007
  %v3930 = vpop.f32.mrf.mxu0
  %v3931 = vadd.f32 %v420, %v3930
  %v3932 = vpop.f32.mrf.mxu0
  %v3933 = vadd.f32 %v424, %v3932
  %v3934 = vpop.f32.mrf.mxu0
  %v3935 = vadd.f32 %v420, %v3934
  %v3936 = vpop.f32.mrf.mxu0
  %v3937 = vadd.f32 %v424, %v3936
  %3938 = vmatprep.mubr.bf16.mxu0 0
  %3939 = vmatmul.mubr.bf16.gmra.mxu0 %v2010
  %v3940 = vpop.f32.mrf.mxu0
  %v3941 = vadd.f32 %v420, %v3940
  %v3942 = vpop.f32.mrf.mxu0
  %v3943 = vadd.f32 %v424, %v3942
  %v3944 = vpop.f32.mrf.mxu0
  %v3945 = vadd.f32 %v420, %v3944
  %v3946 = vpop.f32.mrf.mxu0
  %v3947 = vadd.f32 %v424, %v3946
  %3948 = vmatprep.mubr.bf16.mxu0 0
  %3949 = vmatmul.mubr.bf16.gmra.mxu0 %v2013
  %v3950 = vpop.f32.mrf.mxu0
  %v3951 = vadd.f32 %v420, %v3950
  %v3952 = vpop.f32.mrf.mxu0
  %v3953 = vadd.f32 %v424, %v3952
  %v3954 = vpop.f32.mrf.mxu0
  %v3955 = vadd.f32 %v420, %v3954
  %v3956 = vpop.f32.mrf.mxu0
  %v3957 = vadd.f32 %v424, %v3956
  %3958 = vmatprep.mubr.bf16.mxu0 0
  %3959 = vmatmul.mubr.bf16.gmra.mxu0 %v2016
  %v3960 = vpop.f32.mrf.mxu0
  %v3961 = vadd.f32 %v420, %v3960
  %v3962 = vpop.f32.mrf.mxu0
  %v3963 = vadd.f32 %v424, %v3962
  %v3964 = vpop.f32.mrf.mxu0
  %v3965 = vadd.f32 %v420, %v3964
  %v3966 = vpop.f32.mrf.mxu0
  %v3967 = vadd.f32 %v424, %v3966
  %3968 = vmatprep.mubr.bf16.mxu0 0
  %3969 = vmatmul.mubr.bf16.gmra.mxu0 %v2019
  %v3970 = vpop.f32.mrf.mxu0
  %v3971 = vadd.f32 %v420, %v3970
  %v3972 = vpop.f32.mrf.mxu0
  %v3973 = vadd.f32 %v424, %v3972
  %v3974 = vpop.f32.mrf.mxu0
  %v3975 = vadd.f32 %v420, %v3974
  %v3976 = vpop.f32.mrf.mxu0
  %v3977 = vadd.f32 %v424, %v3976
  %3978 = vmatprep.mubr.bf16.mxu0 0
  %3979 = vmatmul.mubr.bf16.gmra.mxu0 %v2022
  %v3980 = vpop.f32.mrf.mxu0
  %v3981 = vadd.f32 %v420, %v3980
  %v3982 = vpop.f32.mrf.mxu0
  %v3983 = vadd.f32 %v424, %v3982
  %v3984 = vpop.f32.mrf.mxu0
  %v3985 = vadd.f32 %v420, %v3984
  %v3986 = vpop.f32.mrf.mxu0
  %v3987 = vadd.f32 %v424, %v3986
  %3988 = vmatprep.mubr.bf16.mxu0 0
  %3989 = vmatmul.mubr.bf16.gmra.mxu0 %v2025
  %v3990 = vpop.f32.mrf.mxu0
  %v3991 = vadd.f32 %v420, %v3990
  %v3992 = vpop.f32.mrf.mxu0
  %v3993 = vadd.f32 %v424, %v3992
  %v3994 = vpop.f32.mrf.mxu0
  %v3995 = vadd.f32 %v420, %v3994
  %v3996 = vpop.f32.mrf.mxu0
  %v3997 = vadd.f32 %v424, %v3996
  %3998 = vmatprep.mubr.bf16.mxu0 0
  %3999 = vmatmul.mubr.bf16.gmra.mxu0 %v2028
  %v4000 = vpop.f32.mrf.mxu0
  %v4001 = vadd.f32 %v420, %v4000
  %v4002 = vpop.f32.mrf.mxu0
  %v4003 = vadd.f32 %v424, %v4002
  %v4004 = vpop.f32.mrf.mxu0
  %v4005 = vadd.f32 %v420, %v4004
  %v4006 = vpop.f32.mrf.mxu0
  %v4007 = vadd.f32 %v424, %v4006
  %4008 = vmatprep.mubr.bf16.mxu0 0
  %4009 = vmatmul.mubr.bf16.gmra.mxu0 %v2031
  %v4010 = vpop.f32.mrf.mxu0
  %v4011 = vadd.f32 %v420, %v4010
  %v4012 = vpop.f32.mrf.mxu0
  %v4013 = vadd.f32 %v424, %v4012
  %v4014 = vpop.f32.mrf.mxu0
  %v4015 = vadd.f32 %v420, %v4014
  %v4016 = vpop.f32.mrf.mxu0
  %v4017 = vadd.f32 %v424, %v4016
  %4018 = vmatprep.mubr.bf16.mxu0 0
  %4019 = vmatmul.mubr.bf16.gmra.mxu0 %v2034
  %v4020 = vpop.f32.mrf.mxu0
  %v4021 = vadd.f32 %v420, %v4020
  %v4022 = vpop.f32.mrf.mxu0
  %v4023 = vadd.f32 %v424, %v4022
  %v4024 = vpop.f32.mrf.mxu0
  %v4025 = vadd.f32 %v420, %v4024
  %v4026 = vpop.f32.mrf.mxu0
  %v4027 = vadd.f32 %v424, %v4026
  %4028 = vdwg.mxu0
  %4029 = vst [vmem:[%s3] sm:$0xff] %v2071
  %4030 = vst.msk [vmem:[%s3 + $0x8] sm:$0xff] %vm1447, %v2073
  %4031 = vst [vmem:[%s3 + $0x10] sm:$0xff] %v2075
  %4032 = vst.msk [vmem:[%s3 + $0x18] sm:$0xff] %vm1447, %v2077
  %4033 = vst [vmem:[%s3 + $0x20] sm:$0xff] %v2081
  %4034 = vst.msk [vmem:[%s3 + $0x28] sm:$0xff] %vm1447, %v2083
  %4035 = vst [vmem:[%s3 + $0x30] sm:$0xff] %v2085
  %4036 = vst.msk [vmem:[%s3 + $0x38] sm:$0xff] %vm1447, %v2087
  %4037 = vst [vmem:[%s3 + $0x40] sm:$0xff] %v2091
  %4038 = vst.msk [vmem:[%s3 + $0x48] sm:$0xff] %vm1447, %v2093
  %4039 = vst [vmem:[%s3 + $0x50] sm:$0xff] %v2095
  %4040 = vst.msk [vmem:[%s3 + $0x58] sm:$0xff] %vm1447, %v2097
  %4041 = vst [vmem:[%s3 + $0x60] sm:$0xff] %v2101
  %4042 = vst.msk [vmem:[%s3 + $0x68] sm:$0xff] %vm1447, %v2103
  %4043 = vst [vmem:[%s3 + $0x70] sm:$0xff] %v2105
  %4044 = vst.msk [vmem:[%s3 + $0x78] sm:$0xff] %vm1447, %v2107
  %4045 = vst [vmem:[%s3 + $0x80] sm:$0xff] %v2111
  %4046 = vst.msk [vmem:[%s3 + $0x88] sm:$0xff] %vm1447, %v2113
  %4047 = vst [vmem:[%s3 + $0x90] sm:$0xff] %v2115
  %4048 = vst.msk [vmem:[%s3 + $0x98] sm:$0xff] %vm1447, %v2117
  %4049 = vst [vmem:[%s3 + $0xa0] sm:$0xff] %v2121
  %4050 = vst.msk [vmem:[%s3 + $0xa8] sm:$0xff] %vm1447, %v2123
  %4051 = vst [vmem:[%s3 + $0xb0] sm:$0xff] %v2125
  %4052 = vst.msk [vmem:[%s3 + $0xb8] sm:$0xff] %vm1447, %v2127
  %4053 = vst [vmem:[%s3 + $0xc0] sm:$0xff] %v2131
  %4054 = vst.msk [vmem:[%s3 + $0xc8] sm:$0xff] %vm1447, %v2133
  %4055 = vst [vmem:[%s3 + $0xd0] sm:$0xff] %v2135
  %4056 = vst.msk [vmem:[%s3 + $0xd8] sm:$0xff] %vm1447, %v2137
  %4057 = vst [vmem:[%s3 + $0xe0] sm:$0xff] %v2141
  %4058 = vst.msk [vmem:[%s3 + $0xe8] sm:$0xff] %vm1447, %v2143
  %4059 = vst [vmem:[%s3 + $0xf0] sm:$0xff] %v2145
  %4060 = vst.msk [vmem:[%s3 + $0xf8] sm:$0xff] %vm1447, %v2147
  %4061 = vst [vmem:[%s3 + $0x100] sm:$0xff] %v2151
  %4062 = vst.msk [vmem:[%s3 + $0x108] sm:$0xff] %vm1447, %v2153
  %4063 = vst [vmem:[%s3 + $0x110] sm:$0xff] %v2155
  %4064 = vst.msk [vmem:[%s3 + $0x118] sm:$0xff] %vm1447, %v2157
  %4065 = vst [vmem:[%s3 + $0x120] sm:$0xff] %v2161
  %4066 = vst.msk [vmem:[%s3 + $0x128] sm:$0xff] %vm1447, %v2163
  %4067 = vst [vmem:[%s3 + $0x130] sm:$0xff] %v2165
  %4068 = vst.msk [vmem:[%s3 + $0x138] sm:$0xff] %vm1447, %v2167
  %4069 = vst [vmem:[%s3 + $0x140] sm:$0xff] %v2171
  %4070 = vst.msk [vmem:[%s3 + $0x148] sm:$0xff] %vm1447, %v2173
  %4071 = vst [vmem:[%s3 + $0x150] sm:$0xff] %v2175
  %4072 = vst.msk [vmem:[%s3 + $0x158] sm:$0xff] %vm1447, %v2177
  %4073 = vst [vmem:[%s3 + $0x160] sm:$0xff] %v2181
  %4074 = vst.msk [vmem:[%s3 + $0x168] sm:$0xff] %vm1447, %v2183
  %4075 = vst [vmem:[%s3 + $0x170] sm:$0xff] %v2185
  %4076 = vst.msk [vmem:[%s3 + $0x178] sm:$0xff] %vm1447, %v2187
  %4077 = vst [vmem:[%s3 + $0x180] sm:$0xff] %v2191
  %4078 = vst.msk [vmem:[%s3 + $0x188] sm:$0xff] %vm1447, %v2193
  %4079 = vst [vmem:[%s3 + $0x190] sm:$0xff] %v2195
  %4080 = vst.msk [vmem:[%s3 + $0x198] sm:$0xff] %vm1447, %v2197
  %4081 = vst [vmem:[%s3 + $0x1a0] sm:$0xff] %v2201
  %4082 = vst.msk [vmem:[%s3 + $0x1a8] sm:$0xff] %vm1447, %v2203
  %4083 = vst [vmem:[%s3 + $0x1b0] sm:$0xff] %v2205
  %4084 = vst.msk [vmem:[%s3 + $0x1b8] sm:$0xff] %vm1447, %v2207
  %4085 = vst [vmem:[%s3 + $0x1c0] sm:$0xff] %v2211
  %4086 = vst.msk [vmem:[%s3 + $0x1c8] sm:$0xff] %vm1447, %v2213
  %4087 = vst [vmem:[%s3 + $0x1d0] sm:$0xff] %v2215
  %4088 = vst.msk [vmem:[%s3 + $0x1d8] sm:$0xff] %vm1447, %v2217
  %4089 = vst [vmem:[%s3 + $0x1e0] sm:$0xff] %v2221
  %4090 = vst.msk [vmem:[%s3 + $0x1e8] sm:$0xff] %vm1447, %v2223
  %4091 = vst [vmem:[%s3 + $0x1f0] sm:$0xff] %v2225
  %4092 = vst.msk [vmem:[%s3 + $0x1f8] sm:$0xff] %vm1447, %v2227
  %4093 = vst [vmem:[%s3 + $0x200] sm:$0xff] %v2231
  %4094 = vst.msk [vmem:[%s3 + $0x208] sm:$0xff] %vm1447, %v2233
  %4095 = vst [vmem:[%s3 + $0x210] sm:$0xff] %v2235
  %4096 = vst.msk [vmem:[%s3 + $0x218] sm:$0xff] %vm1447, %v2237
  %4097 = vst [vmem:[%s3 + $0x220] sm:$0xff] %v2241
  %4098 = vst.msk [vmem:[%s3 + $0x228] sm:$0xff] %vm1447, %v2243
  %4099 = vst [vmem:[%s3 + $0x230] sm:$0xff] %v2245
  %4100 = vst.msk [vmem:[%s3 + $0x238] sm:$0xff] %vm1447, %v2247
  %4101 = vst [vmem:[%s3 + $0x240] sm:$0xff] %v2251
  %4102 = vst.msk [vmem:[%s3 + $0x248] sm:$0xff] %vm1447, %v2253
  %4103 = vst [vmem:[%s3 + $0x250] sm:$0xff] %v2255
  %4104 = vst.msk [vmem:[%s3 + $0x258] sm:$0xff] %vm1447, %v2257
  %4105 = vst [vmem:[%s3 + $0x260] sm:$0xff] %v2261
  %4106 = vst.msk [vmem:[%s3 + $0x268] sm:$0xff] %vm1447, %v2263
  %4107 = vst [vmem:[%s3 + $0x270] sm:$0xff] %v2265
  %4108 = vst.msk [vmem:[%s3 + $0x278] sm:$0xff] %vm1447, %v2267
  %4109 = vst [vmem:[%s3 + $0x280] sm:$0xff] %v2271
  %4110 = vst.msk [vmem:[%s3 + $0x288] sm:$0xff] %vm1447, %v2273
  %4111 = vst [vmem:[%s3 + $0x290] sm:$0xff] %v2275
  %4112 = vst.msk [vmem:[%s3 + $0x298] sm:$0xff] %vm1447, %v2277
  %4113 = vst [vmem:[%s3 + $0x2a0] sm:$0xff] %v2281
  %4114 = vst.msk [vmem:[%s3 + $0x2a8] sm:$0xff] %vm1447, %v2283
  %4115 = vst [vmem:[%s3 + $0x2b0] sm:$0xff] %v2285
  %4116 = vst.msk [vmem:[%s3 + $0x2b8] sm:$0xff] %vm1447, %v2287
  %4117 = vst [vmem:[%s3 + $0x2c0] sm:$0xff] %v2291
  %4118 = vst.msk [vmem:[%s3 + $0x2c8] sm:$0xff] %vm1447, %v2293
  %4119 = vst [vmem:[%s3 + $0x2d0] sm:$0xff] %v2295
  %4120 = vst.msk [vmem:[%s3 + $0x2d8] sm:$0xff] %vm1447, %v2297
  %4121 = vst [vmem:[%s3 + $0x2e0] sm:$0xff] %v2301
  %4122 = vst.msk [vmem:[%s3 + $0x2e8] sm:$0xff] %vm1447, %v2303
  %4123 = vst [vmem:[%s3 + $0x2f0] sm:$0xff] %v2305
  %4124 = vst.msk [vmem:[%s3 + $0x2f8] sm:$0xff] %vm1447, %v2307
  %4125 = vst [vmem:[%s3 + $0x300] sm:$0xff] %v2311
  %4126 = vst.msk [vmem:[%s3 + $0x308] sm:$0xff] %vm1447, %v2313
  %4127 = vst [vmem:[%s3 + $0x310] sm:$0xff] %v2315
  %4128 = vst.msk [vmem:[%s3 + $0x318] sm:$0xff] %vm1447, %v2317
  %4129 = vst [vmem:[%s3 + $0x320] sm:$0xff] %v2321
  %4130 = vst.msk [vmem:[%s3 + $0x328] sm:$0xff] %vm1447, %v2323
  %4131 = vst [vmem:[%s3 + $0x330] sm:$0xff] %v2325
  %4132 = vst.msk [vmem:[%s3 + $0x338] sm:$0xff] %vm1447, %v2327
  %4133 = vst [vmem:[%s3 + $0x340] sm:$0xff] %v2331
  %4134 = vst.msk [vmem:[%s3 + $0x348] sm:$0xff] %vm1447, %v2333
  %4135 = vst [vmem:[%s3 + $0x350] sm:$0xff] %v2335
  %4136 = vst.msk [vmem:[%s3 + $0x358] sm:$0xff] %vm1447, %v2337
  %4137 = vst [vmem:[%s3 + $0x360] sm:$0xff] %v2341
  %4138 = vst.msk [vmem:[%s3 + $0x368] sm:$0xff] %vm1447, %v2343
  %4139 = vst [vmem:[%s3 + $0x370] sm:$0xff] %v2345
  %4140 = vst.msk [vmem:[%s3 + $0x378] sm:$0xff] %vm1447, %v2347
  %4141 = vst [vmem:[%s3 + $0x380] sm:$0xff] %v2351
  %4142 = vst.msk [vmem:[%s3 + $0x388] sm:$0xff] %vm1447, %v2353
  %4143 = vst [vmem:[%s3 + $0x390] sm:$0xff] %v2355
  %4144 = vst.msk [vmem:[%s3 + $0x398] sm:$0xff] %vm1447, %v2357
  %4145 = vst [vmem:[%s3 + $0x3a0] sm:$0xff] %v2361
  %4146 = vst.msk [vmem:[%s3 + $0x3a8] sm:$0xff] %vm1447, %v2363
  %4147 = vst [vmem:[%s3 + $0x3b0] sm:$0xff] %v2365
  %4148 = vst.msk [vmem:[%s3 + $0x3b8] sm:$0xff] %vm1447, %v2367
  %4149 = vst [vmem:[%s3 + $0x3c0] sm:$0xff] %v2371
  %4150 = vst.msk [vmem:[%s3 + $0x3c8] sm:$0xff] %vm1447, %v2373
  %4151 = vst [vmem:[%s3 + $0x3d0] sm:$0xff] %v2375
  %4152 = vst.msk [vmem:[%s3 + $0x3d8] sm:$0xff] %vm1447, %v2377
  %4153 = vst [vmem:[%s3 + $0x3e0] sm:$0xff] %v2381
  %4154 = vst.msk [vmem:[%s3 + $0x3e8] sm:$0xff] %vm1447, %v2383
  %4155 = vst [vmem:[%s3 + $0x3f0] sm:$0xff] %v2385
  %4156 = vst.msk [vmem:[%s3 + $0x3f8] sm:$0xff] %vm1447, %v2387
  %4157 = vst [vmem:[%s3 + $0x400] sm:$0xff] %v2391
  %4158 = vst.msk [vmem:[%s3 + $0x408] sm:$0xff] %vm1447, %v2393
  %4159 = vst [vmem:[%s3 + $0x410] sm:$0xff] %v2395
  %4160 = vst.msk [vmem:[%s3 + $0x418] sm:$0xff] %vm1447, %v2397
  %4161 = vst [vmem:[%s3 + $0x420] sm:$0xff] %v2401
  %4162 = vst.msk [vmem:[%s3 + $0x428] sm:$0xff] %vm1447, %v2403
  %4163 = vst [vmem:[%s3 + $0x430] sm:$0xff] %v2405
  %4164 = vst.msk [vmem:[%s3 + $0x438] sm:$0xff] %vm1447, %v2407
  %4165 = vst [vmem:[%s3 + $0x440] sm:$0xff] %v2411
  %4166 = vst.msk [vmem:[%s3 + $0x448] sm:$0xff] %vm1447, %v2413
  %4167 = vst [vmem:[%s3 + $0x450] sm:$0xff] %v2415
  %4168 = vst.msk [vmem:[%s3 + $0x458] sm:$0xff] %vm1447, %v2417
  %4169 = vst [vmem:[%s3 + $0x460] sm:$0xff] %v2421
  %4170 = vst.msk [vmem:[%s3 + $0x468] sm:$0xff] %vm1447, %v2423
  %4171 = vst [vmem:[%s3 + $0x470] sm:$0xff] %v2425
  %4172 = vst.msk [vmem:[%s3 + $0x478] sm:$0xff] %vm1447, %v2427
  %4173 = vst [vmem:[%s3 + $0x480] sm:$0xff] %v2431
  %4174 = vst.msk [vmem:[%s3 + $0x488] sm:$0xff] %vm1447, %v2433
  %4175 = vst [vmem:[%s3 + $0x490] sm:$0xff] %v2435
  %4176 = vst.msk [vmem:[%s3 + $0x498] sm:$0xff] %vm1447, %v2437
  %4177 = vst [vmem:[%s3 + $0x4a0] sm:$0xff] %v2441
  %4178 = vst.msk [vmem:[%s3 + $0x4a8] sm:$0xff] %vm1447, %v2443
  %4179 = vst [vmem:[%s3 + $0x4b0] sm:$0xff] %v2445
  %4180 = vst.msk [vmem:[%s3 + $0x4b8] sm:$0xff] %vm1447, %v2447
  %4181 = vst [vmem:[%s3 + $0x4c0] sm:$0xff] %v2451
  %4182 = vst.msk [vmem:[%s3 + $0x4c8] sm:$0xff] %vm1447, %v2453
  %4183 = vst [vmem:[%s3 + $0x4d0] sm:$0xff] %v2455
  %4184 = vst.msk [vmem:[%s3 + $0x4d8] sm:$0xff] %vm1447, %v2457
  %4185 = vst [vmem:[%s3 + $0x4e0] sm:$0xff] %v2461
  %4186 = vst.msk [vmem:[%s3 + $0x4e8] sm:$0xff] %vm1447, %v2463
  %4187 = vst [vmem:[%s3 + $0x4f0] sm:$0xff] %v2465
  %4188 = vst.msk [vmem:[%s3 + $0x4f8] sm:$0xff] %vm1447, %v2467
  %4189 = vst [vmem:[%s3 + $0x500] sm:$0xff] %v2471
  %4190 = vst.msk [vmem:[%s3 + $0x508] sm:$0xff] %vm1447, %v2473
  %4191 = vst [vmem:[%s3 + $0x510] sm:$0xff] %v2475
  %4192 = vst.msk [vmem:[%s3 + $0x518] sm:$0xff] %vm1447, %v2477
  %4193 = vst [vmem:[%s3 + $0x520] sm:$0xff] %v2481
  %4194 = vst.msk [vmem:[%s3 + $0x528] sm:$0xff] %vm1447, %v2483
  %4195 = vst [vmem:[%s3 + $0x530] sm:$0xff] %v2485
  %4196 = vst.msk [vmem:[%s3 + $0x538] sm:$0xff] %vm1447, %v2487
  %4197 = vst [vmem:[%s3 + $0x540] sm:$0xff] %v2491
  %4198 = vst.msk [vmem:[%s3 + $0x548] sm:$0xff] %vm1447, %v2493
  %4199 = vst [vmem:[%s3 + $0x550] sm:$0xff] %v2495
  %4200 = vst.msk [vmem:[%s3 + $0x558] sm:$0xff] %vm1447, %v2497
  %4201 = vst [vmem:[%s3 + $0x560] sm:$0xff] %v2501
  %4202 = vst.msk [vmem:[%s3 + $0x568] sm:$0xff] %vm1447, %v2503
  %4203 = vst [vmem:[%s3 + $0x570] sm:$0xff] %v2505
  %4204 = vst.msk [vmem:[%s3 + $0x578] sm:$0xff] %vm1447, %v2507
  %4205 = vst [vmem:[%s3 + $0x580] sm:$0xff] %v2511
  %4206 = vst.msk [vmem:[%s3 + $0x588] sm:$0xff] %vm1447, %v2513
  %4207 = vst [vmem:[%s3 + $0x590] sm:$0xff] %v2515
  %4208 = vst.msk [vmem:[%s3 + $0x598] sm:$0xff] %vm1447, %v2517
  %4209 = vst [vmem:[%s3 + $0x5a0] sm:$0xff] %v2521
  %4210 = vst.msk [vmem:[%s3 + $0x5a8] sm:$0xff] %vm1447, %v2523
  %4211 = vst [vmem:[%s3 + $0x5b0] sm:$0xff] %v2525
  %4212 = vst.msk [vmem:[%s3 + $0x5b8] sm:$0xff] %vm1447, %v2527
  %4213 = vst [vmem:[%s3 + $0x5c0] sm:$0xff] %v2531
  %4214 = vst.msk [vmem:[%s3 + $0x5c8] sm:$0xff] %vm1447, %v2533
  %4215 = vst [vmem:[%s3 + $0x5d0] sm:$0xff] %v2535
  %4216 = vst.msk [vmem:[%s3 + $0x5d8] sm:$0xff] %vm1447, %v2537
  %4217 = vst [vmem:[%s3 + $0x5e0] sm:$0xff] %v2541
  %4218 = vst.msk [vmem:[%s3 + $0x5e8] sm:$0xff] %vm1447, %v2543
  %4219 = vst [vmem:[%s3 + $0x5f0] sm:$0xff] %v2545
  %4220 = vst.msk [vmem:[%s3 + $0x5f8] sm:$0xff] %vm1447, %v2547
  %4221 = vst [vmem:[%s3 + $0x600] sm:$0xff] %v2551
  %4222 = vst.msk [vmem:[%s3 + $0x608] sm:$0xff] %vm1447, %v2553
  %4223 = vst [vmem:[%s3 + $0x610] sm:$0xff] %v2555
  %4224 = vst.msk [vmem:[%s3 + $0x618] sm:$0xff] %vm1447, %v2557
  %4225 = vst [vmem:[%s3 + $0x620] sm:$0xff] %v2561
  %4226 = vst.msk [vmem:[%s3 + $0x628] sm:$0xff] %vm1447, %v2563
  %4227 = vst [vmem:[%s3 + $0x630] sm:$0xff] %v2565
  %4228 = vst.msk [vmem:[%s3 + $0x638] sm:$0xff] %vm1447, %v2567
  %4229 = vst [vmem:[%s3 + $0x640] sm:$0xff] %v2571
  %4230 = vst.msk [vmem:[%s3 + $0x648] sm:$0xff] %vm1447, %v2573
  %4231 = vst [vmem:[%s3 + $0x650] sm:$0xff] %v2575
  %4232 = vst.msk [vmem:[%s3 + $0x658] sm:$0xff] %vm1447, %v2577
  %4233 = vst [vmem:[%s3 + $0x660] sm:$0xff] %v2581
  %4234 = vst.msk [vmem:[%s3 + $0x668] sm:$0xff] %vm1447, %v2583
  %4235 = vst [vmem:[%s3 + $0x670] sm:$0xff] %v2585
  %4236 = vst.msk [vmem:[%s3 + $0x678] sm:$0xff] %vm1447, %v2587
  %4237 = vst [vmem:[%s3 + $0x680] sm:$0xff] %v2591
  %4238 = vst.msk [vmem:[%s3 + $0x688] sm:$0xff] %vm1447, %v2593
  %4239 = vst [vmem:[%s3 + $0x690] sm:$0xff] %v2595
  %4240 = vst.msk [vmem:[%s3 + $0x698] sm:$0xff] %vm1447, %v2597
  %4241 = vst [vmem:[%s3 + $0x6a0] sm:$0xff] %v2601
  %4242 = vst.msk [vmem:[%s3 + $0x6a8] sm:$0xff] %vm1447, %v2603
  %4243 = vst [vmem:[%s3 + $0x6b0] sm:$0xff] %v2605
  %4244 = vst.msk [vmem:[%s3 + $0x6b8] sm:$0xff] %vm1447, %v2607
  %4245 = vst [vmem:[%s3 + $0x6c0] sm:$0xff] %v2611
  %4246 = vst.msk [vmem:[%s3 + $0x6c8] sm:$0xff] %vm1447, %v2613
  %4247 = vst [vmem:[%s3 + $0x6d0] sm:$0xff] %v2615
  %4248 = vst.msk [vmem:[%s3 + $0x6d8] sm:$0xff] %vm1447, %v2617
  %4249 = vst [vmem:[%s3 + $0x6e0] sm:$0xff] %v2621
  %4250 = vst.msk [vmem:[%s3 + $0x6e8] sm:$0xff] %vm1447, %v2623
  %4251 = vst [vmem:[%s3 + $0x6f0] sm:$0xff] %v2625
  %4252 = vst.msk [vmem:[%s3 + $0x6f8] sm:$0xff] %vm1447, %v2627
  %4253 = vst [vmem:[%s3 + $0x700] sm:$0xff] %v2631
  %4254 = vst.msk [vmem:[%s3 + $0x708] sm:$0xff] %vm1447, %v2633
  %4255 = vst [vmem:[%s3 + $0x710] sm:$0xff] %v2635
  %4256 = vst.msk [vmem:[%s3 + $0x718] sm:$0xff] %vm1447, %v2637
  %4257 = vst [vmem:[%s3 + $0x720] sm:$0xff] %v2641
  %4258 = vst.msk [vmem:[%s3 + $0x728] sm:$0xff] %vm1447, %v2643
  %4259 = vst [vmem:[%s3 + $0x730] sm:$0xff] %v2645
  %4260 = vst.msk [vmem:[%s3 + $0x738] sm:$0xff] %vm1447, %v2647
  %4261 = vst [vmem:[%s3 + $0x740] sm:$0xff] %v2651
  %4262 = vst.msk [vmem:[%s3 + $0x748] sm:$0xff] %vm1447, %v2653
  %4263 = vst [vmem:[%s3 + $0x750] sm:$0xff] %v2655
  %4264 = vst.msk [vmem:[%s3 + $0x758] sm:$0xff] %vm1447, %v2657
  %4265 = vst [vmem:[%s3 + $0x760] sm:$0xff] %v2661
  %4266 = vst.msk [vmem:[%s3 + $0x768] sm:$0xff] %vm1447, %v2663
  %4267 = vst [vmem:[%s3 + $0x770] sm:$0xff] %v2665
  %4268 = vst.msk [vmem:[%s3 + $0x778] sm:$0xff] %vm1447, %v2667
  %4269 = vst [vmem:[%s3 + $0x780] sm:$0xff] %v2671
  %4270 = vst.msk [vmem:[%s3 + $0x788] sm:$0xff] %vm1447, %v2673
  %4271 = vst [vmem:[%s3 + $0x790] sm:$0xff] %v2675
  %4272 = vst.msk [vmem:[%s3 + $0x798] sm:$0xff] %vm1447, %v2677
  %4273 = vst [vmem:[%s3 + $0x7a0] sm:$0xff] %v2681
  %4274 = vst.msk [vmem:[%s3 + $0x7a8] sm:$0xff] %vm1447, %v2683
  %4275 = vst [vmem:[%s3 + $0x7b0] sm:$0xff] %v2685
  %4276 = vst.msk [vmem:[%s3 + $0x7b8] sm:$0xff] %vm1447, %v2687
  %4277 = vst [vmem:[%s3 + $0x7c0] sm:$0xff] %v2691
  %4278 = vst.msk [vmem:[%s3 + $0x7c8] sm:$0xff] %vm1447, %v2693
  %4279 = vst [vmem:[%s3 + $0x7d0] sm:$0xff] %v2695
  %4280 = vst.msk [vmem:[%s3 + $0x7d8] sm:$0xff] %vm1447, %v2697
  %4281 = vst [vmem:[%s3 + $0x7e0] sm:$0xff] %v2701
  %4282 = vst.msk [vmem:[%s3 + $0x7e8] sm:$0xff] %vm1447, %v2703
  %4283 = vst [vmem:[%s3 + $0x7f0] sm:$0xff] %v2705
  %4284 = vst.msk [vmem:[%s3 + $0x7f8] sm:$0xff] %vm1447, %v2707
  %4285 = vst [vmem:[%s3 + $0x800] sm:$0xff] %v2711
  %4286 = vst.msk [vmem:[%s3 + $0x808] sm:$0xff] %vm1447, %v2713
  %4287 = vst [vmem:[%s3 + $0x810] sm:$0xff] %v2715
  %4288 = vst.msk [vmem:[%s3 + $0x818] sm:$0xff] %vm1447, %v2717
  %4289 = vst [vmem:[%s3 + $0x820] sm:$0xff] %v2721
  %4290 = vst.msk [vmem:[%s3 + $0x828] sm:$0xff] %vm1447, %v2723
  %4291 = vst [vmem:[%s3 + $0x830] sm:$0xff] %v2725
  %4292 = vst.msk [vmem:[%s3 + $0x838] sm:$0xff] %vm1447, %v2727
  %4293 = vst [vmem:[%s3 + $0x840] sm:$0xff] %v2731
  %4294 = vst.msk [vmem:[%s3 + $0x848] sm:$0xff] %vm1447, %v2733
  %4295 = vst [vmem:[%s3 + $0x850] sm:$0xff] %v2735
  %4296 = vst.msk [vmem:[%s3 + $0x858] sm:$0xff] %vm1447, %v2737
  %4297 = vst [vmem:[%s3 + $0x860] sm:$0xff] %v2741
  %4298 = vst.msk [vmem:[%s3 + $0x868] sm:$0xff] %vm1447, %v2743
  %4299 = vst [vmem:[%s3 + $0x870] sm:$0xff] %v2745
  %4300 = vst.msk [vmem:[%s3 + $0x878] sm:$0xff] %vm1447, %v2747
  %4301 = vst [vmem:[%s3 + $0x880] sm:$0xff] %v2751
  %4302 = vst.msk [vmem:[%s3 + $0x888] sm:$0xff] %vm1447, %v2753
  %4303 = vst [vmem:[%s3 + $0x890] sm:$0xff] %v2755
  %4304 = vst.msk [vmem:[%s3 + $0x898] sm:$0xff] %vm1447, %v2757
  %4305 = vst [vmem:[%s3 + $0x8a0] sm:$0xff] %v2761
  %4306 = vst.msk [vmem:[%s3 + $0x8a8] sm:$0xff] %vm1447, %v2763
  %4307 = vst [vmem:[%s3 + $0x8b0] sm:$0xff] %v2765
  %4308 = vst.msk [vmem:[%s3 + $0x8b8] sm:$0xff] %vm1447, %v2767
  %4309 = vst [vmem:[%s3 + $0x8c0] sm:$0xff] %v2771
  %4310 = vst.msk [vmem:[%s3 + $0x8c8] sm:$0xff] %vm1447, %v2773
  %4311 = vst [vmem:[%s3 + $0x8d0] sm:$0xff] %v2775
  %4312 = vst.msk [vmem:[%s3 + $0x8d8] sm:$0xff] %vm1447, %v2777
  %4313 = vst [vmem:[%s3 + $0x8e0] sm:$0xff] %v2781
  %4314 = vst.msk [vmem:[%s3 + $0x8e8] sm:$0xff] %vm1447, %v2783
  %4315 = vst [vmem:[%s3 + $0x8f0] sm:$0xff] %v2785
  %4316 = vst.msk [vmem:[%s3 + $0x8f8] sm:$0xff] %vm1447, %v2787
  %4317 = vst [vmem:[%s3 + $0x900] sm:$0xff] %v2791
  %4318 = vst.msk [vmem:[%s3 + $0x908] sm:$0xff] %vm1447, %v2793
  %4319 = vst [vmem:[%s3 + $0x910] sm:$0xff] %v2795
  %4320 = vst.msk [vmem:[%s3 + $0x918] sm:$0xff] %vm1447, %v2797
  %4321 = vst [vmem:[%s3 + $0x920] sm:$0xff] %v2801
  %4322 = vst.msk [vmem:[%s3 + $0x928] sm:$0xff] %vm1447, %v2803
  %4323 = vst [vmem:[%s3 + $0x930] sm:$0xff] %v2805
  %4324 = vst.msk [vmem:[%s3 + $0x938] sm:$0xff] %vm1447, %v2807
  %4325 = vst [vmem:[%s3 + $0x940] sm:$0xff] %v2811
  %4326 = vst.msk [vmem:[%s3 + $0x948] sm:$0xff] %vm1447, %v2813
  %4327 = vst [vmem:[%s3 + $0x950] sm:$0xff] %v2815
  %4328 = vst.msk [vmem:[%s3 + $0x958] sm:$0xff] %vm1447, %v2817
  %4329 = vst [vmem:[%s3 + $0x960] sm:$0xff] %v2821
  %4330 = vst.msk [vmem:[%s3 + $0x968] sm:$0xff] %vm1447, %v2823
  %4331 = vst [vmem:[%s3 + $0x970] sm:$0xff] %v2825
  %4332 = vst.msk [vmem:[%s3 + $0x978] sm:$0xff] %vm1447, %v2827
  %4333 = vst [vmem:[%s3 + $0x980] sm:$0xff] %v2831
  %4334 = vst.msk [vmem:[%s3 + $0x988] sm:$0xff] %vm1447, %v2833
  %4335 = vst [vmem:[%s3 + $0x990] sm:$0xff] %v2835
  %4336 = vst.msk [vmem:[%s3 + $0x998] sm:$0xff] %vm1447, %v2837
  %4337 = vst [vmem:[%s3 + $0x9a0] sm:$0xff] %v2841
  %4338 = vst.msk [vmem:[%s3 + $0x9a8] sm:$0xff] %vm1447, %v2843
  %4339 = vst [vmem:[%s3 + $0x9b0] sm:$0xff] %v2845
  %4340 = vst.msk [vmem:[%s3 + $0x9b8] sm:$0xff] %vm1447, %v2847
  %4341 = vst [vmem:[%s3 + $0x9c0] sm:$0xff] %v2851
  %4342 = vst.msk [vmem:[%s3 + $0x9c8] sm:$0xff] %vm1447, %v2853
  %4343 = vst [vmem:[%s3 + $0x9d0] sm:$0xff] %v2855
  %4344 = vst.msk [vmem:[%s3 + $0x9d8] sm:$0xff] %vm1447, %v2857
  %4345 = vst [vmem:[%s3 + $0x9e0] sm:$0xff] %v2861
  %4346 = vst.msk [vmem:[%s3 + $0x9e8] sm:$0xff] %vm1447, %v2863
  %4347 = vst [vmem:[%s3 + $0x9f0] sm:$0xff] %v2865
  %4348 = vst.msk [vmem:[%s3 + $0x9f8] sm:$0xff] %vm1447, %v2867
  %4349 = vst [vmem:[%s3 + $0xa00] sm:$0xff] %v2871
  %4350 = vst.msk [vmem:[%s3 + $0xa08] sm:$0xff] %vm1447, %v2873
  %4351 = vst [vmem:[%s3 + $0xa10] sm:$0xff] %v2875
  %4352 = vst.msk [vmem:[%s3 + $0xa18] sm:$0xff] %vm1447, %v2877
  %4353 = vst [vmem:[%s3 + $0xa20] sm:$0xff] %v2881
  %4354 = vst.msk [vmem:[%s3 + $0xa28] sm:$0xff] %vm1447, %v2883
  %4355 = vst [vmem:[%s3 + $0xa30] sm:$0xff] %v2885
  %4356 = vst.msk [vmem:[%s3 + $0xa38] sm:$0xff] %vm1447, %v2887
  %4357 = vst [vmem:[%s3 + $0xa40] sm:$0xff] %v2891
  %4358 = vst.msk [vmem:[%s3 + $0xa48] sm:$0xff] %vm1447, %v2893
  %4359 = vst [vmem:[%s3 + $0xa50] sm:$0xff] %v2895
  %4360 = vst.msk [vmem:[%s3 + $0xa58] sm:$0xff] %vm1447, %v2897
  %4361 = vst [vmem:[%s3 + $0xa60] sm:$0xff] %v2901
  %4362 = vst.msk [vmem:[%s3 + $0xa68] sm:$0xff] %vm1447, %v2903
  %4363 = vst [vmem:[%s3 + $0xa70] sm:$0xff] %v2905
  %4364 = vst.msk [vmem:[%s3 + $0xa78] sm:$0xff] %vm1447, %v2907
  %4365 = vst [vmem:[%s3 + $0xa80] sm:$0xff] %v2911
  %4366 = vst.msk [vmem:[%s3 + $0xa88] sm:$0xff] %vm1447, %v2913
  %4367 = vst [vmem:[%s3 + $0xa90] sm:$0xff] %v2915
  %4368 = vst.msk [vmem:[%s3 + $0xa98] sm:$0xff] %vm1447, %v2917
  %4369 = vst [vmem:[%s3 + $0xaa0] sm:$0xff] %v2921
  %4370 = vst.msk [vmem:[%s3 + $0xaa8] sm:$0xff] %vm1447, %v2923
  %4371 = vst [vmem:[%s3 + $0xab0] sm:$0xff] %v2925
  %4372 = vst.msk [vmem:[%s3 + $0xab8] sm:$0xff] %vm1447, %v2927
  %4373 = vst [vmem:[%s3 + $0xac0] sm:$0xff] %v2931
  %4374 = vst.msk [vmem:[%s3 + $0xac8] sm:$0xff] %vm1447, %v2933
  %4375 = vst [vmem:[%s3 + $0xad0] sm:$0xff] %v2935
  %4376 = vst.msk [vmem:[%s3 + $0xad8] sm:$0xff] %vm1447, %v2937
  %4377 = vst [vmem:[%s3 + $0xae0] sm:$0xff] %v2941
  %4378 = vst.msk [vmem:[%s3 + $0xae8] sm:$0xff] %vm1447, %v2943
  %4379 = vst [vmem:[%s3 + $0xaf0] sm:$0xff] %v2945
  %4380 = vst.msk [vmem:[%s3 + $0xaf8] sm:$0xff] %vm1447, %v2947
  %4381 = vst [vmem:[%s3 + $0xb00] sm:$0xff] %v2951
  %4382 = vst.msk [vmem:[%s3 + $0xb08] sm:$0xff] %vm1447, %v2953
  %4383 = vst [vmem:[%s3 + $0xb10] sm:$0xff] %v2955
  %4384 = vst.msk [vmem:[%s3 + $0xb18] sm:$0xff] %vm1447, %v2957
  %4385 = vst [vmem:[%s3 + $0xb20] sm:$0xff] %v2961
  %4386 = vst.msk [vmem:[%s3 + $0xb28] sm:$0xff] %vm1447, %v2963
  %4387 = vst [vmem:[%s3 + $0xb30] sm:$0xff] %v2965
  %4388 = vst.msk [vmem:[%s3 + $0xb38] sm:$0xff] %vm1447, %v2967
  %4389 = vst [vmem:[%s3 + $0xb40] sm:$0xff] %v2971
  %4390 = vst.msk [vmem:[%s3 + $0xb48] sm:$0xff] %vm1447, %v2973
  %4391 = vst [vmem:[%s3 + $0xb50] sm:$0xff] %v2975
  %4392 = vst.msk [vmem:[%s3 + $0xb58] sm:$0xff] %vm1447, %v2977
  %4393 = vst [vmem:[%s3 + $0xb60] sm:$0xff] %v2981
  %4394 = vst.msk [vmem:[%s3 + $0xb68] sm:$0xff] %vm1447, %v2983
  %4395 = vst [vmem:[%s3 + $0xb70] sm:$0xff] %v2985
  %4396 = vst.msk [vmem:[%s3 + $0xb78] sm:$0xff] %vm1447, %v2987
  %4397 = vst [vmem:[%s3 + $0xb80] sm:$0xff] %v2991
  %4398 = vst.msk [vmem:[%s3 + $0xb88] sm:$0xff] %vm1447, %v2993
  %4399 = vst [vmem:[%s3 + $0xb90] sm:$0xff] %v2995
  %4400 = vst.msk [vmem:[%s3 + $0xb98] sm:$0xff] %vm1447, %v2997
  %4401 = vst [vmem:[%s3 + $0xba0] sm:$0xff] %v3001
  %4402 = vst.msk [vmem:[%s3 + $0xba8] sm:$0xff] %vm1447, %v3003
  %4403 = vst [vmem:[%s3 + $0xbb0] sm:$0xff] %v3005
  %4404 = vst.msk [vmem:[%s3 + $0xbb8] sm:$0xff] %vm1447, %v3007
  %4405 = vst [vmem:[%s3 + $0xbc0] sm:$0xff] %v3011
  %4406 = vst.msk [vmem:[%s3 + $0xbc8] sm:$0xff] %vm1447, %v3013
  %4407 = vst [vmem:[%s3 + $0xbd0] sm:$0xff] %v3015
  %4408 = vst.msk [vmem:[%s3 + $0xbd8] sm:$0xff] %vm1447, %v3017
  %4409 = vst [vmem:[%s3 + $0xbe0] sm:$0xff] %v3021
  %4410 = vst.msk [vmem:[%s3 + $0xbe8] sm:$0xff] %vm1447, %v3023
  %4411 = vst [vmem:[%s3 + $0xbf0] sm:$0xff] %v3025
  %4412 = vst.msk [vmem:[%s3 + $0xbf8] sm:$0xff] %vm1447, %v3027
  %4413 = vst [vmem:[%s3 + $0xc00] sm:$0xff] %v3031
  %4414 = vst.msk [vmem:[%s3 + $0xc08] sm:$0xff] %vm1447, %v3033
  %4415 = vst [vmem:[%s3 + $0xc10] sm:$0xff] %v3035
  %4416 = vst.msk [vmem:[%s3 + $0xc18] sm:$0xff] %vm1447, %v3037
  %4417 = vst [vmem:[%s3 + $0xc20] sm:$0xff] %v3041
  %4418 = vst.msk [vmem:[%s3 + $0xc28] sm:$0xff] %vm1447, %v3043
  %4419 = vst [vmem:[%s3 + $0xc30] sm:$0xff] %v3045
  %4420 = vst.msk [vmem:[%s3 + $0xc38] sm:$0xff] %vm1447, %v3047
  %4421 = vst [vmem:[%s3 + $0xc40] sm:$0xff] %v3051
  %4422 = vst.msk [vmem:[%s3 + $0xc48] sm:$0xff] %vm1447, %v3053
  %4423 = vst [vmem:[%s3 + $0xc50] sm:$0xff] %v3055
  %4424 = vst.msk [vmem:[%s3 + $0xc58] sm:$0xff] %vm1447, %v3057
  %4425 = vst [vmem:[%s3 + $0xc60] sm:$0xff] %v3061
  %4426 = vst.msk [vmem:[%s3 + $0xc68] sm:$0xff] %vm1447, %v3063
  %4427 = vst [vmem:[%s3 + $0xc70] sm:$0xff] %v3065
  %4428 = vst.msk [vmem:[%s3 + $0xc78] sm:$0xff] %vm1447, %v3067
  %4429 = vst [vmem:[%s3 + $0xc80] sm:$0xff] %v3071
  %4430 = vst.msk [vmem:[%s3 + $0xc88] sm:$0xff] %vm1447, %v3073
  %4431 = vst [vmem:[%s3 + $0xc90] sm:$0xff] %v3075
  %4432 = vst.msk [vmem:[%s3 + $0xc98] sm:$0xff] %vm1447, %v3077
  %4433 = vst [vmem:[%s3 + $0xca0] sm:$0xff] %v3081
  %4434 = vst.msk [vmem:[%s3 + $0xca8] sm:$0xff] %vm1447, %v3083
  %4435 = vst [vmem:[%s3 + $0xcb0] sm:$0xff] %v3085
  %4436 = vst.msk [vmem:[%s3 + $0xcb8] sm:$0xff] %vm1447, %v3087
  %4437 = vst [vmem:[%s3 + $0xcc0] sm:$0xff] %v3091
  %4438 = vst.msk [vmem:[%s3 + $0xcc8] sm:$0xff] %vm1447, %v3093
  %4439 = vst [vmem:[%s3 + $0xcd0] sm:$0xff] %v3095
  %4440 = vst.msk [vmem:[%s3 + $0xcd8] sm:$0xff] %vm1447, %v3097
  %4441 = vst [vmem:[%s3 + $0xce0] sm:$0xff] %v3101
  %4442 = vst.msk [vmem:[%s3 + $0xce8] sm:$0xff] %vm1447, %v3103
  %4443 = vst [vmem:[%s3 + $0xcf0] sm:$0xff] %v3105
  %4444 = vst.msk [vmem:[%s3 + $0xcf8] sm:$0xff] %vm1447, %v3107
  %4445 = vst [vmem:[%s3 + $0xd00] sm:$0xff] %v3111
  %4446 = vst.msk [vmem:[%s3 + $0xd08] sm:$0xff] %vm1447, %v3113
  %4447 = vst [vmem:[%s3 + $0xd10] sm:$0xff] %v3115
  %4448 = vst.msk [vmem:[%s3 + $0xd18] sm:$0xff] %vm1447, %v3117
  %4449 = vst [vmem:[%s3 + $0xd20] sm:$0xff] %v3121
  %4450 = vst.msk [vmem:[%s3 + $0xd28] sm:$0xff] %vm1447, %v3123
  %4451 = vst [vmem:[%s3 + $0xd30] sm:$0xff] %v3125
  %4452 = vst.msk [vmem:[%s3 + $0xd38] sm:$0xff] %vm1447, %v3127
  %4453 = vst [vmem:[%s3 + $0xd40] sm:$0xff] %v3131
  %4454 = vst.msk [vmem:[%s3 + $0xd48] sm:$0xff] %vm1447, %v3133
  %4455 = vst [vmem:[%s3 + $0xd50] sm:$0xff] %v3135
  %4456 = vst.msk [vmem:[%s3 + $0xd58] sm:$0xff] %vm1447, %v3137
  %4457 = vst [vmem:[%s3 + $0xd60] sm:$0xff] %v3141
  %4458 = vst.msk [vmem:[%s3 + $0xd68] sm:$0xff] %vm1447, %v3143
  %4459 = vst [vmem:[%s3 + $0xd70] sm:$0xff] %v3145
  %4460 = vst.msk [vmem:[%s3 + $0xd78] sm:$0xff] %vm1447, %v3147
  %4461 = vst [vmem:[%s3 + $0xd80] sm:$0xff] %v3151
  %4462 = vst.msk [vmem:[%s3 + $0xd88] sm:$0xff] %vm1447, %v3153
  %4463 = vst [vmem:[%s3 + $0xd90] sm:$0xff] %v3155
  %4464 = vst.msk [vmem:[%s3 + $0xd98] sm:$0xff] %vm1447, %v3157
  %4465 = vst [vmem:[%s3 + $0xda0] sm:$0xff] %v3161
  %4466 = vst.msk [vmem:[%s3 + $0xda8] sm:$0xff] %vm1447, %v3163
  %4467 = vst [vmem:[%s3 + $0xdb0] sm:$0xff] %v3165
  %4468 = vst.msk [vmem:[%s3 + $0xdb8] sm:$0xff] %vm1447, %v3167
  %4469 = vst [vmem:[%s3 + $0xdc0] sm:$0xff] %v3171
  %4470 = vst.msk [vmem:[%s3 + $0xdc8] sm:$0xff] %vm1447, %v3173
  %4471 = vst [vmem:[%s3 + $0xdd0] sm:$0xff] %v3175
  %4472 = vst.msk [vmem:[%s3 + $0xdd8] sm:$0xff] %vm1447, %v3177
  %4473 = vst [vmem:[%s3 + $0xde0] sm:$0xff] %v3181
  %4474 = vst.msk [vmem:[%s3 + $0xde8] sm:$0xff] %vm1447, %v3183
  %4475 = vst [vmem:[%s3 + $0xdf0] sm:$0xff] %v3185
  %4476 = vst.msk [vmem:[%s3 + $0xdf8] sm:$0xff] %vm1447, %v3187
  %4477 = vst [vmem:[%s3 + $0xe00] sm:$0xff] %v3191
  %4478 = vst.msk [vmem:[%s3 + $0xe08] sm:$0xff] %vm1447, %v3193
  %4479 = vst [vmem:[%s3 + $0xe10] sm:$0xff] %v3195
  %4480 = vst.msk [vmem:[%s3 + $0xe18] sm:$0xff] %vm1447, %v3197
  %4481 = vst [vmem:[%s3 + $0xe20] sm:$0xff] %v3201
  %4482 = vst.msk [vmem:[%s3 + $0xe28] sm:$0xff] %vm1447, %v3203
  %4483 = vst [vmem:[%s3 + $0xe30] sm:$0xff] %v3205
  %4484 = vst.msk [vmem:[%s3 + $0xe38] sm:$0xff] %vm1447, %v3207
  %4485 = vst [vmem:[%s3 + $0xe40] sm:$0xff] %v3211
  %4486 = vst.msk [vmem:[%s3 + $0xe48] sm:$0xff] %vm1447, %v3213
  %4487 = vst [vmem:[%s3 + $0xe50] sm:$0xff] %v3215
  %4488 = vst.msk [vmem:[%s3 + $0xe58] sm:$0xff] %vm1447, %v3217
  %4489 = vst [vmem:[%s3 + $0xe60] sm:$0xff] %v3221
  %4490 = vst.msk [vmem:[%s3 + $0xe68] sm:$0xff] %vm1447, %v3223
  %4491 = vst [vmem:[%s3 + $0xe70] sm:$0xff] %v3225
  %4492 = vst.msk [vmem:[%s3 + $0xe78] sm:$0xff] %vm1447, %v3227
  %4493 = vst [vmem:[%s3 + $0xe80] sm:$0xff] %v3231
  %4494 = vst.msk [vmem:[%s3 + $0xe88] sm:$0xff] %vm1447, %v3233
  %4495 = vst [vmem:[%s3 + $0xe90] sm:$0xff] %v3235
  %4496 = vst.msk [vmem:[%s3 + $0xe98] sm:$0xff] %vm1447, %v3237
  %4497 = vst [vmem:[%s3 + $0xea0] sm:$0xff] %v3241
  %4498 = vst.msk [vmem:[%s3 + $0xea8] sm:$0xff] %vm1447, %v3243
  %4499 = vst [vmem:[%s3 + $0xeb0] sm:$0xff] %v3245
  %4500 = vst.msk [vmem:[%s3 + $0xeb8] sm:$0xff] %vm1447, %v3247
  %4501 = vst [vmem:[%s3 + $0xec0] sm:$0xff] %v3251
  %4502 = vst.msk [vmem:[%s3 + $0xec8] sm:$0xff] %vm1447, %v3253
  %4503 = vst [vmem:[%s3 + $0xed0] sm:$0xff] %v3255
  %4504 = vst.msk [vmem:[%s3 + $0xed8] sm:$0xff] %vm1447, %v3257
  %4505 = vst [vmem:[%s3 + $0xee0] sm:$0xff] %v3261
  %4506 = vst.msk [vmem:[%s3 + $0xee8] sm:$0xff] %vm1447, %v3263
  %4507 = vst [vmem:[%s3 + $0xef0] sm:$0xff] %v3265
  %4508 = vst.msk [vmem:[%s3 + $0xef8] sm:$0xff] %vm1447, %v3267
  %4509 = vst [vmem:[%s3 + $0xf00] sm:$0xff] %v3271
  %4510 = vst.msk [vmem:[%s3 + $0xf08] sm:$0xff] %vm1447, %v3273
  %4511 = vst [vmem:[%s3 + $0xf10] sm:$0xff] %v3275
  %4512 = vst.msk [vmem:[%s3 + $0xf18] sm:$0xff] %vm1447, %v3277
  %4513 = vst [vmem:[%s3 + $0xf20] sm:$0xff] %v3281
  %4514 = vst.msk [vmem:[%s3 + $0xf28] sm:$0xff] %vm1447, %v3283
  %4515 = vst [vmem:[%s3 + $0xf30] sm:$0xff] %v3285
  %4516 = vst.msk [vmem:[%s3 + $0xf38] sm:$0xff] %vm1447, %v3287
  %4517 = vst [vmem:[%s3 + $0xf40] sm:$0xff] %v3291
  %4518 = vst.msk [vmem:[%s3 + $0xf48] sm:$0xff] %vm1447, %v3293
  %4519 = vst [vmem:[%s3 + $0xf50] sm:$0xff] %v3295
  %4520 = vst.msk [vmem:[%s3 + $0xf58] sm:$0xff] %vm1447, %v3297
  %4521 = vst [vmem:[%s3 + $0xf60] sm:$0xff] %v3301
  %4522 = vst.msk [vmem:[%s3 + $0xf68] sm:$0xff] %vm1447, %v3303
  %4523 = vst [vmem:[%s3 + $0xf70] sm:$0xff] %v3305
  %4524 = vst.msk [vmem:[%s3 + $0xf78] sm:$0xff] %vm1447, %v3307
  %4525 = vst [vmem:[%s3 + $0xf80] sm:$0xff] %v3311
  %4526 = vst.msk [vmem:[%s3 + $0xf88] sm:$0xff] %vm1447, %v3313
  %4527 = vst [vmem:[%s3 + $0xf90] sm:$0xff] %v3315
  %4528 = vst.msk [vmem:[%s3 + $0xf98] sm:$0xff] %vm1447, %v3317
  %4529 = vst [vmem:[%s3 + $0xfa0] sm:$0xff] %v3321
  %4530 = vst.msk [vmem:[%s3 + $0xfa8] sm:$0xff] %vm1447, %v3323
  %4531 = vst [vmem:[%s3 + $0xfb0] sm:$0xff] %v3325
  %4532 = vst.msk [vmem:[%s3 + $0xfb8] sm:$0xff] %vm1447, %v3327
  %4533 = vst [vmem:[%s3 + $0xfc0] sm:$0xff] %v3331
  %4534 = vst.msk [vmem:[%s3 + $0xfc8] sm:$0xff] %vm1447, %v3333
  %4535 = vst [vmem:[%s3 + $0xfd0] sm:$0xff] %v3335
  %4536 = vst.msk [vmem:[%s3 + $0xfd8] sm:$0xff] %vm1447, %v3337
  %4537 = vst [vmem:[%s3 + $0xfe0] sm:$0xff] %v3341
  %4538 = vst.msk [vmem:[%s3 + $0xfe8] sm:$0xff] %vm1447, %v3343
  %4539 = vst [vmem:[%s3 + $0xff0] sm:$0xff] %v3345
  %4540 = vst.msk [vmem:[%s3 + $0xff8] sm:$0xff] %vm1447, %v3347
  %4541 = vst [vmem:[%s3 + $0x1000] sm:$0xff] %v3351
  %4542 = vst.msk [vmem:[%s3 + $0x1008] sm:$0xff] %vm1447, %v3353
  %4543 = vst [vmem:[%s3 + $0x1010] sm:$0xff] %v3355
  %4544 = vst.msk [vmem:[%s3 + $0x1018] sm:$0xff] %vm1447, %v3357
  %4545 = vst [vmem:[%s3 + $0x1020] sm:$0xff] %v3361
  %4546 = vst.msk [vmem:[%s3 + $0x1028] sm:$0xff] %vm1447, %v3363
  %4547 = vst [vmem:[%s3 + $0x1030] sm:$0xff] %v3365
  %4548 = vst.msk [vmem:[%s3 + $0x1038] sm:$0xff] %vm1447, %v3367
  %4549 = vst [vmem:[%s3 + $0x1040] sm:$0xff] %v3371
  %4550 = vst.msk [vmem:[%s3 + $0x1048] sm:$0xff] %vm1447, %v3373
  %4551 = vst [vmem:[%s3 + $0x1050] sm:$0xff] %v3375
  %4552 = vst.msk [vmem:[%s3 + $0x1058] sm:$0xff] %vm1447, %v3377
  %4553 = vst [vmem:[%s3 + $0x1060] sm:$0xff] %v3381
  %4554 = vst.msk [vmem:[%s3 + $0x1068] sm:$0xff] %vm1447, %v3383
  %4555 = vst [vmem:[%s3 + $0x1070] sm:$0xff] %v3385
  %4556 = vst.msk [vmem:[%s3 + $0x1078] sm:$0xff] %vm1447, %v3387
  %4557 = vst [vmem:[%s3 + $0x1080] sm:$0xff] %v3391
  %4558 = vst.msk [vmem:[%s3 + $0x1088] sm:$0xff] %vm1447, %v3393
  %4559 = vst [vmem:[%s3 + $0x1090] sm:$0xff] %v3395
  %4560 = vst.msk [vmem:[%s3 + $0x1098] sm:$0xff] %vm1447, %v3397
  %4561 = vst [vmem:[%s3 + $0x10a0] sm:$0xff] %v3401
  %4562 = vst.msk [vmem:[%s3 + $0x10a8] sm:$0xff] %vm1447, %v3403
  %4563 = vst [vmem:[%s3 + $0x10b0] sm:$0xff] %v3405
  %4564 = vst.msk [vmem:[%s3 + $0x10b8] sm:$0xff] %vm1447, %v3407
  %4565 = vst [vmem:[%s3 + $0x10c0] sm:$0xff] %v3411
  %4566 = vst.msk [vmem:[%s3 + $0x10c8] sm:$0xff] %vm1447, %v3413
  %4567 = vst [vmem:[%s3 + $0x10d0] sm:$0xff] %v3415
  %4568 = vst.msk [vmem:[%s3 + $0x10d8] sm:$0xff] %vm1447, %v3417
  %4569 = vst [vmem:[%s3 + $0x10e0] sm:$0xff] %v3421
  %4570 = vst.msk [vmem:[%s3 + $0x10e8] sm:$0xff] %vm1447, %v3423
  %4571 = vst [vmem:[%s3 + $0x10f0] sm:$0xff] %v3425
  %4572 = vst.msk [vmem:[%s3 + $0x10f8] sm:$0xff] %vm1447, %v3427
  %4573 = vst [vmem:[%s3 + $0x1100] sm:$0xff] %v3431
  %4574 = vst.msk [vmem:[%s3 + $0x1108] sm:$0xff] %vm1447, %v3433
  %4575 = vst [vmem:[%s3 + $0x1110] sm:$0xff] %v3435
  %4576 = vst.msk [vmem:[%s3 + $0x1118] sm:$0xff] %vm1447, %v3437
  %4577 = vst [vmem:[%s3 + $0x1120] sm:$0xff] %v3441
  %4578 = vst.msk [vmem:[%s3 + $0x1128] sm:$0xff] %vm1447, %v3443
  %4579 = vst [vmem:[%s3 + $0x1130] sm:$0xff] %v3445
  %4580 = vst.msk [vmem:[%s3 + $0x1138] sm:$0xff] %vm1447, %v3447
  %4581 = vst [vmem:[%s3 + $0x1140] sm:$0xff] %v3451
  %4582 = vst.msk [vmem:[%s3 + $0x1148] sm:$0xff] %vm1447, %v3453
  %4583 = vst [vmem:[%s3 + $0x1150] sm:$0xff] %v3455
  %4584 = vst.msk [vmem:[%s3 + $0x1158] sm:$0xff] %vm1447, %v3457
  %4585 = vst [vmem:[%s3 + $0x1160] sm:$0xff] %v3461
  %4586 = vst.msk [vmem:[%s3 + $0x1168] sm:$0xff] %vm1447, %v3463
  %4587 = vst [vmem:[%s3 + $0x1170] sm:$0xff] %v3465
  %4588 = vst.msk [vmem:[%s3 + $0x1178] sm:$0xff] %vm1447, %v3467
  %4589 = vst [vmem:[%s3 + $0x1180] sm:$0xff] %v3471
  %4590 = vst.msk [vmem:[%s3 + $0x1188] sm:$0xff] %vm1447, %v3473
  %4591 = vst [vmem:[%s3 + $0x1190] sm:$0xff] %v3475
  %4592 = vst.msk [vmem:[%s3 + $0x1198] sm:$0xff] %vm1447, %v3477
  %4593 = vst [vmem:[%s3 + $0x11a0] sm:$0xff] %v3481
  %4594 = vst.msk [vmem:[%s3 + $0x11a8] sm:$0xff] %vm1447, %v3483
  %4595 = vst [vmem:[%s3 + $0x11b0] sm:$0xff] %v3485
  %4596 = vst.msk [vmem:[%s3 + $0x11b8] sm:$0xff] %vm1447, %v3487
  %4597 = vst [vmem:[%s3 + $0x11c0] sm:$0xff] %v3491
  %4598 = vst.msk [vmem:[%s3 + $0x11c8] sm:$0xff] %vm1447, %v3493
  %4599 = vst [vmem:[%s3 + $0x11d0] sm:$0xff] %v3495
  %4600 = vst.msk [vmem:[%s3 + $0x11d8] sm:$0xff] %vm1447, %v3497
  %4601 = vst [vmem:[%s3 + $0x11e0] sm:$0xff] %v3501
  %4602 = vst.msk [vmem:[%s3 + $0x11e8] sm:$0xff] %vm1447, %v3503
  %4603 = vst [vmem:[%s3 + $0x11f0] sm:$0xff] %v3505
  %4604 = vst.msk [vmem:[%s3 + $0x11f8] sm:$0xff] %vm1447, %v3507
  %4605 = vst [vmem:[%s3 + $0x1200] sm:$0xff] %v3511
  %4606 = vst.msk [vmem:[%s3 + $0x1208] sm:$0xff] %vm1447, %v3513
  %4607 = vst [vmem:[%s3 + $0x1210] sm:$0xff] %v3515
  %4608 = vst.msk [vmem:[%s3 + $0x1218] sm:$0xff] %vm1447, %v3517
  %4609 = vst [vmem:[%s3 + $0x1220] sm:$0xff] %v3521
  %4610 = vst.msk [vmem:[%s3 + $0x1228] sm:$0xff] %vm1447, %v3523
  %4611 = vst [vmem:[%s3 + $0x1230] sm:$0xff] %v3525
  %4612 = vst.msk [vmem:[%s3 + $0x1238] sm:$0xff] %vm1447, %v3527
  %4613 = vst [vmem:[%s3 + $0x1240] sm:$0xff] %v3531
  %4614 = vst.msk [vmem:[%s3 + $0x1248] sm:$0xff] %vm1447, %v3533
  %4615 = vst [vmem:[%s3 + $0x1250] sm:$0xff] %v3535
  %4616 = vst.msk [vmem:[%s3 + $0x1258] sm:$0xff] %vm1447, %v3537
  %4617 = vst [vmem:[%s3 + $0x1260] sm:$0xff] %v3541
  %4618 = vst.msk [vmem:[%s3 + $0x1268] sm:$0xff] %vm1447, %v3543
  %4619 = vst [vmem:[%s3 + $0x1270] sm:$0xff] %v3545
  %4620 = vst.msk [vmem:[%s3 + $0x1278] sm:$0xff] %vm1447, %v3547
  %4621 = vst [vmem:[%s3 + $0x1280] sm:$0xff] %v3551
  %4622 = vst.msk [vmem:[%s3 + $0x1288] sm:$0xff] %vm1447, %v3553
  %4623 = vst [vmem:[%s3 + $0x1290] sm:$0xff] %v3555
  %4624 = vst.msk [vmem:[%s3 + $0x1298] sm:$0xff] %vm1447, %v3557
  %4625 = vst [vmem:[%s3 + $0x12a0] sm:$0xff] %v3561
  %4626 = vst.msk [vmem:[%s3 + $0x12a8] sm:$0xff] %vm1447, %v3563
  %4627 = vst [vmem:[%s3 + $0x12b0] sm:$0xff] %v3565
  %4628 = vst.msk [vmem:[%s3 + $0x12b8] sm:$0xff] %vm1447, %v3567
  %4629 = vst [vmem:[%s3 + $0x12c0] sm:$0xff] %v3571
  %4630 = vst.msk [vmem:[%s3 + $0x12c8] sm:$0xff] %vm1447, %v3573
  %4631 = vst [vmem:[%s3 + $0x12d0] sm:$0xff] %v3575
  %4632 = vst.msk [vmem:[%s3 + $0x12d8] sm:$0xff] %vm1447, %v3577
  %4633 = vst [vmem:[%s3 + $0x12e0] sm:$0xff] %v3581
  %4634 = vst.msk [vmem:[%s3 + $0x12e8] sm:$0xff] %vm1447, %v3583
  %4635 = vst [vmem:[%s3 + $0x12f0] sm:$0xff] %v3585
  %4636 = vst.msk [vmem:[%s3 + $0x12f8] sm:$0xff] %vm1447, %v3587
  %4637 = vst [vmem:[%s3 + $0x1300] sm:$0xff] %v3591
  %4638 = vst.msk [vmem:[%s3 + $0x1308] sm:$0xff] %vm1447, %v3593
  %4639 = vst [vmem:[%s3 + $0x1310] sm:$0xff] %v3595
  %4640 = vst.msk [vmem:[%s3 + $0x1318] sm:$0xff] %vm1447, %v3597
  %4641 = vst [vmem:[%s3 + $0x1320] sm:$0xff] %v3601
  %4642 = vst.msk [vmem:[%s3 + $0x1328] sm:$0xff] %vm1447, %v3603
  %4643 = vst [vmem:[%s3 + $0x1330] sm:$0xff] %v3605
  %4644 = vst.msk [vmem:[%s3 + $0x1338] sm:$0xff] %vm1447, %v3607
  %4645 = vst [vmem:[%s3 + $0x1340] sm:$0xff] %v3611
  %4646 = vst.msk [vmem:[%s3 + $0x1348] sm:$0xff] %vm1447, %v3613
  %4647 = vst [vmem:[%s3 + $0x1350] sm:$0xff] %v3615
  %4648 = vst.msk [vmem:[%s3 + $0x1358] sm:$0xff] %vm1447, %v3617
  %4649 = vst [vmem:[%s3 + $0x1360] sm:$0xff] %v3621
  %4650 = vst.msk [vmem:[%s3 + $0x1368] sm:$0xff] %vm1447, %v3623
  %4651 = vst [vmem:[%s3 + $0x1370] sm:$0xff] %v3625
  %4652 = vst.msk [vmem:[%s3 + $0x1378] sm:$0xff] %vm1447, %v3627
  %4653 = vst [vmem:[%s3 + $0x1380] sm:$0xff] %v3631
  %4654 = vst.msk [vmem:[%s3 + $0x1388] sm:$0xff] %vm1447, %v3633
  %4655 = vst [vmem:[%s3 + $0x1390] sm:$0xff] %v3635
  %4656 = vst.msk [vmem:[%s3 + $0x1398] sm:$0xff] %vm1447, %v3637
  %4657 = vst [vmem:[%s3 + $0x13a0] sm:$0xff] %v3641
  %4658 = vst.msk [vmem:[%s3 + $0x13a8] sm:$0xff] %vm1447, %v3643
  %4659 = vst [vmem:[%s3 + $0x13b0] sm:$0xff] %v3645
  %4660 = vst.msk [vmem:[%s3 + $0x13b8] sm:$0xff] %vm1447, %v3647
  %4661 = vst [vmem:[%s3 + $0x13c0] sm:$0xff] %v3651
  %4662 = vst.msk [vmem:[%s3 + $0x13c8] sm:$0xff] %vm1447, %v3653
  %4663 = vst [vmem:[%s3 + $0x13d0] sm:$0xff] %v3655
  %4664 = vst.msk [vmem:[%s3 + $0x13d8] sm:$0xff] %vm1447, %v3657
  %4665 = vst [vmem:[%s3 + $0x13e0] sm:$0xff] %v3661
  %4666 = vst.msk [vmem:[%s3 + $0x13e8] sm:$0xff] %vm1447, %v3663
  %4667 = vst [vmem:[%s3 + $0x13f0] sm:$0xff] %v3665
  %4668 = vst.msk [vmem:[%s3 + $0x13f8] sm:$0xff] %vm1447, %v3667
  %4669 = vst [vmem:[%s3 + $0x1400] sm:$0xff] %v3671
  %4670 = vst.msk [vmem:[%s3 + $0x1408] sm:$0xff] %vm1447, %v3673
  %4671 = vst [vmem:[%s3 + $0x1410] sm:$0xff] %v3675
  %4672 = vst.msk [vmem:[%s3 + $0x1418] sm:$0xff] %vm1447, %v3677
  %4673 = vst [vmem:[%s3 + $0x1420] sm:$0xff] %v3681
  %4674 = vst.msk [vmem:[%s3 + $0x1428] sm:$0xff] %vm1447, %v3683
  %4675 = vst [vmem:[%s3 + $0x1430] sm:$0xff] %v3685
  %4676 = vst.msk [vmem:[%s3 + $0x1438] sm:$0xff] %vm1447, %v3687
  %4677 = vst [vmem:[%s3 + $0x1440] sm:$0xff] %v3691
  %4678 = vst.msk [vmem:[%s3 + $0x1448] sm:$0xff] %vm1447, %v3693
  %4679 = vst [vmem:[%s3 + $0x1450] sm:$0xff] %v3695
  %4680 = vst.msk [vmem:[%s3 + $0x1458] sm:$0xff] %vm1447, %v3697
  %4681 = vst [vmem:[%s3 + $0x1460] sm:$0xff] %v3701
  %4682 = vst.msk [vmem:[%s3 + $0x1468] sm:$0xff] %vm1447, %v3703
  %4683 = vst [vmem:[%s3 + $0x1470] sm:$0xff] %v3705
  %4684 = vst.msk [vmem:[%s3 + $0x1478] sm:$0xff] %vm1447, %v3707
  %4685 = vst [vmem:[%s3 + $0x1480] sm:$0xff] %v3711
  %4686 = vst.msk [vmem:[%s3 + $0x1488] sm:$0xff] %vm1447, %v3713
  %4687 = vst [vmem:[%s3 + $0x1490] sm:$0xff] %v3715
  %4688 = vst.msk [vmem:[%s3 + $0x1498] sm:$0xff] %vm1447, %v3717
  %4689 = vst [vmem:[%s3 + $0x14a0] sm:$0xff] %v3721
  %4690 = vst.msk [vmem:[%s3 + $0x14a8] sm:$0xff] %vm1447, %v3723
  %4691 = vst [vmem:[%s3 + $0x14b0] sm:$0xff] %v3725
  %4692 = vst.msk [vmem:[%s3 + $0x14b8] sm:$0xff] %vm1447, %v3727
  %4693 = vst [vmem:[%s3 + $0x14c0] sm:$0xff] %v3731
  %4694 = vst.msk [vmem:[%s3 + $0x14c8] sm:$0xff] %vm1447, %v3733
  %4695 = vst [vmem:[%s3 + $0x14d0] sm:$0xff] %v3735
  %4696 = vst.msk [vmem:[%s3 + $0x14d8] sm:$0xff] %vm1447, %v3737
  %4697 = vst [vmem:[%s3 + $0x14e0] sm:$0xff] %v3741
  %4698 = vst.msk [vmem:[%s3 + $0x14e8] sm:$0xff] %vm1447, %v3743
  %4699 = vst [vmem:[%s3 + $0x14f0] sm:$0xff] %v3745
  %4700 = vst.msk [vmem:[%s3 + $0x14f8] sm:$0xff] %vm1447, %v3747
  %4701 = vst [vmem:[%s3 + $0x1500] sm:$0xff] %v3751
  %4702 = vst.msk [vmem:[%s3 + $0x1508] sm:$0xff] %vm1447, %v3753
  %4703 = vst [vmem:[%s3 + $0x1510] sm:$0xff] %v3755
  %4704 = vst.msk [vmem:[%s3 + $0x1518] sm:$0xff] %vm1447, %v3757
  %4705 = vst [vmem:[%s3 + $0x1520] sm:$0xff] %v3761
  %4706 = vst.msk [vmem:[%s3 + $0x1528] sm:$0xff] %vm1447, %v3763
  %4707 = vst [vmem:[%s3 + $0x1530] sm:$0xff] %v3765
  %4708 = vst.msk [vmem:[%s3 + $0x1538] sm:$0xff] %vm1447, %v3767
  %4709 = vst [vmem:[%s3 + $0x1540] sm:$0xff] %v3771
  %4710 = vst.msk [vmem:[%s3 + $0x1548] sm:$0xff] %vm1447, %v3773
  %4711 = vst [vmem:[%s3 + $0x1550] sm:$0xff] %v3775
  %4712 = vst.msk [vmem:[%s3 + $0x1558] sm:$0xff] %vm1447, %v3777
  %4713 = vst [vmem:[%s3 + $0x1560] sm:$0xff] %v3781
  %4714 = vst.msk [vmem:[%s3 + $0x1568] sm:$0xff] %vm1447, %v3783
  %4715 = vst [vmem:[%s3 + $0x1570] sm:$0xff] %v3785
  %4716 = vst.msk [vmem:[%s3 + $0x1578] sm:$0xff] %vm1447, %v3787
  %4717 = vst [vmem:[%s3 + $0x1580] sm:$0xff] %v3791
  %4718 = vst.msk [vmem:[%s3 + $0x1588] sm:$0xff] %vm1447, %v3793
  %4719 = vst [vmem:[%s3 + $0x1590] sm:$0xff] %v3795
  %4720 = vst.msk [vmem:[%s3 + $0x1598] sm:$0xff] %vm1447, %v3797
  %4721 = vst [vmem:[%s3 + $0x15a0] sm:$0xff] %v3801
  %4722 = vst.msk [vmem:[%s3 + $0x15a8] sm:$0xff] %vm1447, %v3803
  %4723 = vst [vmem:[%s3 + $0x15b0] sm:$0xff] %v3805
  %4724 = vst.msk [vmem:[%s3 + $0x15b8] sm:$0xff] %vm1447, %v3807
  %4725 = vst [vmem:[%s3 + $0x15c0] sm:$0xff] %v3811
  %4726 = vst.msk [vmem:[%s3 + $0x15c8] sm:$0xff] %vm1447, %v3813
  %4727 = vst [vmem:[%s3 + $0x15d0] sm:$0xff] %v3815
  %4728 = vst.msk [vmem:[%s3 + $0x15d8] sm:$0xff] %vm1447, %v3817
  %4729 = vst [vmem:[%s3 + $0x15e0] sm:$0xff] %v3821
  %4730 = vst.msk [vmem:[%s3 + $0x15e8] sm:$0xff] %vm1447, %v3823
  %4731 = vst [vmem:[%s3 + $0x15f0] sm:$0xff] %v3825
  %4732 = vst.msk [vmem:[%s3 + $0x15f8] sm:$0xff] %vm1447, %v3827
  %4733 = vst [vmem:[%s3 + $0x1600] sm:$0xff] %v3831
  %4734 = vst.msk [vmem:[%s3 + $0x1608] sm:$0xff] %vm1447, %v3833
  %4735 = vst [vmem:[%s3 + $0x1610] sm:$0xff] %v3835
  %4736 = vst.msk [vmem:[%s3 + $0x1618] sm:$0xff] %vm1447, %v3837
  %4737 = vst [vmem:[%s3 + $0x1620] sm:$0xff] %v3841
  %4738 = vst.msk [vmem:[%s3 + $0x1628] sm:$0xff] %vm1447, %v3843
  %4739 = vst [vmem:[%s3 + $0x1630] sm:$0xff] %v3845
  %4740 = vst.msk [vmem:[%s3 + $0x1638] sm:$0xff] %vm1447, %v3847
  %4741 = vst [vmem:[%s3 + $0x1640] sm:$0xff] %v3851
  %4742 = vst.msk [vmem:[%s3 + $0x1648] sm:$0xff] %vm1447, %v3853
  %4743 = vst [vmem:[%s3 + $0x1650] sm:$0xff] %v3855
  %4744 = vst.msk [vmem:[%s3 + $0x1658] sm:$0xff] %vm1447, %v3857
  %4745 = vst [vmem:[%s3 + $0x1660] sm:$0xff] %v3861
  %4746 = vst.msk [vmem:[%s3 + $0x1668] sm:$0xff] %vm1447, %v3863
  %4747 = vst [vmem:[%s3 + $0x1670] sm:$0xff] %v3865
  %4748 = vst.msk [vmem:[%s3 + $0x1678] sm:$0xff] %vm1447, %v3867
  %4749 = vst [vmem:[%s3 + $0x1680] sm:$0xff] %v3871
  %4750 = vst.msk [vmem:[%s3 + $0x1688] sm:$0xff] %vm1447, %v3873
  %4751 = vst [vmem:[%s3 + $0x1690] sm:$0xff] %v3875
  %4752 = vst.msk [vmem:[%s3 + $0x1698] sm:$0xff] %vm1447, %v3877
  %4753 = vst [vmem:[%s3 + $0x16a0] sm:$0xff] %v3881
  %4754 = vst.msk [vmem:[%s3 + $0x16a8] sm:$0xff] %vm1447, %v3883
  %4755 = vst [vmem:[%s3 + $0x16b0] sm:$0xff] %v3885
  %4756 = vst.msk [vmem:[%s3 + $0x16b8] sm:$0xff] %vm1447, %v3887
  %4757 = vst [vmem:[%s3 + $0x16c0] sm:$0xff] %v3891
  %4758 = vst.msk [vmem:[%s3 + $0x16c8] sm:$0xff] %vm1447, %v3893
  %4759 = vst [vmem:[%s3 + $0x16d0] sm:$0xff] %v3895
  %4760 = vst.msk [vmem:[%s3 + $0x16d8] sm:$0xff] %vm1447, %v3897
  %4761 = vst [vmem:[%s3 + $0x16e0] sm:$0xff] %v3901
  %4762 = vst.msk [vmem:[%s3 + $0x16e8] sm:$0xff] %vm1447, %v3903
  %4763 = vst [vmem:[%s3 + $0x16f0] sm:$0xff] %v3905
  %4764 = vst.msk [vmem:[%s3 + $0x16f8] sm:$0xff] %vm1447, %v3907
  %4765 = vst [vmem:[%s3 + $0x1700] sm:$0xff] %v3911
  %4766 = vst.msk [vmem:[%s3 + $0x1708] sm:$0xff] %vm1447, %v3913
  %4767 = vst [vmem:[%s3 + $0x1710] sm:$0xff] %v3915
  %4768 = vst.msk [vmem:[%s3 + $0x1718] sm:$0xff] %vm1447, %v3917
  %4769 = vst [vmem:[%s3 + $0x1720] sm:$0xff] %v3921
  %4770 = vst.msk [vmem:[%s3 + $0x1728] sm:$0xff] %vm1447, %v3923
  %4771 = vst [vmem:[%s3 + $0x1730] sm:$0xff] %v3925
  %4772 = vst.msk [vmem:[%s3 + $0x1738] sm:$0xff] %vm1447, %v3927
  %4773 = vst [vmem:[%s3 + $0x1740] sm:$0xff] %v3931
  %4774 = vst.msk [vmem:[%s3 + $0x1748] sm:$0xff] %vm1447, %v3933
  %4775 = vst [vmem:[%s3 + $0x1750] sm:$0xff] %v3935
  %4776 = vst.msk [vmem:[%s3 + $0x1758] sm:$0xff] %vm1447, %v3937
  %4777 = vst [vmem:[%s3 + $0x1760] sm:$0xff] %v3941
  %4778 = vst.msk [vmem:[%s3 + $0x1768] sm:$0xff] %vm1447, %v3943
  %4779 = vst [vmem:[%s3 + $0x1770] sm:$0xff] %v3945
  %4780 = vst.msk [vmem:[%s3 + $0x1778] sm:$0xff] %vm1447, %v3947
  %4781 = vst [vmem:[%s3 + $0x1780] sm:$0xff] %v3951
  %4782 = vst.msk [vmem:[%s3 + $0x1788] sm:$0xff] %vm1447, %v3953
  %4783 = vst [vmem:[%s3 + $0x1790] sm:$0xff] %v3955
  %4784 = vst.msk [vmem:[%s3 + $0x1798] sm:$0xff] %vm1447, %v3957
  %4785 = vst [vmem:[%s3 + $0x17a0] sm:$0xff] %v3961
  %4786 = vst.msk [vmem:[%s3 + $0x17a8] sm:$0xff] %vm1447, %v3963
  %4787 = vst [vmem:[%s3 + $0x17b0] sm:$0xff] %v3965
  %4788 = vst.msk [vmem:[%s3 + $0x17b8] sm:$0xff] %vm1447, %v3967
  %4789 = vst [vmem:[%s3 + $0x17c0] sm:$0xff] %v3971
  %4790 = vst.msk [vmem:[%s3 + $0x17c8] sm:$0xff] %vm1447, %v3973
  %4791 = vst [vmem:[%s3 + $0x17d0] sm:$0xff] %v3975
  %4792 = vst.msk [vmem:[%s3 + $0x17d8] sm:$0xff] %vm1447, %v3977
  %4793 = vst [vmem:[%s3 + $0x17e0] sm:$0xff] %v3981
  %4794 = vst.msk [vmem:[%s3 + $0x17e8] sm:$0xff] %vm1447, %v3983
  %4795 = vst [vmem:[%s3 + $0x17f0] sm:$0xff] %v3985
  %4796 = vst.msk [vmem:[%s3 + $0x17f8] sm:$0xff] %vm1447, %v3987
  %4797 = vst [vmem:[%s3 + $0x1800] sm:$0xff] %v3991
  %4798 = vst.msk [vmem:[%s3 + $0x1808] sm:$0xff] %vm1447, %v3993
  %4799 = vst [vmem:[%s3 + $0x1810] sm:$0xff] %v3995
  %4800 = vst.msk [vmem:[%s3 + $0x1818] sm:$0xff] %vm1447, %v3997
  %4801 = vst [vmem:[%s3 + $0x1820] sm:$0xff] %v4001
  %4802 = vst.msk [vmem:[%s3 + $0x1828] sm:$0xff] %vm1447, %v4003
  %4803 = vst [vmem:[%s3 + $0x1830] sm:$0xff] %v4005
  %4804 = vst.msk [vmem:[%s3 + $0x1838] sm:$0xff] %vm1447, %v4007
  %4805 = vst [vmem:[%s3 + $0x1840] sm:$0xff] %v4011
  %4806 = vst.msk [vmem:[%s3 + $0x1848] sm:$0xff] %vm1447, %v4013
  %4807 = vst [vmem:[%s3 + $0x1850] sm:$0xff] %v4015
  %4808 = vst.msk [vmem:[%s3 + $0x1858] sm:$0xff] %vm1447, %v4017
  %4809 = vst [vmem:[%s3 + $0x1860] sm:$0xff] %v4021
  %4810 = vst.msk [vmem:[%s3 + $0x1868] sm:$0xff] %vm1447, %v4023
  %4811 = vst [vmem:[%s3 + $0x1870] sm:$0xff] %v4025
  %4812 = vst.msk [vmem:[%s3 + $0x1878] sm:$0xff] %vm1447, %v4027
  // Predicated region
  $region14: #{qkv_conv.1} parent=0 // pred_check
    _
  $region15: #{qkv_conv.1} parent=0 // pred_check_branch
    %4814 = sbr.rel (0) target = $region17
  $region16: #{qkv_conv.1} parent=0 // pred_region
    _
  $region17: #{qkv_conv.1} parent=0 // pred_fallthru
    _
  // Predicated region
  $region18: #{qkv_conv.1} parent=0 // pred_check
    _
  $region19: #{qkv_conv.1} parent=0 // pred_check_branch
    %4816 = sbr.rel (0) target = $region21
  $region20: #{qkv_conv.1} parent=0 // pred_region
    _
  $region21: #{qkv_conv.1} parent=0 // pred_fallthru
    _

</llo_original>
